<compile_context>
chip_gen: v6e
topology: v6e:2x2x1
jax: 0.10.0
libtpu: 0.0.40
codegen_flags: <defaults>
</compile_context>

<pallas_src>
import jax
import jax.numpy as jnp
from jax.experimental import pallas as pl
from jax.experimental.pallas import tpu as pltpu

# DilatedNet default hyper-parameters.
B = 2            # batch size
T = 16           # n_steps_past (sequence length)
C_IN = 4         # num_inputs
H1, H2, H3 = 16, 32, 10      # conv1/conv2/conv3 output channels
HID = 10         # LSTM hidden size (h4), bidirectional
H5 = 10          # lin1 output features
RECEPTIVE_FIELD = 4          # sum(dilations) + 1

# ---- packed parameter buffer layout (one DMA for all weights/biases) --------
# Lane width 80 (= 8*HID, the widest section); row starts padded to multiples
# of 8 so every in-kernel slice is sublane-aligned.
PACK_LANES = 8 * HID                     # 80
CONV1_R0 = 0                             # (C_IN, 2*H1)  fused taps [w0 | w1]
CONV2_R0 = 8                             # (H1,   2*H2)
CONV3_R0 = 24                            # (H2,   2*H3)
WIH_R0 = 56                              # (H3, 8*HID)   [fwd gates | bwd gates]
WHH_R0 = 72                              # (2*HID, 4*HID) [Whh_fwd ; Whh_bwd]
BIAS_R0 = 96                             # 4 rows: conv1 | conv2 | conv3 | lstm(f|b)
LIN2_R0 = 104                            # (H5, 1)
W1_R0 = 120                              # (T*2*HID, H5) lin1, recurrence step order
PACK_ROWS = W1_R0 + 2 * HID * T          # 440


def dilatednet_kernel(x_ref, p_ref, out_ref, hbuf_ref):
    n_rows = x_ref.shape[0]              # T*B, time-major rows (row = t*B + b)
    batch = out_ref.shape[0]             # B
    seq = n_rows // batch                # T
    hid = HID

    # Sample-edge masks built in-kernel (no DMAs): the t-1 tap is dead at t==0
    # (first B rows), the t+1 tap is dead at t==T-1 (last B rows).
    row = jax.lax.broadcasted_iota(jnp.int32, (n_rows, 1), 0)
    pmask = (row >= batch).astype(jnp.float32)
    nmask = (row < n_rows - batch).astype(jnp.float32)

    def conv_relu_pool(x, w_r0, cin, cout, bias_row):
        # Conv1d(kernel=2, pad=1, stride=1) -> ReLU -> MaxPool1d(2, s=1), batched
        # over all T*B time-major rows.  Both kernel taps come from one fused
        # matmul: ac = x @ [W_tap0 | W_tap1].
        # conv_out[t] = W_tap0 @ x[t-1] + W_tap1 @ x[t] + bias  (x[-1] = x[T] = 0)
        w = p_ref[w_r0:w_r0 + cin, 0:2 * cout]                       # (Cin, 2*Cout)
        bias = p_ref[BIAS_R0 + bias_row:BIAS_R0 + bias_row + 1, 0:cout]
        ac = jnp.dot(x, w, preferred_element_type=jnp.float32)       # (R, 2*Cout)
        a = ac[:, :cout]                                             # tap0 @ x[t]
        c = ac[:, cout:]                                             # tap1 @ x[t]
        a_prev = pltpu.roll(a, shift=batch, axis=0) * pmask          # a[t-1], 0 at t==0
        c_next = pltpu.roll(c, shift=n_rows - batch, axis=0) * nmask # c[t+1], 0 at t==T-1
        o_t = jnp.maximum(a_prev + c + bias, 0.0)                    # relu(conv_out[t])
        o_tp1 = jnp.maximum(a + c_next + bias, 0.0)                  # relu(conv_out[t+1])
        return jnp.maximum(o_t, o_tp1)                               # max-pool, k=2, s=1

    x = x_ref[...]                                                   # (T*B, C_IN)
    x = conv_relu_pool(x, CONV1_R0, C_IN, H1, 0)                     # (T*B, H1)
    x = conv_relu_pool(x, CONV2_R0, H1, H2, 1)                       # (T*B, H2)
    x = conv_relu_pool(x, CONV3_R0, H2, H3, 2)                       # (T*B, H3)
    # TODO(synk): nn.Dropout(0.3) is identity in eval mode; no stochastic mask here.

    # Input-hidden gate pre-activations for BOTH directions in one matmul
    # (gate order reordered offline to [i, f, o, g]; bias = b_ih + b_hh).
    wih = p_ref[WIH_R0:WIH_R0 + H3, 0:8 * hid]                       # (H3, 8*HID)
    lstm_bias = p_ref[BIAS_R0 + 3:BIAS_R0 + 4, 0:8 * hid]            # (1, 8*HID)
    ih = jnp.dot(x, wih, preferred_element_type=jnp.float32) + lstm_bias
    ih_f = ih[:, :4 * hid]                                           # (T*B, 4*HID)
    ih_b = ih[:, 4 * hid:]

    whh = p_ref[WHH_R0:WHH_R0 + 2 * hid, 0:4 * hid]                  # [Whh_fwd; Whh_bwd]

    # Block mask: forward rows (first B) use lanes [0, hid) of the extended
    # state (-> Whh_fwd rows of `whh`), backward rows use lanes [hid, 2*hid).
    nrec = 2 * batch
    r_i = jax.lax.broadcasted_iota(jnp.int32, (nrec, 2 * hid), 0)
    c_i = jax.lax.broadcasted_iota(jnp.int32, (nrec, 2 * hid), 1)
    blk_mask = ((r_i < batch) & (c_i < hid)) | ((r_i >= batch) & (c_i >= hid))

    h_ext = jnp.zeros((nrec, 2 * hid), jnp.float32)                  # extended prev hidden
    c_st = jnp.zeros((nrec, hid), jnp.float32)
    for s in range(seq):
        # Fused step rows: [fwd samples at time s ; bwd samples at time T-1-s]
        # -- two contiguous static slices (time-major layout), one tiny concat.
        ih_s = jnp.concatenate(
            [ih_f[s * batch:(s + 1) * batch, :],
             ih_b[(seq - 1 - s) * batch:(seq - s) * batch, :]], axis=0)
        # One fused gate matmul for 2 directions x B samples x 4 gates.
        pre = ih_s + jnp.dot(h_ext, whh, preferred_element_type=jnp.float32)
        sig = jax.nn.sigmoid(pre[:, :3 * hid])                       # gates [i, f, o]
        i_g = sig[:, 0 * hid:1 * hid]
        f_g = sig[:, 1 * hid:2 * hid]
        o_g = sig[:, 2 * hid:3 * hid]
        g_g = jnp.tanh(pre[:, 3 * hid:4 * hid])                      # gate g
        c_st = f_g * c_st + i_g * g_g
        h = o_g * jnp.tanh(c_st)
        h_ext = jnp.where(blk_mask, jnp.concatenate([h, h], axis=1), 0.0)
        # Flush the block-masked hidden state to VMEM scratch: bounds live
        # ranges and sets up a single K = T*2*HID lin1 matmul after the loop.
        hbuf_ref[:, s * 2 * hid:(s + 1) * 2 * hid] = h_ext

    # lin1 (bias-free) as ONE (2B, 320) @ (320, H5) matmul; the block-masked
    # rows of hbuf route fwd/bwd hidden states to their lin1 columns.
    w1_big = p_ref[W1_R0:W1_R0 + seq * 2 * hid, 0:H5]                # (T*2*HID, H5)
    acc = jnp.dot(hbuf_ref[...], w1_big, preferred_element_type=jnp.float32)
    feats = jnp.maximum(acc[:batch, :] + acc[batch:, :], 0.0)        # relu(lin1(...))
    # lin2 (bias-free) and a single full store.
    lin2 = p_ref[LIN2_R0:LIN2_R0 + H5, 0:1]                          # (H5, 1)
    out_ref[...] = jnp.dot(feats, lin2, preferred_element_type=jnp.float32)


def pack_params(conv1_w, conv1_b, conv2_w, conv2_b, conv3_w, conv3_b,
                w_ih_f, w_hh_f, b_ih_f, b_hh_f,
                w_ih_b, w_hh_b, b_ih_b, b_hh_b,
                lin1_w, lin2_w):
    """Repack all PyTorch-shaped parameters into one (PACK_ROWS, 80) f32 buffer."""
    def conv_fused(w):       # (Cout, Cin, K=2) -> (Cin, 2*Cout) = [tap0 | tap1]
        return jnp.concatenate([w[:, :, 0].T, w[:, :, 1].T], axis=1)

    # Gate reorder [i, f, g, o] (PyTorch) -> [i, f, o, g] (sigmoid gates contiguous).
    perm = jnp.concatenate([jnp.arange(0, HID), jnp.arange(HID, 2 * HID),
                            jnp.arange(3 * HID, 4 * HID), jnp.arange(2 * HID, 3 * HID)])
    wih_f = w_ih_f[perm].T                                  # (H3, 4*HID)
    wih_b = w_ih_b[perm].T
    whh_f = w_hh_f[perm].T                                  # (HID, 4*HID)
    whh_b = w_hh_b[perm].T
    bias_f = (b_ih_f + b_hh_f)[perm]
    bias_b = (b_ih_b + b_hh_b)[perm]

    wih_both = jnp.concatenate([wih_f, wih_b], axis=1)      # (H3, 8*HID)
    bias_both = jnp.concatenate([bias_f, bias_b]).reshape(1, 8 * HID)
    whh_blk = jnp.concatenate([whh_f, whh_b], axis=0)       # (2*HID, 4*HID)

    # lin1: flattened LSTM-output index = t*2*HID + j, j<HID fwd / j>=HID bwd.
    # Recurrence step s holds fwd time s and bwd time T-1-s, so
    # w1_big[s*2H : s*2H+H] = W1_fwd[s] and w1_big[s*2H+H : (s+1)*2H] = W1_bwd[T-1-s].
    lin1_t = lin1_w.T.reshape(T, 2 * HID, H5)
    w1f = lin1_t[:, :HID, :]
    w1b = lin1_t[:, HID:, :]
    w1_big = jnp.concatenate([w1f, w1b[::-1]], axis=1).reshape(T * 2 * HID, H5)

    buf = jnp.zeros((PACK_ROWS, PACK_LANES), jnp.float32)

    def put(b_, r0, mat):
        mat = jnp.asarray(mat, jnp.float32)
        return b_.at[r0:r0 + mat.shape[0], :mat.shape[1]].set(mat)

    buf = put(buf, CONV1_R0, conv_fused(conv1_w))
    buf = put(buf, CONV2_R0, conv_fused(conv2_w))
    buf = put(buf, CONV3_R0, conv_fused(conv3_w))
    buf = put(buf, WIH_R0, wih_both)
    buf = put(buf, WHH_R0, whh_blk)
    buf = put(buf, BIAS_R0 + 0, conv1_b.reshape(1, -1))
    buf = put(buf, BIAS_R0 + 1, conv2_b.reshape(1, -1))
    buf = put(buf, BIAS_R0 + 2, conv3_b.reshape(1, -1))
    buf = put(buf, BIAS_R0 + 3, bias_both)
    buf = put(buf, LIN2_R0, lin2_w.T)                       # (H5, 1)
    buf = put(buf, W1_R0, w1_big)                           # (T*2*HID, H5)
    return buf


def dilatednet_forward(x_nct, packed_params):
    b, c_in, t = x_nct.shape
    assert (b, c_in, t) == (B, C_IN, T), "kernel is specialized to the default sizes"
    # The PyTorch forward left-pads x to the receptive field; for T >= 4 it is a no-op.
    assert t >= RECEPTIVE_FIELD, "receptive-field pad not implemented for T < 4"
    # NCT -> time-major channels-last rows: row = t*B + b.
    x = jnp.transpose(x_nct, (2, 0, 1)).astype(jnp.float32).reshape(t * b, c_in)
    return pl.pallas_call(
        dilatednet_kernel,
        out_shape=jax.ShapeDtypeStruct((b, 1), jnp.float32),
        in_specs=[pl.BlockSpec(memory_space=pltpu.MemorySpace.VMEM),
                  pl.BlockSpec(memory_space=pltpu.MemorySpace.VMEM)],
        out_specs=pl.BlockSpec(memory_space=pltpu.MemorySpace.VMEM),
        scratch_shapes=[pltpu.VMEM((2 * b, 2 * HID * t), jnp.float32)],
    )(x, packed_params)


if __name__ == "__main__":
    key = jax.random.PRNGKey(0)
    ks = jax.random.split(key, 17)

    def init(k, shape):
        return 0.1 * jax.random.normal(k, shape, dtype=jnp.float32)

    # Deterministic synthetic parameters (PyTorch-shaped).
    conv1_w = init(ks[0], (H1, C_IN, 2)); conv1_b = init(ks[1], (H1,))
    conv2_w = init(ks[2], (H2, H1, 2));   conv2_b = init(ks[3], (H2,))
    conv3_w = init(ks[4], (H3, H2, 2));   conv3_b = init(ks[5], (H3,))
    w_ih_f = init(ks[6], (4 * HID, H3));  w_hh_f = init(ks[7], (4 * HID, HID))
    b_ih_f = init(ks[8], (4 * HID,));     b_hh_f = init(ks[9], (4 * HID,))
    w_ih_b = init(ks[10], (4 * HID, H3)); w_hh_b = init(ks[11], (4 * HID, HID))
    b_ih_b = init(ks[12], (4 * HID,));    b_hh_b = init(ks[13], (4 * HID,))
    lin1_w = init(ks[14], (H5, 2 * HID * T))   # Linear(320 -> 10), no bias
    lin2_w = init(ks[15], (1, H5))             # Linear(10 -> 1),  no bias
    x = jax.random.normal(ks[16], (B, C_IN, T), dtype=jnp.float32)

    packed = pack_params(conv1_w, conv1_b, conv2_w, conv2_b, conv3_w, conv3_b,
                         w_ih_f, w_hh_f, b_ih_f, b_hh_f,
                         w_ih_b, w_hh_b, b_ih_b, b_hh_b,
                         lin1_w, lin2_w)

    out = dilatednet_forward(x, packed)
    out = jax.block_until_ready(out)
    assert out.shape == (B, 1) and bool(jnp.all(jnp.isfinite(out)))
    print("KERNEL_OK")
</pallas_src>

<mosaic_0001>
module attributes {stable_mosaic.version = 11 : i64} {
  func.func @dilatednet_kernel(%arg0: memref<32x4xf32, #tpu.memory_space<vmem>>, %arg1: memref<440x80xf32, #tpu.memory_space<vmem>>, %arg2: memref<2x1xf32, #tpu.memory_space<vmem>>, %arg3: memref<4x320xf32, #tpu.memory_space<vmem>>) attributes {dimension_semantics = [], scalar_prefetch = 0 : i64, scratch_operands = 1 : i64, tpu.core_type = #tpu.core_type<tc>} {
    %0 = tpu.iota {dimensions = array<i32: 0>} : vector<32x1xi32>
    %c2_i32 = arith.constant 2 : i32
    %1 = vector.broadcast %c2_i32 : i32 to vector<32x1xi32>
    %2 = arith.cmpi sge, %0, %1 : vector<32x1xi32>
    %3 = arith.extui %2 : vector<32x1xi1> to vector<32x1xi32>
    %4 = arith.sitofp %3 : vector<32x1xi32> to vector<32x1xf32>
    %c30_i32 = arith.constant 30 : i32
    %5 = vector.broadcast %c30_i32 : i32 to vector<32x1xi32>
    %6 = arith.cmpi slt, %0, %5 : vector<32x1xi32>
    %7 = arith.extui %6 : vector<32x1xi1> to vector<32x1xi32>
    %8 = arith.sitofp %7 : vector<32x1xi32> to vector<32x1xf32>
    %c0 = arith.constant 0 : index
    %c0_0 = arith.constant 0 : index
    %9 = vector.load %arg0[%c0, %c0_0] : memref<32x4xf32, #tpu.memory_space<vmem>>, vector<32x4xf32>
    %c0_1 = arith.constant 0 : index
    %c0_2 = arith.constant 0 : index
    %10 = vector.load %arg1[%c0_1, %c0_2] : memref<440x80xf32, #tpu.memory_space<vmem>>, vector<4x32xf32>
    %c96 = arith.constant 96 : index
    %c0_3 = arith.constant 0 : index
    %11 = vector.load %arg1[%c96, %c0_3] : memref<440x80xf32, #tpu.memory_space<vmem>>, vector<1x16xf32>
    %cst = arith.constant dense<0.000000e+00> : vector<32x32xf32>
    %12 = tpu.matmul %9, %10, %cst {dimension_numbers = #tpu.dot_dimension_numbers<[1], [0], [0], [1], [0, 0, 1, 1], [], []>} : vector<32x4xf32>, vector<4x32xf32>, vector<32x32xf32> -> vector<32x32xf32>
    %13 = vector.extract_strided_slice %12 {offsets = [0, 0], sizes = [32, 16], strides = [1, 1]} : vector<32x32xf32> to vector<32x16xf32>
    %14 = vector.extract_strided_slice %12 {offsets = [0, 16], sizes = [32, 16], strides = [1, 1]} : vector<32x32xf32> to vector<32x16xf32>
    %c2_i32_4 = arith.constant 2 : i32
    %15 = tpu.dynamic_rotate %13 by %c2_i32_4 dim 0 : vector<32x16xf32>, i32 -> vector<32x16xf32>
    %16 = vector.broadcast %4 : vector<32x1xf32> to vector<32x16xf32>
    %17 = arith.mulf %15, %16 : vector<32x16xf32>
    %c30_i32_5 = arith.constant 30 : i32
    %18 = tpu.dynamic_rotate %14 by %c30_i32_5 dim 0 : vector<32x16xf32>, i32 -> vector<32x16xf32>
    %19 = vector.broadcast %8 : vector<32x1xf32> to vector<32x16xf32>
    %20 = arith.mulf %18, %19 : vector<32x16xf32>
    %21 = arith.addf %17, %14 : vector<32x16xf32>
    %22 = vector.broadcast %11 : vector<1x16xf32> to vector<32x16xf32>
    %23 = arith.addf %21, %22 : vector<32x16xf32>
    %cst_6 = arith.constant 0.000000e+00 : f32
    %24 = vector.broadcast %cst_6 : f32 to vector<32x16xf32>
    %25 = arith.maximumf %23, %24 : vector<32x16xf32>
    %26 = arith.addf %13, %20 : vector<32x16xf32>
    %27 = vector.broadcast %11 : vector<1x16xf32> to vector<32x16xf32>
    %28 = arith.addf %26, %27 : vector<32x16xf32>
    %cst_7 = arith.constant 0.000000e+00 : f32
    %29 = vector.broadcast %cst_7 : f32 to vector<32x16xf32>
    %30 = arith.maximumf %28, %29 : vector<32x16xf32>
    %31 = arith.maximumf %25, %30 : vector<32x16xf32>
    %c8 = arith.constant 8 : index
    %c0_8 = arith.constant 0 : index
    %32 = vector.load %arg1[%c8, %c0_8] : memref<440x80xf32, #tpu.memory_space<vmem>>, vector<16x64xf32>
    %c97 = arith.constant 97 : index
    %c0_9 = arith.constant 0 : index
    %33 = vector.load %arg1[%c97, %c0_9] : memref<440x80xf32, #tpu.memory_space<vmem>>, vector<1x32xf32>
    %cst_10 = arith.constant dense<0.000000e+00> : vector<32x64xf32>
    %34 = tpu.matmul %31, %32, %cst_10 {dimension_numbers = #tpu.dot_dimension_numbers<[1], [0], [0], [1], [0, 0, 1, 1], [], []>} : vector<32x16xf32>, vector<16x64xf32>, vector<32x64xf32> -> vector<32x64xf32>
    %35 = vector.extract_strided_slice %34 {offsets = [0, 0], sizes = [32, 32], strides = [1, 1]} : vector<32x64xf32> to vector<32x32xf32>
    %36 = vector.extract_strided_slice %34 {offsets = [0, 32], sizes = [32, 32], strides = [1, 1]} : vector<32x64xf32> to vector<32x32xf32>
    %c2_i32_11 = arith.constant 2 : i32
    %37 = tpu.dynamic_rotate %35 by %c2_i32_11 dim 0 : vector<32x32xf32>, i32 -> vector<32x32xf32>
    %38 = vector.broadcast %4 : vector<32x1xf32> to vector<32x32xf32>
    %39 = arith.mulf %37, %38 : vector<32x32xf32>
    %c30_i32_12 = arith.constant 30 : i32
    %40 = tpu.dynamic_rotate %36 by %c30_i32_12 dim 0 : vector<32x32xf32>, i32 -> vector<32x32xf32>
    %41 = vector.broadcast %8 : vector<32x1xf32> to vector<32x32xf32>
    %42 = arith.mulf %40, %41 : vector<32x32xf32>
    %43 = arith.addf %39, %36 : vector<32x32xf32>
    %44 = vector.broadcast %33 : vector<1x32xf32> to vector<32x32xf32>
    %45 = arith.addf %43, %44 : vector<32x32xf32>
    %cst_13 = arith.constant 0.000000e+00 : f32
    %46 = vector.broadcast %cst_13 : f32 to vector<32x32xf32>
    %47 = arith.maximumf %45, %46 : vector<32x32xf32>
    %48 = arith.addf %35, %42 : vector<32x32xf32>
    %49 = vector.broadcast %33 : vector<1x32xf32> to vector<32x32xf32>
    %50 = arith.addf %48, %49 : vector<32x32xf32>
    %cst_14 = arith.constant 0.000000e+00 : f32
    %51 = vector.broadcast %cst_14 : f32 to vector<32x32xf32>
    %52 = arith.maximumf %50, %51 : vector<32x32xf32>
    %53 = arith.maximumf %47, %52 : vector<32x32xf32>
    %c24 = arith.constant 24 : index
    %c0_15 = arith.constant 0 : index
    %54 = vector.load %arg1[%c24, %c0_15] : memref<440x80xf32, #tpu.memory_space<vmem>>, vector<32x20xf32>
    %c98 = arith.constant 98 : index
    %c0_16 = arith.constant 0 : index
    %55 = vector.load %arg1[%c98, %c0_16] : memref<440x80xf32, #tpu.memory_space<vmem>>, vector<1x10xf32>
    %cst_17 = arith.constant dense<0.000000e+00> : vector<32x20xf32>
    %56 = tpu.matmul %53, %54, %cst_17 {dimension_numbers = #tpu.dot_dimension_numbers<[1], [0], [0], [1], [0, 0, 1, 1], [], []>} : vector<32x32xf32>, vector<32x20xf32>, vector<32x20xf32> -> vector<32x20xf32>
    %57 = vector.extract_strided_slice %56 {offsets = [0, 0], sizes = [32, 10], strides = [1, 1]} : vector<32x20xf32> to vector<32x10xf32>
    %58 = vector.extract_strided_slice %56 {offsets = [0, 10], sizes = [32, 10], strides = [1, 1]} : vector<32x20xf32> to vector<32x10xf32>
    %c2_i32_18 = arith.constant 2 : i32
    %59 = tpu.dynamic_rotate %57 by %c2_i32_18 dim 0 : vector<32x10xf32>, i32 -> vector<32x10xf32>
    %60 = vector.broadcast %4 : vector<32x1xf32> to vector<32x10xf32>
    %61 = arith.mulf %59, %60 : vector<32x10xf32>
    %c30_i32_19 = arith.constant 30 : i32
    %62 = tpu.dynamic_rotate %58 by %c30_i32_19 dim 0 : vector<32x10xf32>, i32 -> vector<32x10xf32>
    %63 = vector.broadcast %8 : vector<32x1xf32> to vector<32x10xf32>
    %64 = arith.mulf %62, %63 : vector<32x10xf32>
    %65 = arith.addf %61, %58 : vector<32x10xf32>
    %66 = vector.broadcast %55 : vector<1x10xf32> to vector<32x10xf32>
    %67 = arith.addf %65, %66 : vector<32x10xf32>
    %cst_20 = arith.constant 0.000000e+00 : f32
    %68 = vector.broadcast %cst_20 : f32 to vector<32x10xf32>
    %69 = arith.maximumf %67, %68 : vector<32x10xf32>
    %70 = arith.addf %57, %64 : vector<32x10xf32>
    %71 = vector.broadcast %55 : vector<1x10xf32> to vector<32x10xf32>
    %72 = arith.addf %70, %71 : vector<32x10xf32>
    %cst_21 = arith.constant 0.000000e+00 : f32
    %73 = vector.broadcast %cst_21 : f32 to vector<32x10xf32>
    %74 = arith.maximumf %72, %73 : vector<32x10xf32>
    %75 = arith.maximumf %69, %74 : vector<32x10xf32>
    %c56 = arith.constant 56 : index
    %c0_22 = arith.constant 0 : index
    %76 = vector.load %arg1[%c56, %c0_22] : memref<440x80xf32, #tpu.memory_space<vmem>>, vector<10x80xf32>
    %c99 = arith.constant 99 : index
    %c0_23 = arith.constant 0 : index
    %77 = vector.load %arg1[%c99, %c0_23] : memref<440x80xf32, #tpu.memory_space<vmem>>, vector<1x80xf32>
    %cst_24 = arith.constant dense<0.000000e+00> : vector<32x80xf32>
    %78 = tpu.matmul %75, %76, %cst_24 {dimension_numbers = #tpu.dot_dimension_numbers<[1], [0], [0], [1], [0, 0, 1, 1], [], []>} : vector<32x10xf32>, vector<10x80xf32>, vector<32x80xf32> -> vector<32x80xf32>
    %79 = vector.broadcast %77 : vector<1x80xf32> to vector<32x80xf32>
    %80 = arith.addf %78, %79 : vector<32x80xf32>
    %81 = vector.extract_strided_slice %80 {offsets = [0, 0], sizes = [32, 40], strides = [1, 1]} : vector<32x80xf32> to vector<32x40xf32>
    %82 = vector.extract_strided_slice %80 {offsets = [0, 40], sizes = [32, 40], strides = [1, 1]} : vector<32x80xf32> to vector<32x40xf32>
    %c72 = arith.constant 72 : index
    %c0_25 = arith.constant 0 : index
    %83 = vector.load %arg1[%c72, %c0_25] : memref<440x80xf32, #tpu.memory_space<vmem>>, vector<20x40xf32>
    %84 = tpu.iota {dimensions = array<i32: 0>} : vector<4x20xi32>
    %85 = tpu.iota {dimensions = array<i32: 1>} : vector<4x20xi32>
    %c2_i32_26 = arith.constant 2 : i32
    %86 = vector.broadcast %c2_i32_26 : i32 to vector<4x20xi32>
    %87 = arith.cmpi slt, %84, %86 : vector<4x20xi32>
    %c10_i32 = arith.constant 10 : i32
    %88 = vector.broadcast %c10_i32 : i32 to vector<4x20xi32>
    %89 = arith.cmpi slt, %85, %88 : vector<4x20xi32>
    %90 = arith.andi %87, %89 : vector<4x20xi1>
    %c2_i32_27 = arith.constant 2 : i32
    %91 = vector.broadcast %c2_i32_27 : i32 to vector<4x20xi32>
    %92 = arith.cmpi sge, %84, %91 : vector<4x20xi32>
    %c10_i32_28 = arith.constant 10 : i32
    %93 = vector.broadcast %c10_i32_28 : i32 to vector<4x20xi32>
    %94 = arith.cmpi sge, %85, %93 : vector<4x20xi32>
    %95 = arith.andi %92, %94 : vector<4x20xi1>
    %96 = arith.ori %90, %95 : vector<4x20xi1>
    %cst_29 = arith.constant 0.000000e+00 : f32
    %97 = vector.broadcast %cst_29 : f32 to vector<4x20xf32>
    %cst_30 = arith.constant 0.000000e+00 : f32
    %98 = vector.broadcast %cst_30 : f32 to vector<4x10xf32>
    %99 = vector.extract_strided_slice %81 {offsets = [0, 0], sizes = [2, 40], strides = [1, 1]} : vector<32x40xf32> to vector<2x40xf32>
    %100 = vector.extract_strided_slice %82 {offsets = [30, 0], sizes = [2, 40], strides = [1, 1]} : vector<32x40xf32> to vector<2x40xf32>
    %101 = tpu.concatenate %99, %100 in 0 : vector<2x40xf32>, vector<2x40xf32> -> vector<4x40xf32>
    %cst_31 = arith.constant dense<0.000000e+00> : vector<4x40xf32>
    %102 = tpu.matmul %97, %83, %cst_31 {dimension_numbers = #tpu.dot_dimension_numbers<[1], [0], [0], [1], [0, 0, 1, 1], [], []>} : vector<4x20xf32>, vector<20x40xf32>, vector<4x40xf32> -> vector<4x40xf32>
    %103 = arith.addf %101, %102 : vector<4x40xf32>
    %104 = vector.extract_strided_slice %103 {offsets = [0, 0], sizes = [4, 30], strides = [1, 1]} : vector<4x40xf32> to vector<4x30xf32>
    %105 = arith.negf %104 : vector<4x30xf32>
    %106 = math.exp %105 : vector<4x30xf32>
    %cst_32 = arith.constant 1.000000e+00 : f32
    %107 = vector.broadcast %cst_32 : f32 to vector<4x30xf32>
    %108 = arith.addf %107, %106 : vector<4x30xf32>
    %109 = arith.divf %107, %108 : vector<4x30xf32>
    %110 = vector.extract_strided_slice %109 {offsets = [0, 0], sizes = [4, 10], strides = [1, 1]} : vector<4x30xf32> to vector<4x10xf32>
    %111 = vector.extract_strided_slice %109 {offsets = [0, 10], sizes = [4, 10], strides = [1, 1]} : vector<4x30xf32> to vector<4x10xf32>
    %112 = vector.extract_strided_slice %109 {offsets = [0, 20], sizes = [4, 10], strides = [1, 1]} : vector<4x30xf32> to vector<4x10xf32>
    %113 = vector.extract_strided_slice %103 {offsets = [0, 30], sizes = [4, 10], strides = [1, 1]} : vector<4x40xf32> to vector<4x10xf32>
    %114 = math.tanh %113 : vector<4x10xf32>
    %115 = arith.mulf %111, %98 : vector<4x10xf32>
    %116 = arith.mulf %110, %114 : vector<4x10xf32>
    %117 = arith.addf %115, %116 : vector<4x10xf32>
    %118 = math.tanh %117 : vector<4x10xf32>
    %119 = arith.mulf %112, %118 : vector<4x10xf32>
    %120 = tpu.concatenate %119, %119 in 1 : vector<4x10xf32>, vector<4x10xf32> -> vector<4x20xf32>
    %cst_33 = arith.constant 0.000000e+00 : f32
    %121 = vector.broadcast %cst_33 : f32 to vector<4x20xf32>
    %122 = arith.select %96, %120, %121 : vector<4x20xi1>, vector<4x20xf32>
    %c0_34 = arith.constant 0 : index
    %c0_35 = arith.constant 0 : index
    %123 = vector.load %arg3[%c0_34, %c0_35] : memref<4x320xf32, #tpu.memory_space<vmem>>, vector<4x20xf32>
    tpu.vector_store %arg3[%c0_34, %c0_35], %122 {strides = array<i32>} : memref<4x320xf32, #tpu.memory_space<vmem>>, vector<4x20xf32>,
    %124 = vector.extract_strided_slice %81 {offsets = [2, 0], sizes = [2, 40], strides = [1, 1]} : vector<32x40xf32> to vector<2x40xf32>
    %125 = vector.extract_strided_slice %82 {offsets = [28, 0], sizes = [2, 40], strides = [1, 1]} : vector<32x40xf32> to vector<2x40xf32>
    %126 = tpu.concatenate %124, %125 in 0 : vector<2x40xf32>, vector<2x40xf32> -> vector<4x40xf32>
    %cst_36 = arith.constant dense<0.000000e+00> : vector<4x40xf32>
    %127 = tpu.matmul %122, %83, %cst_36 {dimension_numbers = #tpu.dot_dimension_numbers<[1], [0], [0], [1], [0, 0, 1, 1], [], []>} : vector<4x20xf32>, vector<20x40xf32>, vector<4x40xf32> -> vector<4x40xf32>
    %128 = arith.addf %126, %127 : vector<4x40xf32>
    %129 = vector.extract_strided_slice %128 {offsets = [0, 0], sizes = [4, 30], strides = [1, 1]} : vector<4x40xf32> to vector<4x30xf32>
    %130 = arith.negf %129 : vector<4x30xf32>
    %131 = math.exp %130 : vector<4x30xf32>
    %cst_37 = arith.constant 1.000000e+00 : f32
    %132 = vector.broadcast %cst_37 : f32 to vector<4x30xf32>
    %133 = arith.addf %132, %131 : vector<4x30xf32>
    %134 = arith.divf %132, %133 : vector<4x30xf32>
    %135 = vector.extract_strided_slice %134 {offsets = [0, 0], sizes = [4, 10], strides = [1, 1]} : vector<4x30xf32> to vector<4x10xf32>
    %136 = vector.extract_strided_slice %134 {offsets = [0, 10], sizes = [4, 10], strides = [1, 1]} : vector<4x30xf32> to vector<4x10xf32>
    %137 = vector.extract_strided_slice %134 {offsets = [0, 20], sizes = [4, 10], strides = [1, 1]} : vector<4x30xf32> to vector<4x10xf32>
    %138 = vector.extract_strided_slice %128 {offsets = [0, 30], sizes = [4, 10], strides = [1, 1]} : vector<4x40xf32> to vector<4x10xf32>
    %139 = math.tanh %138 : vector<4x10xf32>
    %140 = arith.mulf %136, %117 : vector<4x10xf32>
    %141 = arith.mulf %135, %139 : vector<4x10xf32>
    %142 = arith.addf %140, %141 : vector<4x10xf32>
    %143 = math.tanh %142 : vector<4x10xf32>
    %144 = arith.mulf %137, %143 : vector<4x10xf32>
    %145 = tpu.concatenate %144, %144 in 1 : vector<4x10xf32>, vector<4x10xf32> -> vector<4x20xf32>
    %cst_38 = arith.constant 0.000000e+00 : f32
    %146 = vector.broadcast %cst_38 : f32 to vector<4x20xf32>
    %147 = arith.select %96, %145, %146 : vector<4x20xi1>, vector<4x20xf32>
    %c0_39 = arith.constant 0 : index
    %c20 = arith.constant 20 : index
    %148 = vector.load %arg3[%c0_39, %c20] : memref<4x320xf32, #tpu.memory_space<vmem>>, vector<4x20xf32>
    tpu.vector_store %arg3[%c0_39, %c20], %147 {strides = array<i32>} : memref<4x320xf32, #tpu.memory_space<vmem>>, vector<4x20xf32>,
    %149 = vector.extract_strided_slice %81 {offsets = [4, 0], sizes = [2, 40], strides = [1, 1]} : vector<32x40xf32> to vector<2x40xf32>
    %150 = vector.extract_strided_slice %82 {offsets = [26, 0], sizes = [2, 40], strides = [1, 1]} : vector<32x40xf32> to vector<2x40xf32>
    %151 = tpu.concatenate %149, %150 in 0 : vector<2x40xf32>, vector<2x40xf32> -> vector<4x40xf32>
    %cst_40 = arith.constant dense<0.000000e+00> : vector<4x40xf32>
    %152 = tpu.matmul %147, %83, %cst_40 {dimension_numbers = #tpu.dot_dimension_numbers<[1], [0], [0], [1], [0, 0, 1, 1], [], []>} : vector<4x20xf32>, vector<20x40xf32>, vector<4x40xf32> -> vector<4x40xf32>
    %153 = arith.addf %151, %152 : vector<4x40xf32>
    %154 = vector.extract_strided_slice %153 {offsets = [0, 0], sizes = [4, 30], strides = [1, 1]} : vector<4x40xf32> to vector<4x30xf32>
    %155 = arith.negf %154 : vector<4x30xf32>
    %156 = math.exp %155 : vector<4x30xf32>
    %cst_41 = arith.constant 1.000000e+00 : f32
    %157 = vector.broadcast %cst_41 : f32 to vector<4x30xf32>
    %158 = arith.addf %157, %156 : vector<4x30xf32>
    %159 = arith.divf %157, %158 : vector<4x30xf32>
    %160 = vector.extract_strided_slice %159 {offsets = [0, 0], sizes = [4, 10], strides = [1, 1]} : vector<4x30xf32> to vector<4x10xf32>
    %161 = vector.extract_strided_slice %159 {offsets = [0, 10], sizes = [4, 10], strides = [1, 1]} : vector<4x30xf32> to vector<4x10xf32>
    %162 = vector.extract_strided_slice %159 {offsets = [0, 20], sizes = [4, 10], strides = [1, 1]} : vector<4x30xf32> to vector<4x10xf32>
    %163 = vector.extract_strided_slice %153 {offsets = [0, 30], sizes = [4, 10], strides = [1, 1]} : vector<4x40xf32> to vector<4x10xf32>
    %164 = math.tanh %163 : vector<4x10xf32>
    %165 = arith.mulf %161, %142 : vector<4x10xf32>
    %166 = arith.mulf %160, %164 : vector<4x10xf32>
    %167 = arith.addf %165, %166 : vector<4x10xf32>
    %168 = math.tanh %167 : vector<4x10xf32>
    %169 = arith.mulf %162, %168 : vector<4x10xf32>
    %170 = tpu.concatenate %169, %169 in 1 : vector<4x10xf32>, vector<4x10xf32> -> vector<4x20xf32>
    %cst_42 = arith.constant 0.000000e+00 : f32
    %171 = vector.broadcast %cst_42 : f32 to vector<4x20xf32>
    %172 = arith.select %96, %170, %171 : vector<4x20xi1>, vector<4x20xf32>
    %c0_43 = arith.constant 0 : index
    %c40 = arith.constant 40 : index
    %173 = vector.load %arg3[%c0_43, %c40] : memref<4x320xf32, #tpu.memory_space<vmem>>, vector<4x20xf32>
    tpu.vector_store %arg3[%c0_43, %c40], %172 {strides = array<i32>} : memref<4x320xf32, #tpu.memory_space<vmem>>, vector<4x20xf32>,
    %174 = vector.extract_strided_slice %81 {offsets = [6, 0], sizes = [2, 40], strides = [1, 1]} : vector<32x40xf32> to vector<2x40xf32>
    %175 = vector.extract_strided_slice %82 {offsets = [24, 0], sizes = [2, 40], strides = [1, 1]} : vector<32x40xf32> to vector<2x40xf32>
    %176 = tpu.concatenate %174, %175 in 0 : vector<2x40xf32>, vector<2x40xf32> -> vector<4x40xf32>
    %cst_44 = arith.constant dense<0.000000e+00> : vector<4x40xf32>
    %177 = tpu.matmul %172, %83, %cst_44 {dimension_numbers = #tpu.dot_dimension_numbers<[1], [0], [0], [1], [0, 0, 1, 1], [], []>} : vector<4x20xf32>, vector<20x40xf32>, vector<4x40xf32> -> vector<4x40xf32>
    %178 = arith.addf %176, %177 : vector<4x40xf32>
    %179 = vector.extract_strided_slice %178 {offsets = [0, 0], sizes = [4, 30], strides = [1, 1]} : vector<4x40xf32> to vector<4x30xf32>
    %180 = arith.negf %179 : vector<4x30xf32>
    %181 = math.exp %180 : vector<4x30xf32>
    %cst_45 = arith.constant 1.000000e+00 : f32
    %182 = vector.broadcast %cst_45 : f32 to vector<4x30xf32>
    %183 = arith.addf %182, %181 : vector<4x30xf32>
    %184 = arith.divf %182, %183 : vector<4x30xf32>
    %185 = vector.extract_strided_slice %184 {offsets = [0, 0], sizes = [4, 10], strides = [1, 1]} : vector<4x30xf32> to vector<4x10xf32>
    %186 = vector.extract_strided_slice %184 {offsets = [0, 10], sizes = [4, 10], strides = [1, 1]} : vector<4x30xf32> to vector<4x10xf32>
    %187 = vector.extract_strided_slice %184 {offsets = [0, 20], sizes = [4, 10], strides = [1, 1]} : vector<4x30xf32> to vector<4x10xf32>
    %188 = vector.extract_strided_slice %178 {offsets = [0, 30], sizes = [4, 10], strides = [1, 1]} : vector<4x40xf32> to vector<4x10xf32>
    %189 = math.tanh %188 : vector<4x10xf32>
    %190 = arith.mulf %186, %167 : vector<4x10xf32>
    %191 = arith.mulf %185, %189 : vector<4x10xf32>
    %192 = arith.addf %190, %191 : vector<4x10xf32>
    %193 = math.tanh %192 : vector<4x10xf32>
    %194 = arith.mulf %187, %193 : vector<4x10xf32>
    %195 = tpu.concatenate %194, %194 in 1 : vector<4x10xf32>, vector<4x10xf32> -> vector<4x20xf32>
    %cst_46 = arith.constant 0.000000e+00 : f32
    %196 = vector.broadcast %cst_46 : f32 to vector<4x20xf32>
    %197 = arith.select %96, %195, %196 : vector<4x20xi1>, vector<4x20xf32>
    %c0_47 = arith.constant 0 : index
    %c60 = arith.constant 60 : index
    %198 = vector.load %arg3[%c0_47, %c60] : memref<4x320xf32, #tpu.memory_space<vmem>>, vector<4x20xf32>
    tpu.vector_store %arg3[%c0_47, %c60], %197 {strides = array<i32>} : memref<4x320xf32, #tpu.memory_space<vmem>>, vector<4x20xf32>,
    %199 = vector.extract_strided_slice %81 {offsets = [8, 0], sizes = [2, 40], strides = [1, 1]} : vector<32x40xf32> to vector<2x40xf32>
    %200 = vector.extract_strided_slice %82 {offsets = [22, 0], sizes = [2, 40], strides = [1, 1]} : vector<32x40xf32> to vector<2x40xf32>
    %201 = tpu.concatenate %199, %200 in 0 : vector<2x40xf32>, vector<2x40xf32> -> vector<4x40xf32>
    %cst_48 = arith.constant dense<0.000000e+00> : vector<4x40xf32>
    %202 = tpu.matmul %197, %83, %cst_48 {dimension_numbers = #tpu.dot_dimension_numbers<[1], [0], [0], [1], [0, 0, 1, 1], [], []>} : vector<4x20xf32>, vector<20x40xf32>, vector<4x40xf32> -> vector<4x40xf32>
    %203 = arith.addf %201, %202 : vector<4x40xf32>
    %204 = vector.extract_strided_slice %203 {offsets = [0, 0], sizes = [4, 30], strides = [1, 1]} : vector<4x40xf32> to vector<4x30xf32>
    %205 = arith.negf %204 : vector<4x30xf32>
    %206 = math.exp %205 : vector<4x30xf32>
    %cst_49 = arith.constant 1.000000e+00 : f32
    %207 = vector.broadcast %cst_49 : f32 to vector<4x30xf32>
    %208 = arith.addf %207, %206 : vector<4x30xf32>
    %209 = arith.divf %207, %208 : vector<4x30xf32>
    %210 = vector.extract_strided_slice %209 {offsets = [0, 0], sizes = [4, 10], strides = [1, 1]} : vector<4x30xf32> to vector<4x10xf32>
    %211 = vector.extract_strided_slice %209 {offsets = [0, 10], sizes = [4, 10], strides = [1, 1]} : vector<4x30xf32> to vector<4x10xf32>
    %212 = vector.extract_strided_slice %209 {offsets = [0, 20], sizes = [4, 10], strides = [1, 1]} : vector<4x30xf32> to vector<4x10xf32>
    %213 = vector.extract_strided_slice %203 {offsets = [0, 30], sizes = [4, 10], strides = [1, 1]} : vector<4x40xf32> to vector<4x10xf32>
    %214 = math.tanh %213 : vector<4x10xf32>
    %215 = arith.mulf %211, %192 : vector<4x10xf32>
    %216 = arith.mulf %210, %214 : vector<4x10xf32>
    %217 = arith.addf %215, %216 : vector<4x10xf32>
    %218 = math.tanh %217 : vector<4x10xf32>
    %219 = arith.mulf %212, %218 : vector<4x10xf32>
    %220 = tpu.concatenate %219, %219 in 1 : vector<4x10xf32>, vector<4x10xf32> -> vector<4x20xf32>
    %cst_50 = arith.constant 0.000000e+00 : f32
    %221 = vector.broadcast %cst_50 : f32 to vector<4x20xf32>
    %222 = arith.select %96, %220, %221 : vector<4x20xi1>, vector<4x20xf32>
    %c0_51 = arith.constant 0 : index
    %c80 = arith.constant 80 : index
    %223 = vector.load %arg3[%c0_51, %c80] : memref<4x320xf32, #tpu.memory_space<vmem>>, vector<4x20xf32>
    tpu.vector_store %arg3[%c0_51, %c80], %222 {strides = array<i32>} : memref<4x320xf32, #tpu.memory_space<vmem>>, vector<4x20xf32>,
    %224 = vector.extract_strided_slice %81 {offsets = [10, 0], sizes = [2, 40], strides = [1, 1]} : vector<32x40xf32> to vector<2x40xf32>
    %225 = vector.extract_strided_slice %82 {offsets = [20, 0], sizes = [2, 40], strides = [1, 1]} : vector<32x40xf32> to vector<2x40xf32>
    %226 = tpu.concatenate %224, %225 in 0 : vector<2x40xf32>, vector<2x40xf32> -> vector<4x40xf32>
    %cst_52 = arith.constant dense<0.000000e+00> : vector<4x40xf32>
    %227 = tpu.matmul %222, %83, %cst_52 {dimension_numbers = #tpu.dot_dimension_numbers<[1], [0], [0], [1], [0, 0, 1, 1], [], []>} : vector<4x20xf32>, vector<20x40xf32>, vector<4x40xf32> -> vector<4x40xf32>
    %228 = arith.addf %226, %227 : vector<4x40xf32>
    %229 = vector.extract_strided_slice %228 {offsets = [0, 0], sizes = [4, 30], strides = [1, 1]} : vector<4x40xf32> to vector<4x30xf32>
    %230 = arith.negf %229 : vector<4x30xf32>
    %231 = math.exp %230 : vector<4x30xf32>
    %cst_53 = arith.constant 1.000000e+00 : f32
    %232 = vector.broadcast %cst_53 : f32 to vector<4x30xf32>
    %233 = arith.addf %232, %231 : vector<4x30xf32>
    %234 = arith.divf %232, %233 : vector<4x30xf32>
    %235 = vector.extract_strided_slice %234 {offsets = [0, 0], sizes = [4, 10], strides = [1, 1]} : vector<4x30xf32> to vector<4x10xf32>
    %236 = vector.extract_strided_slice %234 {offsets = [0, 10], sizes = [4, 10], strides = [1, 1]} : vector<4x30xf32> to vector<4x10xf32>
    %237 = vector.extract_strided_slice %234 {offsets = [0, 20], sizes = [4, 10], strides = [1, 1]} : vector<4x30xf32> to vector<4x10xf32>
    %238 = vector.extract_strided_slice %228 {offsets = [0, 30], sizes = [4, 10], strides = [1, 1]} : vector<4x40xf32> to vector<4x10xf32>
    %239 = math.tanh %238 : vector<4x10xf32>
    %240 = arith.mulf %236, %217 : vector<4x10xf32>
    %241 = arith.mulf %235, %239 : vector<4x10xf32>
    %242 = arith.addf %240, %241 : vector<4x10xf32>
    %243 = math.tanh %242 : vector<4x10xf32>
    %244 = arith.mulf %237, %243 : vector<4x10xf32>
    %245 = tpu.concatenate %244, %244 in 1 : vector<4x10xf32>, vector<4x10xf32> -> vector<4x20xf32>
    %cst_54 = arith.constant 0.000000e+00 : f32
    %246 = vector.broadcast %cst_54 : f32 to vector<4x20xf32>
    %247 = arith.select %96, %245, %246 : vector<4x20xi1>, vector<4x20xf32>
    %c0_55 = arith.constant 0 : index
    %c100 = arith.constant 100 : index
    %248 = vector.load %arg3[%c0_55, %c100] : memref<4x320xf32, #tpu.memory_space<vmem>>, vector<4x20xf32>
    tpu.vector_store %arg3[%c0_55, %c100], %247 {strides = array<i32>} : memref<4x320xf32, #tpu.memory_space<vmem>>, vector<4x20xf32>,
    %249 = vector.extract_strided_slice %81 {offsets = [12, 0], sizes = [2, 40], strides = [1, 1]} : vector<32x40xf32> to vector<2x40xf32>
    %250 = vector.extract_strided_slice %82 {offsets = [18, 0], sizes = [2, 40], strides = [1, 1]} : vector<32x40xf32> to vector<2x40xf32>
    %251 = tpu.concatenate %249, %250 in 0 : vector<2x40xf32>, vector<2x40xf32> -> vector<4x40xf32>
    %cst_56 = arith.constant dense<0.000000e+00> : vector<4x40xf32>
    %252 = tpu.matmul %247, %83, %cst_56 {dimension_numbers = #tpu.dot_dimension_numbers<[1], [0], [0], [1], [0, 0, 1, 1], [], []>} : vector<4x20xf32>, vector<20x40xf32>, vector<4x40xf32> -> vector<4x40xf32>
    %253 = arith.addf %251, %252 : vector<4x40xf32>
    %254 = vector.extract_strided_slice %253 {offsets = [0, 0], sizes = [4, 30], strides = [1, 1]} : vector<4x40xf32> to vector<4x30xf32>
    %255 = arith.negf %254 : vector<4x30xf32>
    %256 = math.exp %255 : vector<4x30xf32>
    %cst_57 = arith.constant 1.000000e+00 : f32
    %257 = vector.broadcast %cst_57 : f32 to vector<4x30xf32>
    %258 = arith.addf %257, %256 : vector<4x30xf32>
    %259 = arith.divf %257, %258 : vector<4x30xf32>
    %260 = vector.extract_strided_slice %259 {offsets = [0, 0], sizes = [4, 10], strides = [1, 1]} : vector<4x30xf32> to vector<4x10xf32>
    %261 = vector.extract_strided_slice %259 {offsets = [0, 10], sizes = [4, 10], strides = [1, 1]} : vector<4x30xf32> to vector<4x10xf32>
    %262 = vector.extract_strided_slice %259 {offsets = [0, 20], sizes = [4, 10], strides = [1, 1]} : vector<4x30xf32> to vector<4x10xf32>
    %263 = vector.extract_strided_slice %253 {offsets = [0, 30], sizes = [4, 10], strides = [1, 1]} : vector<4x40xf32> to vector<4x10xf32>
    %264 = math.tanh %263 : vector<4x10xf32>
    %265 = arith.mulf %261, %242 : vector<4x10xf32>
    %266 = arith.mulf %260, %264 : vector<4x10xf32>
    %267 = arith.addf %265, %266 : vector<4x10xf32>
    %268 = math.tanh %267 : vector<4x10xf32>
    %269 = arith.mulf %262, %268 : vector<4x10xf32>
    %270 = tpu.concatenate %269, %269 in 1 : vector<4x10xf32>, vector<4x10xf32> -> vector<4x20xf32>
    %cst_58 = arith.constant 0.000000e+00 : f32
    %271 = vector.broadcast %cst_58 : f32 to vector<4x20xf32>
    %272 = arith.select %96, %270, %271 : vector<4x20xi1>, vector<4x20xf32>
    %c0_59 = arith.constant 0 : index
    %c120 = arith.constant 120 : index
    %273 = vector.load %arg3[%c0_59, %c120] : memref<4x320xf32, #tpu.memory_space<vmem>>, vector<4x20xf32>
    tpu.vector_store %arg3[%c0_59, %c120], %272 {strides = array<i32>} : memref<4x320xf32, #tpu.memory_space<vmem>>, vector<4x20xf32>,
    %274 = vector.extract_strided_slice %81 {offsets = [14, 0], sizes = [2, 40], strides = [1, 1]} : vector<32x40xf32> to vector<2x40xf32>
    %275 = vector.extract_strided_slice %82 {offsets = [16, 0], sizes = [2, 40], strides = [1, 1]} : vector<32x40xf32> to vector<2x40xf32>
    %276 = tpu.concatenate %274, %275 in 0 : vector<2x40xf32>, vector<2x40xf32> -> vector<4x40xf32>
    %cst_60 = arith.constant dense<0.000000e+00> : vector<4x40xf32>
    %277 = tpu.matmul %272, %83, %cst_60 {dimension_numbers = #tpu.dot_dimension_numbers<[1], [0], [0], [1], [0, 0, 1, 1], [], []>} : vector<4x20xf32>, vector<20x40xf32>, vector<4x40xf32> -> vector<4x40xf32>
    %278 = arith.addf %276, %277 : vector<4x40xf32>
    %279 = vector.extract_strided_slice %278 {offsets = [0, 0], sizes = [4, 30], strides = [1, 1]} : vector<4x40xf32> to vector<4x30xf32>
    %280 = arith.negf %279 : vector<4x30xf32>
    %281 = math.exp %280 : vector<4x30xf32>
    %cst_61 = arith.constant 1.000000e+00 : f32
    %282 = vector.broadcast %cst_61 : f32 to vector<4x30xf32>
    %283 = arith.addf %282, %281 : vector<4x30xf32>
    %284 = arith.divf %282, %283 : vector<4x30xf32>
    %285 = vector.extract_strided_slice %284 {offsets = [0, 0], sizes = [4, 10], strides = [1, 1]} : vector<4x30xf32> to vector<4x10xf32>
    %286 = vector.extract_strided_slice %284 {offsets = [0, 10], sizes = [4, 10], strides = [1, 1]} : vector<4x30xf32> to vector<4x10xf32>
    %287 = vector.extract_strided_slice %284 {offsets = [0, 20], sizes = [4, 10], strides = [1, 1]} : vector<4x30xf32> to vector<4x10xf32>
    %288 = vector.extract_strided_slice %278 {offsets = [0, 30], sizes = [4, 10], strides = [1, 1]} : vector<4x40xf32> to vector<4x10xf32>
    %289 = math.tanh %288 : vector<4x10xf32>
    %290 = arith.mulf %286, %267 : vector<4x10xf32>
    %291 = arith.mulf %285, %289 : vector<4x10xf32>
    %292 = arith.addf %290, %291 : vector<4x10xf32>
    %293 = math.tanh %292 : vector<4x10xf32>
    %294 = arith.mulf %287, %293 : vector<4x10xf32>
    %295 = tpu.concatenate %294, %294 in 1 : vector<4x10xf32>, vector<4x10xf32> -> vector<4x20xf32>
    %cst_62 = arith.constant 0.000000e+00 : f32
    %296 = vector.broadcast %cst_62 : f32 to vector<4x20xf32>
    %297 = arith.select %96, %295, %296 : vector<4x20xi1>, vector<4x20xf32>
    %c0_63 = arith.constant 0 : index
    %c140 = arith.constant 140 : index
    %298 = vector.load %arg3[%c0_63, %c140] : memref<4x320xf32, #tpu.memory_space<vmem>>, vector<4x20xf32>
    tpu.vector_store %arg3[%c0_63, %c140], %297 {strides = array<i32>} : memref<4x320xf32, #tpu.memory_space<vmem>>, vector<4x20xf32>,
    %299 = vector.extract_strided_slice %81 {offsets = [16, 0], sizes = [2, 40], strides = [1, 1]} : vector<32x40xf32> to vector<2x40xf32>
    %300 = vector.extract_strided_slice %82 {offsets = [14, 0], sizes = [2, 40], strides = [1, 1]} : vector<32x40xf32> to vector<2x40xf32>
    %301 = tpu.concatenate %299, %300 in 0 : vector<2x40xf32>, vector<2x40xf32> -> vector<4x40xf32>
    %cst_64 = arith.constant dense<0.000000e+00> : vector<4x40xf32>
    %302 = tpu.matmul %297, %83, %cst_64 {dimension_numbers = #tpu.dot_dimension_numbers<[1], [0], [0], [1], [0, 0, 1, 1], [], []>} : vector<4x20xf32>, vector<20x40xf32>, vector<4x40xf32> -> vector<4x40xf32>
    %303 = arith.addf %301, %302 : vector<4x40xf32>
    %304 = vector.extract_strided_slice %303 {offsets = [0, 0], sizes = [4, 30], strides = [1, 1]} : vector<4x40xf32> to vector<4x30xf32>
    %305 = arith.negf %304 : vector<4x30xf32>
    %306 = math.exp %305 : vector<4x30xf32>
    %cst_65 = arith.constant 1.000000e+00 : f32
    %307 = vector.broadcast %cst_65 : f32 to vector<4x30xf32>
    %308 = arith.addf %307, %306 : vector<4x30xf32>
    %309 = arith.divf %307, %308 : vector<4x30xf32>
    %310 = vector.extract_strided_slice %309 {offsets = [0, 0], sizes = [4, 10], strides = [1, 1]} : vector<4x30xf32> to vector<4x10xf32>
    %311 = vector.extract_strided_slice %309 {offsets = [0, 10], sizes = [4, 10], strides = [1, 1]} : vector<4x30xf32> to vector<4x10xf32>
    %312 = vector.extract_strided_slice %309 {offsets = [0, 20], sizes = [4, 10], strides = [1, 1]} : vector<4x30xf32> to vector<4x10xf32>
    %313 = vector.extract_strided_slice %303 {offsets = [0, 30], sizes = [4, 10], strides = [1, 1]} : vector<4x40xf32> to vector<4x10xf32>
    %314 = math.tanh %313 : vector<4x10xf32>
    %315 = arith.mulf %311, %292 : vector<4x10xf32>
    %316 = arith.mulf %310, %314 : vector<4x10xf32>
    %317 = arith.addf %315, %316 : vector<4x10xf32>
    %318 = math.tanh %317 : vector<4x10xf32>
    %319 = arith.mulf %312, %318 : vector<4x10xf32>
    %320 = tpu.concatenate %319, %319 in 1 : vector<4x10xf32>, vector<4x10xf32> -> vector<4x20xf32>
    %cst_66 = arith.constant 0.000000e+00 : f32
    %321 = vector.broadcast %cst_66 : f32 to vector<4x20xf32>
    %322 = arith.select %96, %320, %321 : vector<4x20xi1>, vector<4x20xf32>
    %c0_67 = arith.constant 0 : index
    %c160 = arith.constant 160 : index
    %323 = vector.load %arg3[%c0_67, %c160] : memref<4x320xf32, #tpu.memory_space<vmem>>, vector<4x20xf32>
    tpu.vector_store %arg3[%c0_67, %c160], %322 {strides = array<i32>} : memref<4x320xf32, #tpu.memory_space<vmem>>, vector<4x20xf32>,
    %324 = vector.extract_strided_slice %81 {offsets = [18, 0], sizes = [2, 40], strides = [1, 1]} : vector<32x40xf32> to vector<2x40xf32>
    %325 = vector.extract_strided_slice %82 {offsets = [12, 0], sizes = [2, 40], strides = [1, 1]} : vector<32x40xf32> to vector<2x40xf32>
    %326 = tpu.concatenate %324, %325 in 0 : vector<2x40xf32>, vector<2x40xf32> -> vector<4x40xf32>
    %cst_68 = arith.constant dense<0.000000e+00> : vector<4x40xf32>
    %327 = tpu.matmul %322, %83, %cst_68 {dimension_numbers = #tpu.dot_dimension_numbers<[1], [0], [0], [1], [0, 0, 1, 1], [], []>} : vector<4x20xf32>, vector<20x40xf32>, vector<4x40xf32> -> vector<4x40xf32>
    %328 = arith.addf %326, %327 : vector<4x40xf32>
    %329 = vector.extract_strided_slice %328 {offsets = [0, 0], sizes = [4, 30], strides = [1, 1]} : vector<4x40xf32> to vector<4x30xf32>
    %330 = arith.negf %329 : vector<4x30xf32>
    %331 = math.exp %330 : vector<4x30xf32>
    %cst_69 = arith.constant 1.000000e+00 : f32
    %332 = vector.broadcast %cst_69 : f32 to vector<4x30xf32>
    %333 = arith.addf %332, %331 : vector<4x30xf32>
    %334 = arith.divf %332, %333 : vector<4x30xf32>
    %335 = vector.extract_strided_slice %334 {offsets = [0, 0], sizes = [4, 10], strides = [1, 1]} : vector<4x30xf32> to vector<4x10xf32>
    %336 = vector.extract_strided_slice %334 {offsets = [0, 10], sizes = [4, 10], strides = [1, 1]} : vector<4x30xf32> to vector<4x10xf32>
    %337 = vector.extract_strided_slice %334 {offsets = [0, 20], sizes = [4, 10], strides = [1, 1]} : vector<4x30xf32> to vector<4x10xf32>
    %338 = vector.extract_strided_slice %328 {offsets = [0, 30], sizes = [4, 10], strides = [1, 1]} : vector<4x40xf32> to vector<4x10xf32>
    %339 = math.tanh %338 : vector<4x10xf32>
    %340 = arith.mulf %336, %317 : vector<4x10xf32>
    %341 = arith.mulf %335, %339 : vector<4x10xf32>
    %342 = arith.addf %340, %341 : vector<4x10xf32>
    %343 = math.tanh %342 : vector<4x10xf32>
    %344 = arith.mulf %337, %343 : vector<4x10xf32>
    %345 = tpu.concatenate %344, %344 in 1 : vector<4x10xf32>, vector<4x10xf32> -> vector<4x20xf32>
    %cst_70 = arith.constant 0.000000e+00 : f32
    %346 = vector.broadcast %cst_70 : f32 to vector<4x20xf32>
    %347 = arith.select %96, %345, %346 : vector<4x20xi1>, vector<4x20xf32>
    %c0_71 = arith.constant 0 : index
    %c180 = arith.constant 180 : index
    %348 = vector.load %arg3[%c0_71, %c180] : memref<4x320xf32, #tpu.memory_space<vmem>>, vector<4x20xf32>
    tpu.vector_store %arg3[%c0_71, %c180], %347 {strides = array<i32>} : memref<4x320xf32, #tpu.memory_space<vmem>>, vector<4x20xf32>,
    %349 = vector.extract_strided_slice %81 {offsets = [20, 0], sizes = [2, 40], strides = [1, 1]} : vector<32x40xf32> to vector<2x40xf32>
    %350 = vector.extract_strided_slice %82 {offsets = [10, 0], sizes = [2, 40], strides = [1, 1]} : vector<32x40xf32> to vector<2x40xf32>
    %351 = tpu.concatenate %349, %350 in 0 : vector<2x40xf32>, vector<2x40xf32> -> vector<4x40xf32>
    %cst_72 = arith.constant dense<0.000000e+00> : vector<4x40xf32>
    %352 = tpu.matmul %347, %83, %cst_72 {dimension_numbers = #tpu.dot_dimension_numbers<[1], [0], [0], [1], [0, 0, 1, 1], [], []>} : vector<4x20xf32>, vector<20x40xf32>, vector<4x40xf32> -> vector<4x40xf32>
    %353 = arith.addf %351, %352 : vector<4x40xf32>
    %354 = vector.extract_strided_slice %353 {offsets = [0, 0], sizes = [4, 30], strides = [1, 1]} : vector<4x40xf32> to vector<4x30xf32>
    %355 = arith.negf %354 : vector<4x30xf32>
    %356 = math.exp %355 : vector<4x30xf32>
    %cst_73 = arith.constant 1.000000e+00 : f32
    %357 = vector.broadcast %cst_73 : f32 to vector<4x30xf32>
    %358 = arith.addf %357, %356 : vector<4x30xf32>
    %359 = arith.divf %357, %358 : vector<4x30xf32>
    %360 = vector.extract_strided_slice %359 {offsets = [0, 0], sizes = [4, 10], strides = [1, 1]} : vector<4x30xf32> to vector<4x10xf32>
    %361 = vector.extract_strided_slice %359 {offsets = [0, 10], sizes = [4, 10], strides = [1, 1]} : vector<4x30xf32> to vector<4x10xf32>
    %362 = vector.extract_strided_slice %359 {offsets = [0, 20], sizes = [4, 10], strides = [1, 1]} : vector<4x30xf32> to vector<4x10xf32>
    %363 = vector.extract_strided_slice %353 {offsets = [0, 30], sizes = [4, 10], strides = [1, 1]} : vector<4x40xf32> to vector<4x10xf32>
    %364 = math.tanh %363 : vector<4x10xf32>
    %365 = arith.mulf %361, %342 : vector<4x10xf32>
    %366 = arith.mulf %360, %364 : vector<4x10xf32>
    %367 = arith.addf %365, %366 : vector<4x10xf32>
    %368 = math.tanh %367 : vector<4x10xf32>
    %369 = arith.mulf %362, %368 : vector<4x10xf32>
    %370 = tpu.concatenate %369, %369 in 1 : vector<4x10xf32>, vector<4x10xf32> -> vector<4x20xf32>
    %cst_74 = arith.constant 0.000000e+00 : f32
    %371 = vector.broadcast %cst_74 : f32 to vector<4x20xf32>
    %372 = arith.select %96, %370, %371 : vector<4x20xi1>, vector<4x20xf32>
    %c0_75 = arith.constant 0 : index
    %c200 = arith.constant 200 : index
    %373 = vector.load %arg3[%c0_75, %c200] : memref<4x320xf32, #tpu.memory_space<vmem>>, vector<4x20xf32>
    tpu.vector_store %arg3[%c0_75, %c200], %372 {strides = array<i32>} : memref<4x320xf32, #tpu.memory_space<vmem>>, vector<4x20xf32>,
    %374 = vector.extract_strided_slice %81 {offsets = [22, 0], sizes = [2, 40], strides = [1, 1]} : vector<32x40xf32> to vector<2x40xf32>
    %375 = vector.extract_strided_slice %82 {offsets = [8, 0], sizes = [2, 40], strides = [1, 1]} : vector<32x40xf32> to vector<2x40xf32>
    %376 = tpu.concatenate %374, %375 in 0 : vector<2x40xf32>, vector<2x40xf32> -> vector<4x40xf32>
    %cst_76 = arith.constant dense<0.000000e+00> : vector<4x40xf32>
    %377 = tpu.matmul %372, %83, %cst_76 {dimension_numbers = #tpu.dot_dimension_numbers<[1], [0], [0], [1], [0, 0, 1, 1], [], []>} : vector<4x20xf32>, vector<20x40xf32>, vector<4x40xf32> -> vector<4x40xf32>
    %378 = arith.addf %376, %377 : vector<4x40xf32>
    %379 = vector.extract_strided_slice %378 {offsets = [0, 0], sizes = [4, 30], strides = [1, 1]} : vector<4x40xf32> to vector<4x30xf32>
    %380 = arith.negf %379 : vector<4x30xf32>
    %381 = math.exp %380 : vector<4x30xf32>
    %cst_77 = arith.constant 1.000000e+00 : f32
    %382 = vector.broadcast %cst_77 : f32 to vector<4x30xf32>
    %383 = arith.addf %382, %381 : vector<4x30xf32>
    %384 = arith.divf %382, %383 : vector<4x30xf32>
    %385 = vector.extract_strided_slice %384 {offsets = [0, 0], sizes = [4, 10], strides = [1, 1]} : vector<4x30xf32> to vector<4x10xf32>
    %386 = vector.extract_strided_slice %384 {offsets = [0, 10], sizes = [4, 10], strides = [1, 1]} : vector<4x30xf32> to vector<4x10xf32>
    %387 = vector.extract_strided_slice %384 {offsets = [0, 20], sizes = [4, 10], strides = [1, 1]} : vector<4x30xf32> to vector<4x10xf32>
    %388 = vector.extract_strided_slice %378 {offsets = [0, 30], sizes = [4, 10], strides = [1, 1]} : vector<4x40xf32> to vector<4x10xf32>
    %389 = math.tanh %388 : vector<4x10xf32>
    %390 = arith.mulf %386, %367 : vector<4x10xf32>
    %391 = arith.mulf %385, %389 : vector<4x10xf32>
    %392 = arith.addf %390, %391 : vector<4x10xf32>
    %393 = math.tanh %392 : vector<4x10xf32>
    %394 = arith.mulf %387, %393 : vector<4x10xf32>
    %395 = tpu.concatenate %394, %394 in 1 : vector<4x10xf32>, vector<4x10xf32> -> vector<4x20xf32>
    %cst_78 = arith.constant 0.000000e+00 : f32
    %396 = vector.broadcast %cst_78 : f32 to vector<4x20xf32>
    %397 = arith.select %96, %395, %396 : vector<4x20xi1>, vector<4x20xf32>
    %c0_79 = arith.constant 0 : index
    %c220 = arith.constant 220 : index
    %398 = vector.load %arg3[%c0_79, %c220] : memref<4x320xf32, #tpu.memory_space<vmem>>, vector<4x20xf32>
    tpu.vector_store %arg3[%c0_79, %c220], %397 {strides = array<i32>} : memref<4x320xf32, #tpu.memory_space<vmem>>, vector<4x20xf32>,
    %399 = vector.extract_strided_slice %81 {offsets = [24, 0], sizes = [2, 40], strides = [1, 1]} : vector<32x40xf32> to vector<2x40xf32>
    %400 = vector.extract_strided_slice %82 {offsets = [6, 0], sizes = [2, 40], strides = [1, 1]} : vector<32x40xf32> to vector<2x40xf32>
    %401 = tpu.concatenate %399, %400 in 0 : vector<2x40xf32>, vector<2x40xf32> -> vector<4x40xf32>
    %cst_80 = arith.constant dense<0.000000e+00> : vector<4x40xf32>
    %402 = tpu.matmul %397, %83, %cst_80 {dimension_numbers = #tpu.dot_dimension_numbers<[1], [0], [0], [1], [0, 0, 1, 1], [], []>} : vector<4x20xf32>, vector<20x40xf32>, vector<4x40xf32> -> vector<4x40xf32>
    %403 = arith.addf %401, %402 : vector<4x40xf32>
    %404 = vector.extract_strided_slice %403 {offsets = [0, 0], sizes = [4, 30], strides = [1, 1]} : vector<4x40xf32> to vector<4x30xf32>
    %405 = arith.negf %404 : vector<4x30xf32>
    %406 = math.exp %405 : vector<4x30xf32>
    %cst_81 = arith.constant 1.000000e+00 : f32
    %407 = vector.broadcast %cst_81 : f32 to vector<4x30xf32>
    %408 = arith.addf %407, %406 : vector<4x30xf32>
    %409 = arith.divf %407, %408 : vector<4x30xf32>
    %410 = vector.extract_strided_slice %409 {offsets = [0, 0], sizes = [4, 10], strides = [1, 1]} : vector<4x30xf32> to vector<4x10xf32>
    %411 = vector.extract_strided_slice %409 {offsets = [0, 10], sizes = [4, 10], strides = [1, 1]} : vector<4x30xf32> to vector<4x10xf32>
    %412 = vector.extract_strided_slice %409 {offsets = [0, 20], sizes = [4, 10], strides = [1, 1]} : vector<4x30xf32> to vector<4x10xf32>
    %413 = vector.extract_strided_slice %403 {offsets = [0, 30], sizes = [4, 10], strides = [1, 1]} : vector<4x40xf32> to vector<4x10xf32>
    %414 = math.tanh %413 : vector<4x10xf32>
    %415 = arith.mulf %411, %392 : vector<4x10xf32>
    %416 = arith.mulf %410, %414 : vector<4x10xf32>
    %417 = arith.addf %415, %416 : vector<4x10xf32>
    %418 = math.tanh %417 : vector<4x10xf32>
    %419 = arith.mulf %412, %418 : vector<4x10xf32>
    %420 = tpu.concatenate %419, %419 in 1 : vector<4x10xf32>, vector<4x10xf32> -> vector<4x20xf32>
    %cst_82 = arith.constant 0.000000e+00 : f32
    %421 = vector.broadcast %cst_82 : f32 to vector<4x20xf32>
    %422 = arith.select %96, %420, %421 : vector<4x20xi1>, vector<4x20xf32>
    %c0_83 = arith.constant 0 : index
    %c240 = arith.constant 240 : index
    %423 = vector.load %arg3[%c0_83, %c240] : memref<4x320xf32, #tpu.memory_space<vmem>>, vector<4x20xf32>
    tpu.vector_store %arg3[%c0_83, %c240], %422 {strides = array<i32>} : memref<4x320xf32, #tpu.memory_space<vmem>>, vector<4x20xf32>,
    %424 = vector.extract_strided_slice %81 {offsets = [26, 0], sizes = [2, 40], strides = [1, 1]} : vector<32x40xf32> to vector<2x40xf32>
    %425 = vector.extract_strided_slice %82 {offsets = [4, 0], sizes = [2, 40], strides = [1, 1]} : vector<32x40xf32> to vector<2x40xf32>
    %426 = tpu.concatenate %424, %425 in 0 : vector<2x40xf32>, vector<2x40xf32> -> vector<4x40xf32>
    %cst_84 = arith.constant dense<0.000000e+00> : vector<4x40xf32>
    %427 = tpu.matmul %422, %83, %cst_84 {dimension_numbers = #tpu.dot_dimension_numbers<[1], [0], [0], [1], [0, 0, 1, 1], [], []>} : vector<4x20xf32>, vector<20x40xf32>, vector<4x40xf32> -> vector<4x40xf32>
    %428 = arith.addf %426, %427 : vector<4x40xf32>
    %429 = vector.extract_strided_slice %428 {offsets = [0, 0], sizes = [4, 30], strides = [1, 1]} : vector<4x40xf32> to vector<4x30xf32>
    %430 = arith.negf %429 : vector<4x30xf32>
    %431 = math.exp %430 : vector<4x30xf32>
    %cst_85 = arith.constant 1.000000e+00 : f32
    %432 = vector.broadcast %cst_85 : f32 to vector<4x30xf32>
    %433 = arith.addf %432, %431 : vector<4x30xf32>
    %434 = arith.divf %432, %433 : vector<4x30xf32>
    %435 = vector.extract_strided_slice %434 {offsets = [0, 0], sizes = [4, 10], strides = [1, 1]} : vector<4x30xf32> to vector<4x10xf32>
    %436 = vector.extract_strided_slice %434 {offsets = [0, 10], sizes = [4, 10], strides = [1, 1]} : vector<4x30xf32> to vector<4x10xf32>
    %437 = vector.extract_strided_slice %434 {offsets = [0, 20], sizes = [4, 10], strides = [1, 1]} : vector<4x30xf32> to vector<4x10xf32>
    %438 = vector.extract_strided_slice %428 {offsets = [0, 30], sizes = [4, 10], strides = [1, 1]} : vector<4x40xf32> to vector<4x10xf32>
    %439 = math.tanh %438 : vector<4x10xf32>
    %440 = arith.mulf %436, %417 : vector<4x10xf32>
    %441 = arith.mulf %435, %439 : vector<4x10xf32>
    %442 = arith.addf %440, %441 : vector<4x10xf32>
    %443 = math.tanh %442 : vector<4x10xf32>
    %444 = arith.mulf %437, %443 : vector<4x10xf32>
    %445 = tpu.concatenate %444, %444 in 1 : vector<4x10xf32>, vector<4x10xf32> -> vector<4x20xf32>
    %cst_86 = arith.constant 0.000000e+00 : f32
    %446 = vector.broadcast %cst_86 : f32 to vector<4x20xf32>
    %447 = arith.select %96, %445, %446 : vector<4x20xi1>, vector<4x20xf32>
    %c0_87 = arith.constant 0 : index
    %c260 = arith.constant 260 : index
    %448 = vector.load %arg3[%c0_87, %c260] : memref<4x320xf32, #tpu.memory_space<vmem>>, vector<4x20xf32>
    tpu.vector_store %arg3[%c0_87, %c260], %447 {strides = array<i32>} : memref<4x320xf32, #tpu.memory_space<vmem>>, vector<4x20xf32>,
    %449 = vector.extract_strided_slice %81 {offsets = [28, 0], sizes = [2, 40], strides = [1, 1]} : vector<32x40xf32> to vector<2x40xf32>
    %450 = vector.extract_strided_slice %82 {offsets = [2, 0], sizes = [2, 40], strides = [1, 1]} : vector<32x40xf32> to vector<2x40xf32>
    %451 = tpu.concatenate %449, %450 in 0 : vector<2x40xf32>, vector<2x40xf32> -> vector<4x40xf32>
    %cst_88 = arith.constant dense<0.000000e+00> : vector<4x40xf32>
    %452 = tpu.matmul %447, %83, %cst_88 {dimension_numbers = #tpu.dot_dimension_numbers<[1], [0], [0], [1], [0, 0, 1, 1], [], []>} : vector<4x20xf32>, vector<20x40xf32>, vector<4x40xf32> -> vector<4x40xf32>
    %453 = arith.addf %451, %452 : vector<4x40xf32>
    %454 = vector.extract_strided_slice %453 {offsets = [0, 0], sizes = [4, 30], strides = [1, 1]} : vector<4x40xf32> to vector<4x30xf32>
    %455 = arith.negf %454 : vector<4x30xf32>
    %456 = math.exp %455 : vector<4x30xf32>
    %cst_89 = arith.constant 1.000000e+00 : f32
    %457 = vector.broadcast %cst_89 : f32 to vector<4x30xf32>
    %458 = arith.addf %457, %456 : vector<4x30xf32>
    %459 = arith.divf %457, %458 : vector<4x30xf32>
    %460 = vector.extract_strided_slice %459 {offsets = [0, 0], sizes = [4, 10], strides = [1, 1]} : vector<4x30xf32> to vector<4x10xf32>
    %461 = vector.extract_strided_slice %459 {offsets = [0, 10], sizes = [4, 10], strides = [1, 1]} : vector<4x30xf32> to vector<4x10xf32>
    %462 = vector.extract_strided_slice %459 {offsets = [0, 20], sizes = [4, 10], strides = [1, 1]} : vector<4x30xf32> to vector<4x10xf32>
    %463 = vector.extract_strided_slice %453 {offsets = [0, 30], sizes = [4, 10], strides = [1, 1]} : vector<4x40xf32> to vector<4x10xf32>
    %464 = math.tanh %463 : vector<4x10xf32>
    %465 = arith.mulf %461, %442 : vector<4x10xf32>
    %466 = arith.mulf %460, %464 : vector<4x10xf32>
    %467 = arith.addf %465, %466 : vector<4x10xf32>
    %468 = math.tanh %467 : vector<4x10xf32>
    %469 = arith.mulf %462, %468 : vector<4x10xf32>
    %470 = tpu.concatenate %469, %469 in 1 : vector<4x10xf32>, vector<4x10xf32> -> vector<4x20xf32>
    %cst_90 = arith.constant 0.000000e+00 : f32
    %471 = vector.broadcast %cst_90 : f32 to vector<4x20xf32>
    %472 = arith.select %96, %470, %471 : vector<4x20xi1>, vector<4x20xf32>
    %c0_91 = arith.constant 0 : index
    %c280 = arith.constant 280 : index
    %473 = vector.load %arg3[%c0_91, %c280] : memref<4x320xf32, #tpu.memory_space<vmem>>, vector<4x20xf32>
    tpu.vector_store %arg3[%c0_91, %c280], %472 {strides = array<i32>} : memref<4x320xf32, #tpu.memory_space<vmem>>, vector<4x20xf32>,
    %474 = vector.extract_strided_slice %81 {offsets = [30, 0], sizes = [2, 40], strides = [1, 1]} : vector<32x40xf32> to vector<2x40xf32>
    %475 = vector.extract_strided_slice %82 {offsets = [0, 0], sizes = [2, 40], strides = [1, 1]} : vector<32x40xf32> to vector<2x40xf32>
    %476 = tpu.concatenate %474, %475 in 0 : vector<2x40xf32>, vector<2x40xf32> -> vector<4x40xf32>
    %cst_92 = arith.constant dense<0.000000e+00> : vector<4x40xf32>
    %477 = tpu.matmul %472, %83, %cst_92 {dimension_numbers = #tpu.dot_dimension_numbers<[1], [0], [0], [1], [0, 0, 1, 1], [], []>} : vector<4x20xf32>, vector<20x40xf32>, vector<4x40xf32> -> vector<4x40xf32>
    %478 = arith.addf %476, %477 : vector<4x40xf32>
    %479 = vector.extract_strided_slice %478 {offsets = [0, 0], sizes = [4, 30], strides = [1, 1]} : vector<4x40xf32> to vector<4x30xf32>
    %480 = arith.negf %479 : vector<4x30xf32>
    %481 = math.exp %480 : vector<4x30xf32>
    %cst_93 = arith.constant 1.000000e+00 : f32
    %482 = vector.broadcast %cst_93 : f32 to vector<4x30xf32>
    %483 = arith.addf %482, %481 : vector<4x30xf32>
    %484 = arith.divf %482, %483 : vector<4x30xf32>
    %485 = vector.extract_strided_slice %484 {offsets = [0, 0], sizes = [4, 10], strides = [1, 1]} : vector<4x30xf32> to vector<4x10xf32>
    %486 = vector.extract_strided_slice %484 {offsets = [0, 10], sizes = [4, 10], strides = [1, 1]} : vector<4x30xf32> to vector<4x10xf32>
    %487 = vector.extract_strided_slice %484 {offsets = [0, 20], sizes = [4, 10], strides = [1, 1]} : vector<4x30xf32> to vector<4x10xf32>
    %488 = vector.extract_strided_slice %478 {offsets = [0, 30], sizes = [4, 10], strides = [1, 1]} : vector<4x40xf32> to vector<4x10xf32>
    %489 = math.tanh %488 : vector<4x10xf32>
    %490 = arith.mulf %486, %467 : vector<4x10xf32>
    %491 = arith.mulf %485, %489 : vector<4x10xf32>
    %492 = arith.addf %490, %491 : vector<4x10xf32>
    %493 = math.tanh %492 : vector<4x10xf32>
    %494 = arith.mulf %487, %493 : vector<4x10xf32>
    %495 = tpu.concatenate %494, %494 in 1 : vector<4x10xf32>, vector<4x10xf32> -> vector<4x20xf32>
    %cst_94 = arith.constant 0.000000e+00 : f32
    %496 = vector.broadcast %cst_94 : f32 to vector<4x20xf32>
    %497 = arith.select %96, %495, %496 : vector<4x20xi1>, vector<4x20xf32>
    %c0_95 = arith.constant 0 : index
    %c300 = arith.constant 300 : index
    %498 = vector.load %arg3[%c0_95, %c300] : memref<4x320xf32, #tpu.memory_space<vmem>>, vector<4x20xf32>
    tpu.vector_store %arg3[%c0_95, %c300], %497 {strides = array<i32>} : memref<4x320xf32, #tpu.memory_space<vmem>>, vector<4x20xf32>,
    %c120_96 = arith.constant 120 : index
    %c0_97 = arith.constant 0 : index
    %499 = vector.load %arg1[%c120_96, %c0_97] : memref<440x80xf32, #tpu.memory_space<vmem>>, vector<320x10xf32>
    %c0_98 = arith.constant 0 : index
    %c0_99 = arith.constant 0 : index
    %500 = vector.load %arg3[%c0_98, %c0_99] : memref<4x320xf32, #tpu.memory_space<vmem>>, vector<4x320xf32>
    %cst_100 = arith.constant dense<0.000000e+00> : vector<4x10xf32>
    %501 = tpu.matmul %500, %499, %cst_100 {dimension_numbers = #tpu.dot_dimension_numbers<[1], [0], [0], [1], [0, 0, 1, 1], [], []>} : vector<4x320xf32>, vector<320x10xf32>, vector<4x10xf32> -> vector<4x10xf32>
    %502 = vector.extract_strided_slice %501 {offsets = [0, 0], sizes = [2, 10], strides = [1, 1]} : vector<4x10xf32> to vector<2x10xf32>
    %503 = vector.extract_strided_slice %501 {offsets = [2, 0], sizes = [2, 10], strides = [1, 1]} : vector<4x10xf32> to vector<2x10xf32>
    %504 = arith.addf %502, %503 : vector<2x10xf32>
    %cst_101 = arith.constant 0.000000e+00 : f32
    %505 = vector.broadcast %cst_101 : f32 to vector<2x10xf32>
    %506 = arith.maximumf %504, %505 : vector<2x10xf32>
    %c104 = arith.constant 104 : index
    %c0_102 = arith.constant 0 : index
    %507 = vector.load %arg1[%c104, %c0_102] : memref<440x80xf32, #tpu.memory_space<vmem>>, vector<10x1xf32>
    %cst_103 = arith.constant dense<0.000000e+00> : vector<2x1xf32>
    %508 = tpu.matmul %506, %507, %cst_103 {dimension_numbers = #tpu.dot_dimension_numbers<[1], [0], [0], [1], [0, 0, 1, 1], [], []>} : vector<2x10xf32>, vector<10x1xf32>, vector<2x1xf32> -> vector<2x1xf32>
    %c0_104 = arith.constant 0 : index
    %c0_105 = arith.constant 0 : index
    %509 = vector.load %arg2[%c0_104, %c0_105] : memref<2x1xf32, #tpu.memory_space<vmem>>, vector<2x1xf32>
    tpu.vector_store %arg2[%c0_104, %c0_105], %508 {strides = array<i32>} : memref<2x1xf32, #tpu.memory_space<vmem>>, vector<2x1xf32>,
    return
  }
}

</mosaic_0001>

<llo_original>
// kernel: tpu_custom_call.1
$region0: #{tpu_custom_call.1}
  #allocation0 [shape = 'u32[]', space=smem, size = 0x4, offset = 0x4, fixed_abs, tag = 'smem constant byte address 0x4 - core index']
  #allocation1 [shape = 'u32[144,128]{1,0:T(1,128)}', space=vmem, size = 0x12000, scoped, tag = 'internal scratch']
  #allocation2 [shape = 'f32[4,320]{1,0:T(4,128)}', space=vmem, size = 0x1800, scoped, tag = 'scratch operand']
  %s0 = inlined_call_operand.vmem [shape: f32[32,4], index: 0, kind: input, shape index: {}]
  %s1 = inlined_call_operand.vmem [shape: f32[440,80], index: 1, kind: input, shape index: {}]
  %s2 = inlined_call_operand.vmem [shape: f32[2,1], index: 2, kind: output, shape index: {}]
  %s3 = sld [smem:[#allocation0]]
  $region18: #{tpu_custom_call.1} parent=0
    _
  %s5 = ssub.s32 1, %s3
  %s6 = scalar_select 0, %s5, %s3
  // Predicated region
  $region2: #{tpu_custom_call.1} parent=0 // pred_check
    _
  $region3: #{tpu_custom_call.1} parent=0 // pred_check_branch
    %8 = sbr.rel (0) target = $region5
  $region4: #{tpu_custom_call.1} parent=0 // pred_region
    _
  $region5: #{tpu_custom_call.1} parent=0 // pred_fallthru
    _
  // Predicated region
  $region6: #{tpu_custom_call.1} parent=0 // pred_check
    _
  $region7: #{tpu_custom_call.1} parent=0 // pred_check_branch
    %10 = sbr.rel (0) target = $region9
  $region8: #{tpu_custom_call.1} parent=0 // pred_region
    _
  $region9: #{tpu_custom_call.1} parent=0 // pred_fallthru
    _
  %v11 = vlaneseq
  %v12 = vshrl.u32 %v11, 7
  %v13 = vadd.s32 %v12, 8
  %v14 = vadd.s32 %v12, 16
  %v15 = vadd.s32 %v12, 24
  %vm16 = vcmp.ge.s32.totalorder %v12, 2
  %vm17 = vcmp.ge.s32.totalorder %v13, 2
  %vm18 = vcmp.ge.s32.totalorder %v14, 2
  %vm19 = vcmp.ge.s32.totalorder %v15, 2
  %v20 = vsel %vm16, 1, 0
  %v21 = vsel %vm17, 1, 0
  %v22 = vsel %vm18, 1, 0
  %v23 = vsel %vm19, 1, 0
  %v24 = vcvt.s32.f32 %v20
  %v25 = vcvt.s32.f32 %v21
  %v26 = vcvt.s32.f32 %v22
  %v27 = vcvt.s32.f32 %v23
  %vm28 = vcmp.lt.s32.totalorder %v12, 30
  %vm29 = vcmp.lt.s32.totalorder %v13, 30
  %vm30 = vcmp.lt.s32.totalorder %v14, 30
  %vm31 = vcmp.lt.s32.totalorder %v15, 30
  %v32 = vsel %vm28, 1, 0
  %v33 = vsel %vm29, 1, 0
  %v34 = vsel %vm30, 1, 0
  %v35 = vsel %vm31, 1, 0
  %v36 = vcvt.s32.f32 %v32
  %v37 = vcvt.s32.f32 %v33
  %v38 = vcvt.s32.f32 %v34
  %v39 = vcvt.s32.f32 %v35
  %v40 = vld [vmem:[%s0] sm:$0xff]
  %v41 = vld [vmem:[%s0 + $0x8] sm:$0xff]
  %v42 = vld [vmem:[%s0 + $0x10] sm:$0xff]
  %v43 = vld [vmem:[%s0 + $0x18] sm:$0xff]
  %v44 = vld [vmem:[%s1] sm:$0xf]
  %v45 = vld [vmem:[%s1 + $0x60] sm:$0x1]
  %vm46 = vcmask 31744
  %v48 = vsel %vm46, %v40, 0
  %v51 = vsel %vm46, %v41, 0
  %v54 = vsel %vm46, %v42, 0
  %v57 = vsel %vm46, %v43, 0
  %vm59 = vcmask 1043456
  %v61 = vsel %vm59, %v44, 0
  %63 = vmatprep.subr.mxu0 0.0
  %64 = vmatpush1.msra.mxu0 0.0
  %65 = vmatprep.subr.mxu0 0.0
  %66 = vmatpush1.msra.mxu0 0.0
  %67 = vmatprep.subr.mxu0 0.0
  %68 = vmatpush1.msra.mxu0 0.0
  %69 = vmatprep.subr.mxu0 0.0
  %70 = vmatpush1.msra.mxu0 0.0
  %71 = vmatprep.subr.mxu0 0.0
  %72 = vmatpush1.msra.mxu0 0.0
  %73 = vmatprep.subr.mxu0 0.0
  %74 = vmatpush1.msra.mxu0 0.0
  %75 = vmatprep.subr.mxu0 0.0
  %76 = vmatpush1.msra.mxu0 0.0
  %77 = vmatprep.subr.mxu0 0.0
  %78 = vmatpush1.msra.mxu0 0.0
  %79 = vmatprep.subr.mxu0 0.0
  %80 = vmatpush1.msra.mxu0 0.0
  %81 = vmatprep.subr.mxu0 0.0
  %82 = vmatpush1.msra.mxu0 0.0
  %83 = vmatprep.subr.mxu0 0.0
  %84 = vmatpush1.msra.mxu0 0.0
  %85 = vmatprep.subr.mxu0 0.0
  %86 = vmatpush1.msra.mxu0 0.0
  %87 = vmatprep.subr.mxu0 0.0
  %88 = vmatpush1.msra.mxu0 0.0
  %89 = vmatprep.subr.mxu0 0.0
  %90 = vmatpush1.msra.mxu0 0.0
  %91 = vmatprep.subr.mxu0 0.0
  %92 = vmatpush1.msra.mxu0 0.0
  %93 = vmatprep.subr.mxu0 0.0
  %94 = vmatpush1.msra.mxu0 %v61
  %95 = vmatprep.subr.mxu0 0.0
  %96 = vmatpush2.msra.mxu0 0.0
  %97 = vmatprep.subr.mxu0 0.0
  %98 = vmatpush2.msra.mxu0 0.0
  %99 = vmatprep.subr.mxu0 0.0
  %100 = vmatpush2.msra.mxu0 0.0
  %101 = vmatprep.subr.mxu0 0.0
  %102 = vmatpush2.msra.mxu0 0.0
  %103 = vmatprep.subr.mxu0 0.0
  %104 = vmatpush2.msra.mxu0 0.0
  %105 = vmatprep.subr.mxu0 0.0
  %106 = vmatpush2.msra.mxu0 0.0
  %107 = vmatprep.subr.mxu0 0.0
  %108 = vmatpush2.msra.mxu0 0.0
  %109 = vmatprep.subr.mxu0 0.0
  %110 = vmatpush2.msra.mxu0 0.0
  %111 = vmatprep.subr.mxu0 0.0
  %112 = vmatpush2.msra.mxu0 0.0
  %113 = vmatprep.subr.mxu0 0.0
  %114 = vmatpush2.msra.mxu0 0.0
  %115 = vmatprep.subr.mxu0 0.0
  %116 = vmatpush2.msra.mxu0 0.0
  %117 = vmatprep.subr.mxu0 0.0
  %118 = vmatpush2.msra.mxu0 0.0
  %119 = vmatprep.subr.mxu0 0.0
  %120 = vmatpush2.msra.mxu0 0.0
  %121 = vmatprep.subr.mxu0 0.0
  %122 = vmatpush2.msra.mxu0 0.0
  %123 = vmatprep.subr.mxu0 0.0
  %124 = vmatpush2.msra.mxu0 0.0
  %125 = vmatprep.subr.mxu0 0.0
  %126 = vmatpush2.msra.mxu0 0.0
  %127 = vmatprep.mubr.f32.mxu0 0.0
  %128 = vmatmul.mubr.f32.gmra.mxu0 %v48
  %v129 = vpop.f32.mrf.mxu0
  %v130 = vadd.f32 0.0, %v129
  %v131 = vpop.f32.mrf.mxu0
  %132 = vmatprep.mubr.f32.mxu0 0.0
  %133 = vmatmul.mubr.f32.gmra.mxu0 %v51
  %v134 = vpop.f32.mrf.mxu0
  %v135 = vadd.f32 0.0, %v134
  %v136 = vpop.f32.mrf.mxu0
  %137 = vmatprep.mubr.f32.mxu0 0.0
  %138 = vmatmul.mubr.f32.gmra.mxu0 %v54
  %v139 = vpop.f32.mrf.mxu0
  %v140 = vadd.f32 0.0, %v139
  %v141 = vpop.f32.mrf.mxu0
  %142 = vmatprep.mubr.f32.mxu0 0.0
  %143 = vmatmul.mubr.f32.gmra.mxu0 %v57
  %v144 = vpop.f32.mrf.mxu0
  %v145 = vadd.f32 0.0, %v144
  %v146 = vpop.f32.mrf.mxu0
  %147 = vdwg.mxu0
  %v148 = vrot.slane %v130, 6
  %v149 = vrot.slane %v135, 6
  %v150 = vrot.slane %v140, 6
  %v151 = vrot.slane %v145, 6
  %vm152 = vcmp.lt.s32.totalorder %v12, 2
  %v153 = vsel %vm152, %v150, %v151
  %v154 = vsel %vm152, %v149, %v150
  %v155 = vsel %vm152, %v148, %v149
  %v156 = vsel %vm152, %v151, %v148
  %v157 = vmul.f32 %v156, %v24
  %v158 = vmul.f32 %v155, %v25
  %v159 = vmul.f32 %v154, %v26
  %v160 = vmul.f32 %v153, %v27
  %165 = vrot.lane.b32.xlu0 %v130, 112
  %v166 = vpop.permute.xlu0 %165
  %167 = vrot.lane.b32.xlu0 %v135, 112
  %v168 = vpop.permute.xlu0 %167
  %169 = vrot.lane.b32.xlu0 %v140, 112
  %v170 = vpop.permute.xlu0 %169
  %171 = vrot.lane.b32.xlu0 %v145, 112
  %v172 = vpop.permute.xlu0 %171
  %v177 = vrot.slane %v166, 2
  %v178 = vrot.slane %v168, 2
  %v179 = vrot.slane %v170, 2
  %v180 = vrot.slane %v172, 2
  %vm181 = vcmp.lt.s32.totalorder %v12, 6
  %v182 = vsel %vm181, %v179, %v180
  %v183 = vsel %vm181, %v178, %v179
  %v184 = vsel %vm181, %v177, %v178
  %v185 = vsel %vm181, %v180, %v177
  %v186 = vmul.f32 %v184, %v36
  %v187 = vmul.f32 %v183, %v37
  %v188 = vmul.f32 %v182, %v38
  %v189 = vmul.f32 %v185, %v39
  %v190 = vadd.f32 %v157, %v166
  %v191 = vadd.f32 %v158, %v168
  %v192 = vadd.f32 %v159, %v170
  %v193 = vadd.f32 %v160, %v172
  %v194 = vlaneseq
  %v195 = vshrl.u32 %v194, 7
  %v196 = vsub.s32 0, %v195
  %v197 = vrot.slane %v45, %v196
  %v198 = vadd.f32 %v190, %v197
  %v199 = vadd.f32 %v191, %v197
  %v200 = vadd.f32 %v192, %v197
  %v201 = vadd.f32 %v193, %v197
  %v202 = vmax.f32 %v198, 0.0
  %v203 = vmax.f32 %v199, 0.0
  %v204 = vmax.f32 %v200, 0.0
  %v205 = vmax.f32 %v201, 0.0
  %v206 = vadd.f32 %v130, %v186
  %v207 = vadd.f32 %v135, %v187
  %v208 = vadd.f32 %v140, %v188
  %v209 = vadd.f32 %v145, %v189
  %v210 = vadd.f32 %v206, %v197
  %v211 = vadd.f32 %v207, %v197
  %v212 = vadd.f32 %v208, %v197
  %v213 = vadd.f32 %v209, %v197
  %v214 = vmax.f32 %v210, 0.0
  %v215 = vmax.f32 %v211, 0.0
  %v216 = vmax.f32 %v212, 0.0
  %v217 = vmax.f32 %v213, 0.0
  %v218 = vmax.f32 %v202, %v214
  %v219 = vmax.f32 %v203, %v215
  %v220 = vmax.f32 %v204, %v216
  %v221 = vmax.f32 %v205, %v217
  %v222 = vld [vmem:[%s1 + $0x8] sm:$0xff]
  %v223 = vld [vmem:[%s1 + $0x10] sm:$0xff]
  %v224 = vld [vmem:[%s1 + $0x61] sm:$0x1]
  %vm225 = vcmask 130048
  %v227 = vsel %vm225, %v218, 0
  %v230 = vsel %vm225, %v219, 0
  %v233 = vsel %vm225, %v220, 0
  %v236 = vsel %vm225, %v221, 0
  %238 = vmatprep.subr.mxu0 0.0
  %239 = vmatpush1.msra.mxu0 0.0
  %240 = vmatprep.subr.mxu0 0.0
  %241 = vmatpush1.msra.mxu0 0.0
  %242 = vmatprep.subr.mxu0 0.0
  %243 = vmatpush1.msra.mxu0 0.0
  %244 = vmatprep.subr.mxu0 0.0
  %245 = vmatpush1.msra.mxu0 0.0
  %246 = vmatprep.subr.mxu0 0.0
  %247 = vmatpush1.msra.mxu0 0.0
  %248 = vmatprep.subr.mxu0 0.0
  %249 = vmatpush1.msra.mxu0 0.0
  %250 = vmatprep.subr.mxu0 0.0
  %251 = vmatpush1.msra.mxu0 0.0
  %252 = vmatprep.subr.mxu0 0.0
  %253 = vmatpush1.msra.mxu0 0.0
  %254 = vmatprep.subr.mxu0 0.0
  %255 = vmatpush1.msra.mxu0 0.0
  %256 = vmatprep.subr.mxu0 0.0
  %257 = vmatpush1.msra.mxu0 0.0
  %258 = vmatprep.subr.mxu0 0.0
  %259 = vmatpush1.msra.mxu0 0.0
  %260 = vmatprep.subr.mxu0 0.0
  %261 = vmatpush1.msra.mxu0 0.0
  %262 = vmatprep.subr.mxu0 0.0
  %263 = vmatpush1.msra.mxu0 0.0
  %264 = vmatprep.subr.mxu0 0.0
  %265 = vmatpush1.msra.mxu0 0.0
  %266 = vmatprep.subr.mxu0 0.0
  %267 = vmatpush1.msra.mxu0 %v223
  %268 = vmatprep.subr.mxu0 0.0
  %269 = vmatpush1.msra.mxu0 %v222
  %270 = vmatprep.subr.mxu0 0.0
  %271 = vmatpush2.msra.mxu0 0.0
  %272 = vmatprep.subr.mxu0 0.0
  %273 = vmatpush2.msra.mxu0 0.0
  %274 = vmatprep.subr.mxu0 0.0
  %275 = vmatpush2.msra.mxu0 0.0
  %276 = vmatprep.subr.mxu0 0.0
  %277 = vmatpush2.msra.mxu0 0.0
  %278 = vmatprep.subr.mxu0 0.0
  %279 = vmatpush2.msra.mxu0 0.0
  %280 = vmatprep.subr.mxu0 0.0
  %281 = vmatpush2.msra.mxu0 0.0
  %282 = vmatprep.subr.mxu0 0.0
  %283 = vmatpush2.msra.mxu0 0.0
  %284 = vmatprep.subr.mxu0 0.0
  %285 = vmatpush2.msra.mxu0 0.0
  %286 = vmatprep.subr.mxu0 0.0
  %287 = vmatpush2.msra.mxu0 0.0
  %288 = vmatprep.subr.mxu0 0.0
  %289 = vmatpush2.msra.mxu0 0.0
  %290 = vmatprep.subr.mxu0 0.0
  %291 = vmatpush2.msra.mxu0 0.0
  %292 = vmatprep.subr.mxu0 0.0
  %293 = vmatpush2.msra.mxu0 0.0
  %294 = vmatprep.subr.mxu0 0.0
  %295 = vmatpush2.msra.mxu0 0.0
  %296 = vmatprep.subr.mxu0 0.0
  %297 = vmatpush2.msra.mxu0 0.0
  %298 = vmatprep.subr.mxu0 0.0
  %299 = vmatpush2.msra.mxu0 0.0
  %300 = vmatprep.subr.mxu0 0.0
  %301 = vmatpush2.msra.mxu0 0.0
  %302 = vmatprep.mubr.f32.mxu0 0.0
  %303 = vmatmul.mubr.f32.gmra.mxu0 %v227
  %v304 = vpop.f32.mrf.mxu0
  %v305 = vadd.f32 0.0, %v304
  %v306 = vpop.f32.mrf.mxu0
  %307 = vmatprep.mubr.f32.mxu0 0.0
  %308 = vmatmul.mubr.f32.gmra.mxu0 %v230
  %v309 = vpop.f32.mrf.mxu0
  %v310 = vadd.f32 0.0, %v309
  %v311 = vpop.f32.mrf.mxu0
  %312 = vmatprep.mubr.f32.mxu0 0.0
  %313 = vmatmul.mubr.f32.gmra.mxu0 %v233
  %v314 = vpop.f32.mrf.mxu0
  %v315 = vadd.f32 0.0, %v314
  %v316 = vpop.f32.mrf.mxu0
  %317 = vmatprep.mubr.f32.mxu0 0.0
  %318 = vmatmul.mubr.f32.gmra.mxu0 %v236
  %v319 = vpop.f32.mrf.mxu0
  %v320 = vadd.f32 0.0, %v319
  %v321 = vpop.f32.mrf.mxu0
  %322 = vdwg.mxu0
  %v323 = vrot.slane %v305, 6
  %v324 = vrot.slane %v310, 6
  %v325 = vrot.slane %v315, 6
  %v326 = vrot.slane %v320, 6
  %v327 = vsel %vm152, %v325, %v326
  %v328 = vsel %vm152, %v324, %v325
  %v329 = vsel %vm152, %v323, %v324
  %v330 = vsel %vm152, %v326, %v323
  %v331 = vmul.f32 %v330, %v24
  %v332 = vmul.f32 %v329, %v25
  %v333 = vmul.f32 %v328, %v26
  %v334 = vmul.f32 %v327, %v27
  %339 = vrot.lane.b32.xlu0 %v305, 96
  %v340 = vpop.permute.xlu0 %339
  %341 = vrot.lane.b32.xlu0 %v310, 96
  %v342 = vpop.permute.xlu0 %341
  %343 = vrot.lane.b32.xlu0 %v315, 96
  %v344 = vpop.permute.xlu0 %343
  %345 = vrot.lane.b32.xlu0 %v320, 96
  %v346 = vpop.permute.xlu0 %345
  %v351 = vrot.slane %v340, 2
  %v352 = vrot.slane %v342, 2
  %v353 = vrot.slane %v344, 2
  %v354 = vrot.slane %v346, 2
  %v355 = vsel %vm181, %v353, %v354
  %v356 = vsel %vm181, %v352, %v353
  %v357 = vsel %vm181, %v351, %v352
  %v358 = vsel %vm181, %v354, %v351
  %v359 = vmul.f32 %v357, %v36
  %v360 = vmul.f32 %v356, %v37
  %v361 = vmul.f32 %v355, %v38
  %v362 = vmul.f32 %v358, %v39
  %v363 = vadd.f32 %v331, %v340
  %v364 = vadd.f32 %v332, %v342
  %v365 = vadd.f32 %v333, %v344
  %v366 = vadd.f32 %v334, %v346
  %v367 = vlaneseq
  %v368 = vshrl.u32 %v367, 7
  %v369 = vsub.s32 0, %v368
  %v370 = vrot.slane %v224, %v369
  %v371 = vadd.f32 %v363, %v370
  %v372 = vadd.f32 %v364, %v370
  %v373 = vadd.f32 %v365, %v370
  %v374 = vadd.f32 %v366, %v370
  %v375 = vmax.f32 %v371, 0.0
  %v376 = vmax.f32 %v372, 0.0
  %v377 = vmax.f32 %v373, 0.0
  %v378 = vmax.f32 %v374, 0.0
  %v379 = vadd.f32 %v305, %v359
  %v380 = vadd.f32 %v310, %v360
  %v381 = vadd.f32 %v315, %v361
  %v382 = vadd.f32 %v320, %v362
  %v383 = vadd.f32 %v379, %v370
  %v384 = vadd.f32 %v380, %v370
  %v385 = vadd.f32 %v381, %v370
  %v386 = vadd.f32 %v382, %v370
  %v387 = vmax.f32 %v383, 0.0
  %v388 = vmax.f32 %v384, 0.0
  %v389 = vmax.f32 %v385, 0.0
  %v390 = vmax.f32 %v386, 0.0
  %v391 = vmax.f32 %v375, %v387
  %v392 = vmax.f32 %v376, %v388
  %v393 = vmax.f32 %v377, %v389
  %v394 = vmax.f32 %v378, %v390
  %v395 = vld [vmem:[%s1 + $0x18] sm:$0xff]
  %v396 = vld [vmem:[%s1 + $0x20] sm:$0xff]
  %v397 = vld [vmem:[%s1 + $0x28] sm:$0xff]
  %v398 = vld [vmem:[%s1 + $0x30] sm:$0xff]
  %v399 = vld [vmem:[%s1 + $0x62] sm:$0x1]
  %vm400 = vcmask 261120
  %v402 = vsel %vm400, %v391, 0
  %v405 = vsel %vm400, %v392, 0
  %v408 = vsel %vm400, %v393, 0
  %v411 = vsel %vm400, %v394, 0
  %413 = vmatprep.subr.mxu0 0.0
  %414 = vmatpush1.msra.mxu0 0.0
  %415 = vmatprep.subr.mxu0 0.0
  %416 = vmatpush1.msra.mxu0 0.0
  %417 = vmatprep.subr.mxu0 0.0
  %418 = vmatpush1.msra.mxu0 0.0
  %419 = vmatprep.subr.mxu0 0.0
  %420 = vmatpush1.msra.mxu0 0.0
  %421 = vmatprep.subr.mxu0 0.0
  %422 = vmatpush1.msra.mxu0 0.0
  %423 = vmatprep.subr.mxu0 0.0
  %424 = vmatpush1.msra.mxu0 0.0
  %425 = vmatprep.subr.mxu0 0.0
  %426 = vmatpush1.msra.mxu0 0.0
  %427 = vmatprep.subr.mxu0 0.0
  %428 = vmatpush1.msra.mxu0 0.0
  %429 = vmatprep.subr.mxu0 0.0
  %430 = vmatpush1.msra.mxu0 0.0
  %431 = vmatprep.subr.mxu0 0.0
  %432 = vmatpush1.msra.mxu0 0.0
  %433 = vmatprep.subr.mxu0 0.0
  %434 = vmatpush1.msra.mxu0 0.0
  %435 = vmatprep.subr.mxu0 0.0
  %436 = vmatpush1.msra.mxu0 0.0
  %437 = vmatprep.subr.mxu0 0.0
  %438 = vmatpush1.msra.mxu0 %v398
  %439 = vmatprep.subr.mxu0 0.0
  %440 = vmatpush1.msra.mxu0 %v397
  %441 = vmatprep.subr.mxu0 0.0
  %442 = vmatpush1.msra.mxu0 %v396
  %443 = vmatprep.subr.mxu0 0.0
  %444 = vmatpush1.msra.mxu0 %v395
  %445 = vmatprep.subr.mxu0 0.0
  %446 = vmatpush2.msra.mxu0 0.0
  %447 = vmatprep.subr.mxu0 0.0
  %448 = vmatpush2.msra.mxu0 0.0
  %449 = vmatprep.subr.mxu0 0.0
  %450 = vmatpush2.msra.mxu0 0.0
  %451 = vmatprep.subr.mxu0 0.0
  %452 = vmatpush2.msra.mxu0 0.0
  %453 = vmatprep.subr.mxu0 0.0
  %454 = vmatpush2.msra.mxu0 0.0
  %455 = vmatprep.subr.mxu0 0.0
  %456 = vmatpush2.msra.mxu0 0.0
  %457 = vmatprep.subr.mxu0 0.0
  %458 = vmatpush2.msra.mxu0 0.0
  %459 = vmatprep.subr.mxu0 0.0
  %460 = vmatpush2.msra.mxu0 0.0
  %461 = vmatprep.subr.mxu0 0.0
  %462 = vmatpush2.msra.mxu0 0.0
  %463 = vmatprep.subr.mxu0 0.0
  %464 = vmatpush2.msra.mxu0 0.0
  %465 = vmatprep.subr.mxu0 0.0
  %466 = vmatpush2.msra.mxu0 0.0
  %467 = vmatprep.subr.mxu0 0.0
  %468 = vmatpush2.msra.mxu0 0.0
  %469 = vmatprep.subr.mxu0 0.0
  %470 = vmatpush2.msra.mxu0 0.0
  %471 = vmatprep.subr.mxu0 0.0
  %472 = vmatpush2.msra.mxu0 0.0
  %473 = vmatprep.subr.mxu0 0.0
  %474 = vmatpush2.msra.mxu0 0.0
  %475 = vmatprep.subr.mxu0 0.0
  %476 = vmatpush2.msra.mxu0 0.0
  %477 = vmatprep.mubr.f32.mxu0 0.0
  %478 = vmatmul.mubr.f32.gmra.mxu0 %v402
  %v479 = vpop.f32.mrf.mxu0
  %v480 = vadd.f32 0.0, %v479
  %v481 = vpop.f32.mrf.mxu0
  %482 = vmatprep.mubr.f32.mxu0 0.0
  %483 = vmatmul.mubr.f32.gmra.mxu0 %v405
  %v484 = vpop.f32.mrf.mxu0
  %v485 = vadd.f32 0.0, %v484
  %v486 = vpop.f32.mrf.mxu0
  %487 = vmatprep.mubr.f32.mxu0 0.0
  %488 = vmatmul.mubr.f32.gmra.mxu0 %v408
  %v489 = vpop.f32.mrf.mxu0
  %v490 = vadd.f32 0.0, %v489
  %v491 = vpop.f32.mrf.mxu0
  %492 = vmatprep.mubr.f32.mxu0 0.0
  %493 = vmatmul.mubr.f32.gmra.mxu0 %v411
  %v494 = vpop.f32.mrf.mxu0
  %v495 = vadd.f32 0.0, %v494
  %v496 = vpop.f32.mrf.mxu0
  %497 = vdwg.mxu0
  %v498 = vrot.slane %v480, 6
  %v499 = vrot.slane %v485, 6
  %v500 = vrot.slane %v490, 6
  %v501 = vrot.slane %v495, 6
  %v502 = vsel %vm152, %v500, %v501
  %v503 = vsel %vm152, %v499, %v500
  %v504 = vsel %vm152, %v498, %v499
  %v505 = vsel %vm152, %v501, %v498
  %v506 = vmul.f32 %v505, %v24
  %v507 = vmul.f32 %v504, %v25
  %v508 = vmul.f32 %v503, %v26
  %v509 = vmul.f32 %v502, %v27
  %514 = vrot.lane.b32.xlu0 %v480, 118
  %v515 = vpop.permute.xlu0 %514
  %516 = vrot.lane.b32.xlu0 %v485, 118
  %v517 = vpop.permute.xlu0 %516
  %518 = vrot.lane.b32.xlu0 %v490, 118
  %v519 = vpop.permute.xlu0 %518
  %520 = vrot.lane.b32.xlu0 %v495, 118
  %v521 = vpop.permute.xlu0 %520
  %v526 = vrot.slane %v515, 2
  %v527 = vrot.slane %v517, 2
  %v528 = vrot.slane %v519, 2
  %v529 = vrot.slane %v521, 2
  %v530 = vsel %vm181, %v528, %v529
  %v531 = vsel %vm181, %v527, %v528
  %v532 = vsel %vm181, %v526, %v527
  %v533 = vsel %vm181, %v529, %v526
  %v534 = vmul.f32 %v532, %v36
  %v535 = vmul.f32 %v531, %v37
  %v536 = vmul.f32 %v530, %v38
  %v537 = vmul.f32 %v533, %v39
  %v538 = vadd.f32 %v506, %v515
  %v539 = vadd.f32 %v507, %v517
  %v540 = vadd.f32 %v508, %v519
  %v541 = vadd.f32 %v509, %v521
  %v542 = vlaneseq
  %v543 = vshrl.u32 %v542, 7
  %v544 = vsub.s32 0, %v543
  %v545 = vrot.slane %v399, %v544
  %v546 = vadd.f32 %v538, %v545
  %v547 = vadd.f32 %v539, %v545
  %v548 = vadd.f32 %v540, %v545
  %v549 = vadd.f32 %v541, %v545
  %v550 = vmax.f32 %v546, 0.0
  %v551 = vmax.f32 %v547, 0.0
  %v552 = vmax.f32 %v548, 0.0
  %v553 = vmax.f32 %v549, 0.0
  %v554 = vadd.f32 %v480, %v534
  %v555 = vadd.f32 %v485, %v535
  %v556 = vadd.f32 %v490, %v536
  %v557 = vadd.f32 %v495, %v537
  %v558 = vadd.f32 %v554, %v545
  %v559 = vadd.f32 %v555, %v545
  %v560 = vadd.f32 %v556, %v545
  %v561 = vadd.f32 %v557, %v545
  %v562 = vmax.f32 %v558, 0.0
  %v563 = vmax.f32 %v559, 0.0
  %v564 = vmax.f32 %v560, 0.0
  %v565 = vmax.f32 %v561, 0.0
  %v566 = vmax.f32 %v550, %v562
  %v567 = vmax.f32 %v551, %v563
  %v568 = vmax.f32 %v552, %v564
  %v569 = vmax.f32 %v553, %v565
  %v570 = vld [vmem:[%s1 + $0x38] sm:$0xff]
  %v571 = vld [vmem:[%s1 + $0x40] sm:$0x3]
  %v572 = vld [vmem:[%s1 + $0x63] sm:$0x1]
  %v573 = vlaneseq
  %v574 = vshrl.u32 %v573, 7
  %v575 = vsub.s32 0, %v574
  %v576 = vrot.slane %v572, %v575
  %vm577 = vcmask 80896
  %v579 = vsel %vm577, %v566, 0
  %v582 = vsel %vm577, %v567, 0
  %v585 = vsel %vm577, %v568, 0
  %v588 = vsel %vm577, %v569, 0
  %vm590 = vcmask 1041408
  %v592 = vsel %vm590, %v571, 0
  %594 = vmatprep.subr.mxu0 0.0
  %595 = vmatpush1.msra.mxu0 0.0
  %596 = vmatprep.subr.mxu0 0.0
  %597 = vmatpush1.msra.mxu0 0.0
  %598 = vmatprep.subr.mxu0 0.0
  %599 = vmatpush1.msra.mxu0 0.0
  %600 = vmatprep.subr.mxu0 0.0
  %601 = vmatpush1.msra.mxu0 0.0
  %602 = vmatprep.subr.mxu0 0.0
  %603 = vmatpush1.msra.mxu0 0.0
  %604 = vmatprep.subr.mxu0 0.0
  %605 = vmatpush1.msra.mxu0 0.0
  %606 = vmatprep.subr.mxu0 0.0
  %607 = vmatpush1.msra.mxu0 0.0
  %608 = vmatprep.subr.mxu0 0.0
  %609 = vmatpush1.msra.mxu0 0.0
  %610 = vmatprep.subr.mxu0 0.0
  %611 = vmatpush1.msra.mxu0 0.0
  %612 = vmatprep.subr.mxu0 0.0
  %613 = vmatpush1.msra.mxu0 0.0
  %614 = vmatprep.subr.mxu0 0.0
  %615 = vmatpush1.msra.mxu0 0.0
  %616 = vmatprep.subr.mxu0 0.0
  %617 = vmatpush1.msra.mxu0 0.0
  %618 = vmatprep.subr.mxu0 0.0
  %619 = vmatpush1.msra.mxu0 0.0
  %620 = vmatprep.subr.mxu0 0.0
  %621 = vmatpush1.msra.mxu0 0.0
  %622 = vmatprep.subr.mxu0 0.0
  %623 = vmatpush1.msra.mxu0 %v592
  %624 = vmatprep.subr.mxu0 0.0
  %625 = vmatpush1.msra.mxu0 %v570
  %626 = vmatprep.subr.mxu0 0.0
  %627 = vmatpush2.msra.mxu0 0.0
  %628 = vmatprep.subr.mxu0 0.0
  %629 = vmatpush2.msra.mxu0 0.0
  %630 = vmatprep.subr.mxu0 0.0
  %631 = vmatpush2.msra.mxu0 0.0
  %632 = vmatprep.subr.mxu0 0.0
  %633 = vmatpush2.msra.mxu0 0.0
  %634 = vmatprep.subr.mxu0 0.0
  %635 = vmatpush2.msra.mxu0 0.0
  %636 = vmatprep.subr.mxu0 0.0
  %637 = vmatpush2.msra.mxu0 0.0
  %638 = vmatprep.subr.mxu0 0.0
  %639 = vmatpush2.msra.mxu0 0.0
  %640 = vmatprep.subr.mxu0 0.0
  %641 = vmatpush2.msra.mxu0 0.0
  %642 = vmatprep.subr.mxu0 0.0
  %643 = vmatpush2.msra.mxu0 0.0
  %644 = vmatprep.subr.mxu0 0.0
  %645 = vmatpush2.msra.mxu0 0.0
  %646 = vmatprep.subr.mxu0 0.0
  %647 = vmatpush2.msra.mxu0 0.0
  %648 = vmatprep.subr.mxu0 0.0
  %649 = vmatpush2.msra.mxu0 0.0
  %650 = vmatprep.subr.mxu0 0.0
  %651 = vmatpush2.msra.mxu0 0.0
  %652 = vmatprep.subr.mxu0 0.0
  %653 = vmatpush2.msra.mxu0 0.0
  %654 = vmatprep.subr.mxu0 0.0
  %655 = vmatpush2.msra.mxu0 0.0
  %656 = vmatprep.subr.mxu0 0.0
  %657 = vmatpush2.msra.mxu0 0.0
  %658 = vmatprep.mubr.f32.mxu0 0.0
  %659 = vmatmul.mubr.f32.gmra.mxu0 %v579
  %v660 = vpop.f32.mrf.mxu0
  %v661 = vadd.f32 %v576, %v660
  %v662 = vpop.f32.mrf.mxu0
  %663 = vmatprep.mubr.f32.mxu0 0.0
  %664 = vmatmul.mubr.f32.gmra.mxu0 %v582
  %v665 = vpop.f32.mrf.mxu0
  %v666 = vadd.f32 %v576, %v665
  %v667 = vpop.f32.mrf.mxu0
  %668 = vmatprep.mubr.f32.mxu0 0.0
  %669 = vmatmul.mubr.f32.gmra.mxu0 %v585
  %v670 = vpop.f32.mrf.mxu0
  %v671 = vadd.f32 %v576, %v670
  %v672 = vpop.f32.mrf.mxu0
  %673 = vmatprep.mubr.f32.mxu0 0.0
  %674 = vmatmul.mubr.f32.gmra.mxu0 %v588
  %v675 = vpop.f32.mrf.mxu0
  %v676 = vadd.f32 %v576, %v675
  %v677 = vpop.f32.mrf.mxu0
  %678 = vdwg.mxu0
  %v679 = vld [vmem:[%s1 + $0x48] sm:$0xff]
  %v680 = vld [vmem:[%s1 + $0x50] sm:$0xff]
  %v681 = vld [vmem:[%s1 + $0x58] sm:$0xf]
  %v682 = vlaneseq
  %v683 = vand.u32 %v682, 127
  %vm684 = vcmp.lt.s32.totalorder %v683, 10
  %vm685 = vmand %vm152, %vm684
  %vm686 = vcmp.ge.s32.totalorder %v683, 10
  %vm687 = vmand %vm16, %vm686
  %vm688 = vmor %vm685, %vm687
  %v690 = vrot.slane %v676, 4
  %691 = vrot.lane.b32.xlu0 %v690, 88
  %v692 = vpop.permute.xlu0 %691
  %v694 = vsel %vm590, %v661, %v692
  %vm695 = vcmask 162816
  %v697 = vsel %vm695, 0.0, 0
  %v700 = vsel %vm59, %v681, 0
  %702 = vmatprep.subr.mxu0 0.0
  %703 = vmatpush1.msra.mxu0 0.0
  %704 = vmatprep.subr.mxu0 0.0
  %705 = vmatpush1.msra.mxu0 0.0
  %706 = vmatprep.subr.mxu0 0.0
  %707 = vmatpush1.msra.mxu0 0.0
  %708 = vmatprep.subr.mxu0 0.0
  %709 = vmatpush1.msra.mxu0 0.0
  %710 = vmatprep.subr.mxu0 0.0
  %711 = vmatpush1.msra.mxu0 0.0
  %712 = vmatprep.subr.mxu0 0.0
  %713 = vmatpush1.msra.mxu0 0.0
  %714 = vmatprep.subr.mxu0 0.0
  %715 = vmatpush1.msra.mxu0 0.0
  %716 = vmatprep.subr.mxu0 0.0
  %717 = vmatpush1.msra.mxu0 0.0
  %718 = vmatprep.subr.mxu0 0.0
  %719 = vmatpush1.msra.mxu0 0.0
  %720 = vmatprep.subr.mxu0 0.0
  %721 = vmatpush1.msra.mxu0 0.0
  %722 = vmatprep.subr.mxu0 0.0
  %723 = vmatpush1.msra.mxu0 0.0
  %724 = vmatprep.subr.mxu0 0.0
  %725 = vmatpush1.msra.mxu0 0.0
  %726 = vmatprep.subr.mxu0 0.0
  %727 = vmatpush1.msra.mxu0 0.0
  %728 = vmatprep.subr.mxu0 0.0
  %729 = vmatpush1.msra.mxu0 %v700
  %730 = vmatprep.subr.mxu0 0.0
  %731 = vmatpush1.msra.mxu0 %v680
  %732 = vmatprep.subr.mxu0 0.0
  %733 = vmatpush1.msra.mxu0 %v679
  %734 = vmatprep.subr.mxu0 0.0
  %735 = vmatpush2.msra.mxu0 0.0
  %736 = vmatprep.subr.mxu0 0.0
  %737 = vmatpush2.msra.mxu0 0.0
  %738 = vmatprep.subr.mxu0 0.0
  %739 = vmatpush2.msra.mxu0 0.0
  %740 = vmatprep.subr.mxu0 0.0
  %741 = vmatpush2.msra.mxu0 0.0
  %742 = vmatprep.subr.mxu0 0.0
  %743 = vmatpush2.msra.mxu0 0.0
  %744 = vmatprep.subr.mxu0 0.0
  %745 = vmatpush2.msra.mxu0 0.0
  %746 = vmatprep.subr.mxu0 0.0
  %747 = vmatpush2.msra.mxu0 0.0
  %748 = vmatprep.subr.mxu0 0.0
  %749 = vmatpush2.msra.mxu0 0.0
  %750 = vmatprep.subr.mxu0 0.0
  %751 = vmatpush2.msra.mxu0 0.0
  %752 = vmatprep.subr.mxu0 0.0
  %753 = vmatpush2.msra.mxu0 0.0
  %754 = vmatprep.subr.mxu0 0.0
  %755 = vmatpush2.msra.mxu0 0.0
  %756 = vmatprep.subr.mxu0 0.0
  %757 = vmatpush2.msra.mxu0 0.0
  %758 = vmatprep.subr.mxu0 0.0
  %759 = vmatpush2.msra.mxu0 0.0
  %760 = vmatprep.subr.mxu0 0.0
  %761 = vmatpush2.msra.mxu0 0.0
  %762 = vmatprep.subr.mxu0 0.0
  %763 = vmatpush2.msra.mxu0 0.0
  %764 = vmatprep.subr.mxu0 0.0
  %765 = vmatpush2.msra.mxu0 0.0
  %766 = vmatprep.mubr.f32.mxu0 0.0
  %767 = vmatmul.mubr.f32.gmra.mxu0 %v697
  %v768 = vpop.f32.mrf.mxu0
  %v769 = vadd.f32 0.0, %v768
  %v770 = vpop.f32.mrf.mxu0
  %771 = vdwg.mxu0
  %v772 = vadd.f32 %v694, %v769
  %v773 = vxor.u32 %v772, 2147483648
  %v774 = vmul.f32 %v773, 1.442695
  %v775 = vpow.pop %v774
  %v776 = vadd.f32 %v775, 1.0
  %v777 = vrcp.pop %v776
  %v778 = vmul.f32 1.0, %v777
  %v779 = vtanh.pop %v772
  %v780 = vmul.f32 %v778, 0.0
  %782 = vrot.lane.b32.xlu0 %v779, 98
  %v783 = vpop.permute.xlu0 %782
  %v785 = vmul.f32 %v778, %v783
  %787 = vrot.lane.b32.xlu0 %v785, 10
  %v788 = vpop.permute.xlu0 %787
  %v790 = vadd.f32 %v780, %v788
  %v791 = vtanh.pop %v790
  %793 = vrot.lane.b32.xlu0 %v791, 10
  %v794 = vpop.permute.xlu0 %793
  %v796 = vmul.f32 %v778, %v794
  %798 = vrot.lane.b32.xlu0 %v796, 108
  %v799 = vpop.permute.xlu0 %798
  %801 = vrot.lane.b32.xlu0 %v796, 118
  %v802 = vpop.permute.xlu0 %801
  %v804 = vsel %vm577, %v799, %v802
  %v805 = vsel %vm688, %v804, 0.0
  %vm806 = vcmask 158720
  %807 = vst.msk [vmem:[#allocation2] sm:$0xf] %vm806, %v805
  %v809 = vrot.slane %v661, 2
  %v811 = vrot.slane %v676, 2
  %812 = vrot.lane.b32.xlu0 %v811, 88
  %v813 = vpop.permute.xlu0 %812
  %v815 = vsel %vm590, %v809, %v813
  %v817 = vsel %vm695, %v805, 0
  %819 = vmatprep.subr.mxu0 0.0
  %820 = vmatpush1.msra.mxu0 0.0
  %821 = vmatprep.subr.mxu0 0.0
  %822 = vmatpush1.msra.mxu0 0.0
  %823 = vmatprep.subr.mxu0 0.0
  %824 = vmatpush1.msra.mxu0 0.0
  %825 = vmatprep.subr.mxu0 0.0
  %826 = vmatpush1.msra.mxu0 0.0
  %827 = vmatprep.subr.mxu0 0.0
  %828 = vmatpush1.msra.mxu0 0.0
  %829 = vmatprep.subr.mxu0 0.0
  %830 = vmatpush1.msra.mxu0 0.0
  %831 = vmatprep.subr.mxu0 0.0
  %832 = vmatpush1.msra.mxu0 0.0
  %833 = vmatprep.subr.mxu0 0.0
  %834 = vmatpush1.msra.mxu0 0.0
  %835 = vmatprep.subr.mxu0 0.0
  %836 = vmatpush1.msra.mxu0 0.0
  %837 = vmatprep.subr.mxu0 0.0
  %838 = vmatpush1.msra.mxu0 0.0
  %839 = vmatprep.subr.mxu0 0.0
  %840 = vmatpush1.msra.mxu0 0.0
  %841 = vmatprep.subr.mxu0 0.0
  %842 = vmatpush1.msra.mxu0 0.0
  %843 = vmatprep.subr.mxu0 0.0
  %844 = vmatpush1.msra.mxu0 0.0
  %845 = vmatprep.subr.mxu0 0.0
  %846 = vmatpush1.msra.mxu0 %v700
  %847 = vmatprep.subr.mxu0 0.0
  %848 = vmatpush1.msra.mxu0 %v680
  %849 = vmatprep.subr.mxu0 0.0
  %850 = vmatpush1.msra.mxu0 %v679
  %851 = vmatprep.subr.mxu0 0.0
  %852 = vmatpush2.msra.mxu0 0.0
  %853 = vmatprep.subr.mxu0 0.0
  %854 = vmatpush2.msra.mxu0 0.0
  %855 = vmatprep.subr.mxu0 0.0
  %856 = vmatpush2.msra.mxu0 0.0
  %857 = vmatprep.subr.mxu0 0.0
  %858 = vmatpush2.msra.mxu0 0.0
  %859 = vmatprep.subr.mxu0 0.0
  %860 = vmatpush2.msra.mxu0 0.0
  %861 = vmatprep.subr.mxu0 0.0
  %862 = vmatpush2.msra.mxu0 0.0
  %863 = vmatprep.subr.mxu0 0.0
  %864 = vmatpush2.msra.mxu0 0.0
  %865 = vmatprep.subr.mxu0 0.0
  %866 = vmatpush2.msra.mxu0 0.0
  %867 = vmatprep.subr.mxu0 0.0
  %868 = vmatpush2.msra.mxu0 0.0
  %869 = vmatprep.subr.mxu0 0.0
  %870 = vmatpush2.msra.mxu0 0.0
  %871 = vmatprep.subr.mxu0 0.0
  %872 = vmatpush2.msra.mxu0 0.0
  %873 = vmatprep.subr.mxu0 0.0
  %874 = vmatpush2.msra.mxu0 0.0
  %875 = vmatprep.subr.mxu0 0.0
  %876 = vmatpush2.msra.mxu0 0.0
  %877 = vmatprep.subr.mxu0 0.0
  %878 = vmatpush2.msra.mxu0 0.0
  %879 = vmatprep.subr.mxu0 0.0
  %880 = vmatpush2.msra.mxu0 0.0
  %881 = vmatprep.subr.mxu0 0.0
  %882 = vmatpush2.msra.mxu0 0.0
  %883 = vmatprep.mubr.f32.mxu0 0.0
  %884 = vmatmul.mubr.f32.gmra.mxu0 %v817
  %v885 = vpop.f32.mrf.mxu0
  %v886 = vadd.f32 0.0, %v885
  %v887 = vpop.f32.mrf.mxu0
  %888 = vdwg.mxu0
  %v889 = vadd.f32 %v815, %v886
  %v890 = vxor.u32 %v889, 2147483648
  %v891 = vmul.f32 %v890, 1.442695
  %v892 = vpow.pop %v891
  %v893 = vadd.f32 %v892, 1.0
  %v894 = vrcp.pop %v893
  %v895 = vmul.f32 1.0, %v894
  %v896 = vtanh.pop %v889
  %v897 = vmul.f32 %v895, %v790
  %899 = vrot.lane.b32.xlu0 %v896, 98
  %v900 = vpop.permute.xlu0 %899
  %v902 = vmul.f32 %v895, %v900
  %904 = vrot.lane.b32.xlu0 %v902, 10
  %v905 = vpop.permute.xlu0 %904
  %v907 = vadd.f32 %v897, %v905
  %v908 = vtanh.pop %v907
  %910 = vrot.lane.b32.xlu0 %v908, 10
  %v911 = vpop.permute.xlu0 %910
  %v913 = vmul.f32 %v895, %v911
  %915 = vrot.lane.b32.xlu0 %v913, 108
  %v916 = vpop.permute.xlu0 %915
  %918 = vrot.lane.b32.xlu0 %v913, 118
  %v919 = vpop.permute.xlu0 %918
  %v921 = vsel %vm577, %v916, %v919
  %v922 = vsel %vm688, %v921, 0.0
  %924 = vrot.lane.b32.xlu0 %v922, 20
  %v925 = vpop.permute.xlu0 %924
  %vm927 = vcmask 322720
  %928 = vst.msk [vmem:[#allocation2] sm:$0xf] %vm927, %v925
  %v929 = vrot.slane %v661, 4
  %931 = vrot.lane.b32.xlu0 %v676, 88
  %v932 = vpop.permute.xlu0 %931
  %v934 = vsel %vm590, %v929, %v932
  %v935 = vsel %vm695, %v922, 0
  %937 = vmatprep.subr.mxu0 0.0
  %938 = vmatpush1.msra.mxu0 0.0
  %939 = vmatprep.subr.mxu0 0.0
  %940 = vmatpush1.msra.mxu0 0.0
  %941 = vmatprep.subr.mxu0 0.0
  %942 = vmatpush1.msra.mxu0 0.0
  %943 = vmatprep.subr.mxu0 0.0
  %944 = vmatpush1.msra.mxu0 0.0
  %945 = vmatprep.subr.mxu0 0.0
  %946 = vmatpush1.msra.mxu0 0.0
  %947 = vmatprep.subr.mxu0 0.0
  %948 = vmatpush1.msra.mxu0 0.0
  %949 = vmatprep.subr.mxu0 0.0
  %950 = vmatpush1.msra.mxu0 0.0
  %951 = vmatprep.subr.mxu0 0.0
  %952 = vmatpush1.msra.mxu0 0.0
  %953 = vmatprep.subr.mxu0 0.0
  %954 = vmatpush1.msra.mxu0 0.0
  %955 = vmatprep.subr.mxu0 0.0
  %956 = vmatpush1.msra.mxu0 0.0
  %957 = vmatprep.subr.mxu0 0.0
  %958 = vmatpush1.msra.mxu0 0.0
  %959 = vmatprep.subr.mxu0 0.0
  %960 = vmatpush1.msra.mxu0 0.0
  %961 = vmatprep.subr.mxu0 0.0
  %962 = vmatpush1.msra.mxu0 0.0
  %963 = vmatprep.subr.mxu0 0.0
  %964 = vmatpush1.msra.mxu0 %v700
  %965 = vmatprep.subr.mxu0 0.0
  %966 = vmatpush1.msra.mxu0 %v680
  %967 = vmatprep.subr.mxu0 0.0
  %968 = vmatpush1.msra.mxu0 %v679
  %969 = vmatprep.subr.mxu0 0.0
  %970 = vmatpush2.msra.mxu0 0.0
  %971 = vmatprep.subr.mxu0 0.0
  %972 = vmatpush2.msra.mxu0 0.0
  %973 = vmatprep.subr.mxu0 0.0
  %974 = vmatpush2.msra.mxu0 0.0
  %975 = vmatprep.subr.mxu0 0.0
  %976 = vmatpush2.msra.mxu0 0.0
  %977 = vmatprep.subr.mxu0 0.0
  %978 = vmatpush2.msra.mxu0 0.0
  %979 = vmatprep.subr.mxu0 0.0
  %980 = vmatpush2.msra.mxu0 0.0
  %981 = vmatprep.subr.mxu0 0.0
  %982 = vmatpush2.msra.mxu0 0.0
  %983 = vmatprep.subr.mxu0 0.0
  %984 = vmatpush2.msra.mxu0 0.0
  %985 = vmatprep.subr.mxu0 0.0
  %986 = vmatpush2.msra.mxu0 0.0
  %987 = vmatprep.subr.mxu0 0.0
  %988 = vmatpush2.msra.mxu0 0.0
  %989 = vmatprep.subr.mxu0 0.0
  %990 = vmatpush2.msra.mxu0 0.0
  %991 = vmatprep.subr.mxu0 0.0
  %992 = vmatpush2.msra.mxu0 0.0
  %993 = vmatprep.subr.mxu0 0.0
  %994 = vmatpush2.msra.mxu0 0.0
  %995 = vmatprep.subr.mxu0 0.0
  %996 = vmatpush2.msra.mxu0 0.0
  %997 = vmatprep.subr.mxu0 0.0
  %998 = vmatpush2.msra.mxu0 0.0
  %999 = vmatprep.subr.mxu0 0.0
  %1000 = vmatpush2.msra.mxu0 0.0
  %1001 = vmatprep.mubr.f32.mxu0 0.0
  %1002 = vmatmul.mubr.f32.gmra.mxu0 %v935
  %v1003 = vpop.f32.mrf.mxu0
  %v1004 = vadd.f32 0.0, %v1003
  %v1005 = vpop.f32.mrf.mxu0
  %1006 = vdwg.mxu0
  %v1007 = vadd.f32 %v934, %v1004
  %v1008 = vxor.u32 %v1007, 2147483648
  %v1009 = vmul.f32 %v1008, 1.442695
  %v1010 = vpow.pop %v1009
  %v1011 = vadd.f32 %v1010, 1.0
  %v1012 = vrcp.pop %v1011
  %v1013 = vmul.f32 1.0, %v1012
  %v1014 = vtanh.pop %v1007
  %v1015 = vmul.f32 %v1013, %v907
  %1017 = vrot.lane.b32.xlu0 %v1014, 98
  %v1018 = vpop.permute.xlu0 %1017
  %v1020 = vmul.f32 %v1013, %v1018
  %1022 = vrot.lane.b32.xlu0 %v1020, 10
  %v1023 = vpop.permute.xlu0 %1022
  %v1025 = vadd.f32 %v1015, %v1023
  %v1026 = vtanh.pop %v1025
  %1028 = vrot.lane.b32.xlu0 %v1026, 10
  %v1029 = vpop.permute.xlu0 %1028
  %v1031 = vmul.f32 %v1013, %v1029
  %1033 = vrot.lane.b32.xlu0 %v1031, 108
  %v1034 = vpop.permute.xlu0 %1033
  %1036 = vrot.lane.b32.xlu0 %v1031, 118
  %v1037 = vpop.permute.xlu0 %1036
  %v1039 = vsel %vm577, %v1034, %v1037
  %v1040 = vsel %vm688, %v1039, 0.0
  %1042 = vrot.lane.b32.xlu0 %v1040, 40
  %v1043 = vpop.permute.xlu0 %1042
  %vm1045 = vcmask 486720
  %1046 = vst.msk [vmem:[#allocation2] sm:$0xf] %vm1045, %v1043
  %v1047 = vrot.slane %v661, 6
  %v1049 = vrot.slane %v676, 6
  %1050 = vrot.lane.b32.xlu0 %v1049, 88
  %v1051 = vpop.permute.xlu0 %1050
  %v1053 = vsel %vm590, %v1047, %v1051
  %v1054 = vsel %vm695, %v1040, 0
  %1056 = vmatprep.subr.mxu0 0.0
  %1057 = vmatpush1.msra.mxu0 0.0
  %1058 = vmatprep.subr.mxu0 0.0
  %1059 = vmatpush1.msra.mxu0 0.0
  %1060 = vmatprep.subr.mxu0 0.0
  %1061 = vmatpush1.msra.mxu0 0.0
  %1062 = vmatprep.subr.mxu0 0.0
  %1063 = vmatpush1.msra.mxu0 0.0
  %1064 = vmatprep.subr.mxu0 0.0
  %1065 = vmatpush1.msra.mxu0 0.0
  %1066 = vmatprep.subr.mxu0 0.0
  %1067 = vmatpush1.msra.mxu0 0.0
  %1068 = vmatprep.subr.mxu0 0.0
  %1069 = vmatpush1.msra.mxu0 0.0
  %1070 = vmatprep.subr.mxu0 0.0
  %1071 = vmatpush1.msra.mxu0 0.0
  %1072 = vmatprep.subr.mxu0 0.0
  %1073 = vmatpush1.msra.mxu0 0.0
  %1074 = vmatprep.subr.mxu0 0.0
  %1075 = vmatpush1.msra.mxu0 0.0
  %1076 = vmatprep.subr.mxu0 0.0
  %1077 = vmatpush1.msra.mxu0 0.0
  %1078 = vmatprep.subr.mxu0 0.0
  %1079 = vmatpush1.msra.mxu0 0.0
  %1080 = vmatprep.subr.mxu0 0.0
  %1081 = vmatpush1.msra.mxu0 0.0
  %1082 = vmatprep.subr.mxu0 0.0
  %1083 = vmatpush1.msra.mxu0 %v700
  %1084 = vmatprep.subr.mxu0 0.0
  %1085 = vmatpush1.msra.mxu0 %v680
  %1086 = vmatprep.subr.mxu0 0.0
  %1087 = vmatpush1.msra.mxu0 %v679
  %1088 = vmatprep.subr.mxu0 0.0
  %1089 = vmatpush2.msra.mxu0 0.0
  %1090 = vmatprep.subr.mxu0 0.0
  %1091 = vmatpush2.msra.mxu0 0.0
  %1092 = vmatprep.subr.mxu0 0.0
  %1093 = vmatpush2.msra.mxu0 0.0
  %1094 = vmatprep.subr.mxu0 0.0
  %1095 = vmatpush2.msra.mxu0 0.0
  %1096 = vmatprep.subr.mxu0 0.0
  %1097 = vmatpush2.msra.mxu0 0.0
  %1098 = vmatprep.subr.mxu0 0.0
  %1099 = vmatpush2.msra.mxu0 0.0
  %1100 = vmatprep.subr.mxu0 0.0
  %1101 = vmatpush2.msra.mxu0 0.0
  %1102 = vmatprep.subr.mxu0 0.0
  %1103 = vmatpush2.msra.mxu0 0.0
  %1104 = vmatprep.subr.mxu0 0.0
  %1105 = vmatpush2.msra.mxu0 0.0
  %1106 = vmatprep.subr.mxu0 0.0
  %1107 = vmatpush2.msra.mxu0 0.0
  %1108 = vmatprep.subr.mxu0 0.0
  %1109 = vmatpush2.msra.mxu0 0.0
  %1110 = vmatprep.subr.mxu0 0.0
  %1111 = vmatpush2.msra.mxu0 0.0
  %1112 = vmatprep.subr.mxu0 0.0
  %1113 = vmatpush2.msra.mxu0 0.0
  %1114 = vmatprep.subr.mxu0 0.0
  %1115 = vmatpush2.msra.mxu0 0.0
  %1116 = vmatprep.subr.mxu0 0.0
  %1117 = vmatpush2.msra.mxu0 0.0
  %1118 = vmatprep.subr.mxu0 0.0
  %1119 = vmatpush2.msra.mxu0 0.0
  %1120 = vmatprep.mubr.f32.mxu0 0.0
  %1121 = vmatmul.mubr.f32.gmra.mxu0 %v1054
  %v1122 = vpop.f32.mrf.mxu0
  %v1123 = vadd.f32 0.0, %v1122
  %v1124 = vpop.f32.mrf.mxu0
  %1125 = vdwg.mxu0
  %v1126 = vadd.f32 %v1053, %v1123
  %v1127 = vxor.u32 %v1126, 2147483648
  %v1128 = vmul.f32 %v1127, 1.442695
  %v1129 = vpow.pop %v1128
  %v1130 = vadd.f32 %v1129, 1.0
  %v1131 = vrcp.pop %v1130
  %v1132 = vmul.f32 1.0, %v1131
  %v1133 = vtanh.pop %v1126
  %v1134 = vmul.f32 %v1132, %v1025
  %1136 = vrot.lane.b32.xlu0 %v1133, 98
  %v1137 = vpop.permute.xlu0 %1136
  %v1139 = vmul.f32 %v1132, %v1137
  %1141 = vrot.lane.b32.xlu0 %v1139, 10
  %v1142 = vpop.permute.xlu0 %1141
  %v1144 = vadd.f32 %v1134, %v1142
  %v1145 = vtanh.pop %v1144
  %1147 = vrot.lane.b32.xlu0 %v1145, 10
  %v1148 = vpop.permute.xlu0 %1147
  %v1150 = vmul.f32 %v1132, %v1148
  %1152 = vrot.lane.b32.xlu0 %v1150, 108
  %v1153 = vpop.permute.xlu0 %1152
  %1155 = vrot.lane.b32.xlu0 %v1150, 118
  %v1156 = vpop.permute.xlu0 %1155
  %v1158 = vsel %vm577, %v1153, %v1156
  %v1159 = vsel %vm688, %v1158, 0.0
  %1161 = vrot.lane.b32.xlu0 %v1159, 60
  %v1162 = vpop.permute.xlu0 %1161
  %vm1164 = vcmask 650720
  %1165 = vst.msk [vmem:[#allocation2] sm:$0xf] %vm1164, %v1162
  %v1167 = vrot.slane %v671, 4
  %1168 = vrot.lane.b32.xlu0 %v1167, 88
  %v1169 = vpop.permute.xlu0 %1168
  %v1171 = vsel %vm590, %v666, %v1169
  %v1172 = vsel %vm695, %v1159, 0
  %1174 = vmatprep.subr.mxu0 0.0
  %1175 = vmatpush1.msra.mxu0 0.0
  %1176 = vmatprep.subr.mxu0 0.0
  %1177 = vmatpush1.msra.mxu0 0.0
  %1178 = vmatprep.subr.mxu0 0.0
  %1179 = vmatpush1.msra.mxu0 0.0
  %1180 = vmatprep.subr.mxu0 0.0
  %1181 = vmatpush1.msra.mxu0 0.0
  %1182 = vmatprep.subr.mxu0 0.0
  %1183 = vmatpush1.msra.mxu0 0.0
  %1184 = vmatprep.subr.mxu0 0.0
  %1185 = vmatpush1.msra.mxu0 0.0
  %1186 = vmatprep.subr.mxu0 0.0
  %1187 = vmatpush1.msra.mxu0 0.0
  %1188 = vmatprep.subr.mxu0 0.0
  %1189 = vmatpush1.msra.mxu0 0.0
  %1190 = vmatprep.subr.mxu0 0.0
  %1191 = vmatpush1.msra.mxu0 0.0
  %1192 = vmatprep.subr.mxu0 0.0
  %1193 = vmatpush1.msra.mxu0 0.0
  %1194 = vmatprep.subr.mxu0 0.0
  %1195 = vmatpush1.msra.mxu0 0.0
  %1196 = vmatprep.subr.mxu0 0.0
  %1197 = vmatpush1.msra.mxu0 0.0
  %1198 = vmatprep.subr.mxu0 0.0
  %1199 = vmatpush1.msra.mxu0 0.0
  %1200 = vmatprep.subr.mxu0 0.0
  %1201 = vmatpush1.msra.mxu0 %v700
  %1202 = vmatprep.subr.mxu0 0.0
  %1203 = vmatpush1.msra.mxu0 %v680
  %1204 = vmatprep.subr.mxu0 0.0
  %1205 = vmatpush1.msra.mxu0 %v679
  %1206 = vmatprep.subr.mxu0 0.0
  %1207 = vmatpush2.msra.mxu0 0.0
  %1208 = vmatprep.subr.mxu0 0.0
  %1209 = vmatpush2.msra.mxu0 0.0
  %1210 = vmatprep.subr.mxu0 0.0
  %1211 = vmatpush2.msra.mxu0 0.0
  %1212 = vmatprep.subr.mxu0 0.0
  %1213 = vmatpush2.msra.mxu0 0.0
  %1214 = vmatprep.subr.mxu0 0.0
  %1215 = vmatpush2.msra.mxu0 0.0
  %1216 = vmatprep.subr.mxu0 0.0
  %1217 = vmatpush2.msra.mxu0 0.0
  %1218 = vmatprep.subr.mxu0 0.0
  %1219 = vmatpush2.msra.mxu0 0.0
  %1220 = vmatprep.subr.mxu0 0.0
  %1221 = vmatpush2.msra.mxu0 0.0
  %1222 = vmatprep.subr.mxu0 0.0
  %1223 = vmatpush2.msra.mxu0 0.0
  %1224 = vmatprep.subr.mxu0 0.0
  %1225 = vmatpush2.msra.mxu0 0.0
  %1226 = vmatprep.subr.mxu0 0.0
  %1227 = vmatpush2.msra.mxu0 0.0
  %1228 = vmatprep.subr.mxu0 0.0
  %1229 = vmatpush2.msra.mxu0 0.0
  %1230 = vmatprep.subr.mxu0 0.0
  %1231 = vmatpush2.msra.mxu0 0.0
  %1232 = vmatprep.subr.mxu0 0.0
  %1233 = vmatpush2.msra.mxu0 0.0
  %1234 = vmatprep.subr.mxu0 0.0
  %1235 = vmatpush2.msra.mxu0 0.0
  %1236 = vmatprep.subr.mxu0 0.0
  %1237 = vmatpush2.msra.mxu0 0.0
  %1238 = vmatprep.mubr.f32.mxu0 0.0
  %1239 = vmatmul.mubr.f32.gmra.mxu0 %v1172
  %v1240 = vpop.f32.mrf.mxu0
  %v1241 = vadd.f32 0.0, %v1240
  %v1242 = vpop.f32.mrf.mxu0
  %1243 = vdwg.mxu0
  %v1244 = vadd.f32 %v1171, %v1241
  %v1245 = vxor.u32 %v1244, 2147483648
  %v1246 = vmul.f32 %v1245, 1.442695
  %v1247 = vpow.pop %v1246
  %v1248 = vadd.f32 %v1247, 1.0
  %v1249 = vrcp.pop %v1248
  %v1250 = vmul.f32 1.0, %v1249
  %v1251 = vtanh.pop %v1244
  %v1252 = vmul.f32 %v1250, %v1144
  %1254 = vrot.lane.b32.xlu0 %v1251, 98
  %v1255 = vpop.permute.xlu0 %1254
  %v1257 = vmul.f32 %v1250, %v1255
  %1259 = vrot.lane.b32.xlu0 %v1257, 10
  %v1260 = vpop.permute.xlu0 %1259
  %v1262 = vadd.f32 %v1252, %v1260
  %v1263 = vtanh.pop %v1262
  %1265 = vrot.lane.b32.xlu0 %v1263, 10
  %v1266 = vpop.permute.xlu0 %1265
  %v1268 = vmul.f32 %v1250, %v1266
  %1270 = vrot.lane.b32.xlu0 %v1268, 108
  %v1271 = vpop.permute.xlu0 %1270
  %1273 = vrot.lane.b32.xlu0 %v1268, 118
  %v1274 = vpop.permute.xlu0 %1273
  %v1276 = vsel %vm577, %v1271, %v1274
  %v1277 = vsel %vm688, %v1276, 0.0
  %1279 = vrot.lane.b32.xlu0 %v1277, 80
  %v1280 = vpop.permute.xlu0 %1279
  %vm1282 = vcmask 814720
  %1283 = vst.msk [vmem:[#allocation2] sm:$0xf] %vm1282, %v1280
  %v1285 = vrot.slane %v666, 2
  %v1287 = vrot.slane %v671, 2
  %1288 = vrot.lane.b32.xlu0 %v1287, 88
  %v1289 = vpop.permute.xlu0 %1288
  %v1291 = vsel %vm590, %v1285, %v1289
  %v1292 = vsel %vm695, %v1277, 0
  %1294 = vmatprep.subr.mxu0 0.0
  %1295 = vmatpush1.msra.mxu0 0.0
  %1296 = vmatprep.subr.mxu0 0.0
  %1297 = vmatpush1.msra.mxu0 0.0
  %1298 = vmatprep.subr.mxu0 0.0
  %1299 = vmatpush1.msra.mxu0 0.0
  %1300 = vmatprep.subr.mxu0 0.0
  %1301 = vmatpush1.msra.mxu0 0.0
  %1302 = vmatprep.subr.mxu0 0.0
  %1303 = vmatpush1.msra.mxu0 0.0
  %1304 = vmatprep.subr.mxu0 0.0
  %1305 = vmatpush1.msra.mxu0 0.0
  %1306 = vmatprep.subr.mxu0 0.0
  %1307 = vmatpush1.msra.mxu0 0.0
  %1308 = vmatprep.subr.mxu0 0.0
  %1309 = vmatpush1.msra.mxu0 0.0
  %1310 = vmatprep.subr.mxu0 0.0
  %1311 = vmatpush1.msra.mxu0 0.0
  %1312 = vmatprep.subr.mxu0 0.0
  %1313 = vmatpush1.msra.mxu0 0.0
  %1314 = vmatprep.subr.mxu0 0.0
  %1315 = vmatpush1.msra.mxu0 0.0
  %1316 = vmatprep.subr.mxu0 0.0
  %1317 = vmatpush1.msra.mxu0 0.0
  %1318 = vmatprep.subr.mxu0 0.0
  %1319 = vmatpush1.msra.mxu0 0.0
  %1320 = vmatprep.subr.mxu0 0.0
  %1321 = vmatpush1.msra.mxu0 %v700
  %1322 = vmatprep.subr.mxu0 0.0
  %1323 = vmatpush1.msra.mxu0 %v680
  %1324 = vmatprep.subr.mxu0 0.0
  %1325 = vmatpush1.msra.mxu0 %v679
  %1326 = vmatprep.subr.mxu0 0.0
  %1327 = vmatpush2.msra.mxu0 0.0
  %1328 = vmatprep.subr.mxu0 0.0
  %1329 = vmatpush2.msra.mxu0 0.0
  %1330 = vmatprep.subr.mxu0 0.0
  %1331 = vmatpush2.msra.mxu0 0.0
  %1332 = vmatprep.subr.mxu0 0.0
  %1333 = vmatpush2.msra.mxu0 0.0
  %1334 = vmatprep.subr.mxu0 0.0
  %1335 = vmatpush2.msra.mxu0 0.0
  %1336 = vmatprep.subr.mxu0 0.0
  %1337 = vmatpush2.msra.mxu0 0.0
  %1338 = vmatprep.subr.mxu0 0.0
  %1339 = vmatpush2.msra.mxu0 0.0
  %1340 = vmatprep.subr.mxu0 0.0
  %1341 = vmatpush2.msra.mxu0 0.0
  %1342 = vmatprep.subr.mxu0 0.0
  %1343 = vmatpush2.msra.mxu0 0.0
  %1344 = vmatprep.subr.mxu0 0.0
  %1345 = vmatpush2.msra.mxu0 0.0
  %1346 = vmatprep.subr.mxu0 0.0
  %1347 = vmatpush2.msra.mxu0 0.0
  %1348 = vmatprep.subr.mxu0 0.0
  %1349 = vmatpush2.msra.mxu0 0.0
  %1350 = vmatprep.subr.mxu0 0.0
  %1351 = vmatpush2.msra.mxu0 0.0
  %1352 = vmatprep.subr.mxu0 0.0
  %1353 = vmatpush2.msra.mxu0 0.0
  %1354 = vmatprep.subr.mxu0 0.0
  %1355 = vmatpush2.msra.mxu0 0.0
  %1356 = vmatprep.subr.mxu0 0.0
  %1357 = vmatpush2.msra.mxu0 0.0
  %1358 = vmatprep.mubr.f32.mxu0 0.0
  %1359 = vmatmul.mubr.f32.gmra.mxu0 %v1292
  %v1360 = vpop.f32.mrf.mxu0
  %v1361 = vadd.f32 0.0, %v1360
  %v1362 = vpop.f32.mrf.mxu0
  %1363 = vdwg.mxu0
  %v1364 = vadd.f32 %v1291, %v1361
  %v1365 = vxor.u32 %v1364, 2147483648
  %v1366 = vmul.f32 %v1365, 1.442695
  %v1367 = vpow.pop %v1366
  %v1368 = vadd.f32 %v1367, 1.0
  %v1369 = vrcp.pop %v1368
  %v1370 = vmul.f32 1.0, %v1369
  %v1371 = vtanh.pop %v1364
  %v1372 = vmul.f32 %v1370, %v1262
  %1374 = vrot.lane.b32.xlu0 %v1371, 98
  %v1375 = vpop.permute.xlu0 %1374
  %v1377 = vmul.f32 %v1370, %v1375
  %1379 = vrot.lane.b32.xlu0 %v1377, 10
  %v1380 = vpop.permute.xlu0 %1379
  %v1382 = vadd.f32 %v1372, %v1380
  %v1383 = vtanh.pop %v1382
  %1385 = vrot.lane.b32.xlu0 %v1383, 10
  %v1386 = vpop.permute.xlu0 %1385
  %v1388 = vmul.f32 %v1370, %v1386
  %1390 = vrot.lane.b32.xlu0 %v1388, 108
  %v1391 = vpop.permute.xlu0 %1390
  %1393 = vrot.lane.b32.xlu0 %v1388, 118
  %v1394 = vpop.permute.xlu0 %1393
  %v1396 = vsel %vm577, %v1391, %v1394
  %v1397 = vsel %vm688, %v1396, 0.0
  %1399 = vrot.lane.b32.xlu0 %v1397, 100
  %v1400 = vpop.permute.xlu0 %1399
  %vm1402 = vcmask 978720
  %1403 = vst.msk [vmem:[#allocation2] sm:$0xf] %vm1402, %v1400
  %v1404 = vrot.slane %v666, 4
  %1406 = vrot.lane.b32.xlu0 %v671, 88
  %v1407 = vpop.permute.xlu0 %1406
  %v1409 = vsel %vm590, %v1404, %v1407
  %v1410 = vsel %vm695, %v1397, 0
  %1412 = vmatprep.subr.mxu0 0.0
  %1413 = vmatpush1.msra.mxu0 0.0
  %1414 = vmatprep.subr.mxu0 0.0
  %1415 = vmatpush1.msra.mxu0 0.0
  %1416 = vmatprep.subr.mxu0 0.0
  %1417 = vmatpush1.msra.mxu0 0.0
  %1418 = vmatprep.subr.mxu0 0.0
  %1419 = vmatpush1.msra.mxu0 0.0
  %1420 = vmatprep.subr.mxu0 0.0
  %1421 = vmatpush1.msra.mxu0 0.0
  %1422 = vmatprep.subr.mxu0 0.0
  %1423 = vmatpush1.msra.mxu0 0.0
  %1424 = vmatprep.subr.mxu0 0.0
  %1425 = vmatpush1.msra.mxu0 0.0
  %1426 = vmatprep.subr.mxu0 0.0
  %1427 = vmatpush1.msra.mxu0 0.0
  %1428 = vmatprep.subr.mxu0 0.0
  %1429 = vmatpush1.msra.mxu0 0.0
  %1430 = vmatprep.subr.mxu0 0.0
  %1431 = vmatpush1.msra.mxu0 0.0
  %1432 = vmatprep.subr.mxu0 0.0
  %1433 = vmatpush1.msra.mxu0 0.0
  %1434 = vmatprep.subr.mxu0 0.0
  %1435 = vmatpush1.msra.mxu0 0.0
  %1436 = vmatprep.subr.mxu0 0.0
  %1437 = vmatpush1.msra.mxu0 0.0
  %1438 = vmatprep.subr.mxu0 0.0
  %1439 = vmatpush1.msra.mxu0 %v700
  %1440 = vmatprep.subr.mxu0 0.0
  %1441 = vmatpush1.msra.mxu0 %v680
  %1442 = vmatprep.subr.mxu0 0.0
  %1443 = vmatpush1.msra.mxu0 %v679
  %1444 = vmatprep.subr.mxu0 0.0
  %1445 = vmatpush2.msra.mxu0 0.0
  %1446 = vmatprep.subr.mxu0 0.0
  %1447 = vmatpush2.msra.mxu0 0.0
  %1448 = vmatprep.subr.mxu0 0.0
  %1449 = vmatpush2.msra.mxu0 0.0
  %1450 = vmatprep.subr.mxu0 0.0
  %1451 = vmatpush2.msra.mxu0 0.0
  %1452 = vmatprep.subr.mxu0 0.0
  %1453 = vmatpush2.msra.mxu0 0.0
  %1454 = vmatprep.subr.mxu0 0.0
  %1455 = vmatpush2.msra.mxu0 0.0
  %1456 = vmatprep.subr.mxu0 0.0
  %1457 = vmatpush2.msra.mxu0 0.0
  %1458 = vmatprep.subr.mxu0 0.0
  %1459 = vmatpush2.msra.mxu0 0.0
  %1460 = vmatprep.subr.mxu0 0.0
  %1461 = vmatpush2.msra.mxu0 0.0
  %1462 = vmatprep.subr.mxu0 0.0
  %1463 = vmatpush2.msra.mxu0 0.0
  %1464 = vmatprep.subr.mxu0 0.0
  %1465 = vmatpush2.msra.mxu0 0.0
  %1466 = vmatprep.subr.mxu0 0.0
  %1467 = vmatpush2.msra.mxu0 0.0
  %1468 = vmatprep.subr.mxu0 0.0
  %1469 = vmatpush2.msra.mxu0 0.0
  %1470 = vmatprep.subr.mxu0 0.0
  %1471 = vmatpush2.msra.mxu0 0.0
  %1472 = vmatprep.subr.mxu0 0.0
  %1473 = vmatpush2.msra.mxu0 0.0
  %1474 = vmatprep.subr.mxu0 0.0
  %1475 = vmatpush2.msra.mxu0 0.0
  %1476 = vmatprep.mubr.f32.mxu0 0.0
  %1477 = vmatmul.mubr.f32.gmra.mxu0 %v1410
  %v1478 = vpop.f32.mrf.mxu0
  %v1479 = vadd.f32 0.0, %v1478
  %v1480 = vpop.f32.mrf.mxu0
  %1481 = vdwg.mxu0
  %v1482 = vadd.f32 %v1409, %v1479
  %v1483 = vxor.u32 %v1482, 2147483648
  %v1484 = vmul.f32 %v1483, 1.442695
  %v1485 = vpow.pop %v1484
  %v1486 = vadd.f32 %v1485, 1.0
  %v1487 = vrcp.pop %v1486
  %v1488 = vmul.f32 1.0, %v1487
  %v1489 = vtanh.pop %v1482
  %v1490 = vmul.f32 %v1488, %v1382
  %1492 = vrot.lane.b32.xlu0 %v1489, 98
  %v1493 = vpop.permute.xlu0 %1492
  %v1495 = vmul.f32 %v1488, %v1493
  %1497 = vrot.lane.b32.xlu0 %v1495, 10
  %v1498 = vpop.permute.xlu0 %1497
  %v1500 = vadd.f32 %v1490, %v1498
  %v1501 = vtanh.pop %v1500
  %1503 = vrot.lane.b32.xlu0 %v1501, 10
  %v1504 = vpop.permute.xlu0 %1503
  %v1506 = vmul.f32 %v1488, %v1504
  %1508 = vrot.lane.b32.xlu0 %v1506, 108
  %v1509 = vpop.permute.xlu0 %1508
  %1511 = vrot.lane.b32.xlu0 %v1506, 118
  %v1512 = vpop.permute.xlu0 %1511
  %v1514 = vsel %vm577, %v1509, %v1512
  %v1515 = vsel %vm688, %v1514, 0.0
  %1517 = vrot.lane.b32.xlu0 %v1515, 120
  %v1518 = vpop.permute.xlu0 %1517
  %v1519 = vrot.slane %v1518, 4
  %vm1520 = vcmask 982016
  %v1521 = vsel %vm1520, %v1519, %v1518
  %vm1523 = vcmask 1044416
  %vm1524 = vcmask 97284
  %vm1525 = vmor %vm1524, %vm1523
  %1526 = vst.msk [vmem:[#allocation2] sm:$0xff] %vm1525, %v1521
  %v1527 = vrot.slane %v666, 6
  %v1529 = vrot.slane %v671, 6
  %1530 = vrot.lane.b32.xlu0 %v1529, 88
  %v1531 = vpop.permute.xlu0 %1530
  %v1533 = vsel %vm590, %v1527, %v1531
  %v1534 = vsel %vm695, %v1515, 0
  %1536 = vmatprep.subr.mxu0 0.0
  %1537 = vmatpush1.msra.mxu0 0.0
  %1538 = vmatprep.subr.mxu0 0.0
  %1539 = vmatpush1.msra.mxu0 0.0
  %1540 = vmatprep.subr.mxu0 0.0
  %1541 = vmatpush1.msra.mxu0 0.0
  %1542 = vmatprep.subr.mxu0 0.0
  %1543 = vmatpush1.msra.mxu0 0.0
  %1544 = vmatprep.subr.mxu0 0.0
  %1545 = vmatpush1.msra.mxu0 0.0
  %1546 = vmatprep.subr.mxu0 0.0
  %1547 = vmatpush1.msra.mxu0 0.0
  %1548 = vmatprep.subr.mxu0 0.0
  %1549 = vmatpush1.msra.mxu0 0.0
  %1550 = vmatprep.subr.mxu0 0.0
  %1551 = vmatpush1.msra.mxu0 0.0
  %1552 = vmatprep.subr.mxu0 0.0
  %1553 = vmatpush1.msra.mxu0 0.0
  %1554 = vmatprep.subr.mxu0 0.0
  %1555 = vmatpush1.msra.mxu0 0.0
  %1556 = vmatprep.subr.mxu0 0.0
  %1557 = vmatpush1.msra.mxu0 0.0
  %1558 = vmatprep.subr.mxu0 0.0
  %1559 = vmatpush1.msra.mxu0 0.0
  %1560 = vmatprep.subr.mxu0 0.0
  %1561 = vmatpush1.msra.mxu0 0.0
  %1562 = vmatprep.subr.mxu0 0.0
  %1563 = vmatpush1.msra.mxu0 %v700
  %1564 = vmatprep.subr.mxu0 0.0
  %1565 = vmatpush1.msra.mxu0 %v680
  %1566 = vmatprep.subr.mxu0 0.0
  %1567 = vmatpush1.msra.mxu0 %v679
  %1568 = vmatprep.subr.mxu0 0.0
  %1569 = vmatpush2.msra.mxu0 0.0
  %1570 = vmatprep.subr.mxu0 0.0
  %1571 = vmatpush2.msra.mxu0 0.0
  %1572 = vmatprep.subr.mxu0 0.0
  %1573 = vmatpush2.msra.mxu0 0.0
  %1574 = vmatprep.subr.mxu0 0.0
  %1575 = vmatpush2.msra.mxu0 0.0
  %1576 = vmatprep.subr.mxu0 0.0
  %1577 = vmatpush2.msra.mxu0 0.0
  %1578 = vmatprep.subr.mxu0 0.0
  %1579 = vmatpush2.msra.mxu0 0.0
  %1580 = vmatprep.subr.mxu0 0.0
  %1581 = vmatpush2.msra.mxu0 0.0
  %1582 = vmatprep.subr.mxu0 0.0
  %1583 = vmatpush2.msra.mxu0 0.0
  %1584 = vmatprep.subr.mxu0 0.0
  %1585 = vmatpush2.msra.mxu0 0.0
  %1586 = vmatprep.subr.mxu0 0.0
  %1587 = vmatpush2.msra.mxu0 0.0
  %1588 = vmatprep.subr.mxu0 0.0
  %1589 = vmatpush2.msra.mxu0 0.0
  %1590 = vmatprep.subr.mxu0 0.0
  %1591 = vmatpush2.msra.mxu0 0.0
  %1592 = vmatprep.subr.mxu0 0.0
  %1593 = vmatpush2.msra.mxu0 0.0
  %1594 = vmatprep.subr.mxu0 0.0
  %1595 = vmatpush2.msra.mxu0 0.0
  %1596 = vmatprep.subr.mxu0 0.0
  %1597 = vmatpush2.msra.mxu0 0.0
  %1598 = vmatprep.subr.mxu0 0.0
  %1599 = vmatpush2.msra.mxu0 0.0
  %1600 = vmatprep.mubr.f32.mxu0 0.0
  %1601 = vmatmul.mubr.f32.gmra.mxu0 %v1534
  %v1602 = vpop.f32.mrf.mxu0
  %v1603 = vadd.f32 0.0, %v1602
  %v1604 = vpop.f32.mrf.mxu0
  %1605 = vdwg.mxu0
  %v1606 = vadd.f32 %v1533, %v1603
  %v1607 = vxor.u32 %v1606, 2147483648
  %v1608 = vmul.f32 %v1607, 1.442695
  %v1609 = vpow.pop %v1608
  %v1610 = vadd.f32 %v1609, 1.0
  %v1611 = vrcp.pop %v1610
  %v1612 = vmul.f32 1.0, %v1611
  %v1613 = vtanh.pop %v1606
  %v1614 = vmul.f32 %v1612, %v1500
  %1616 = vrot.lane.b32.xlu0 %v1613, 98
  %v1617 = vpop.permute.xlu0 %1616
  %v1619 = vmul.f32 %v1612, %v1617
  %1621 = vrot.lane.b32.xlu0 %v1619, 10
  %v1622 = vpop.permute.xlu0 %1621
  %v1624 = vadd.f32 %v1614, %v1622
  %v1625 = vtanh.pop %v1624
  %1627 = vrot.lane.b32.xlu0 %v1625, 10
  %v1628 = vpop.permute.xlu0 %1627
  %v1630 = vmul.f32 %v1612, %v1628
  %1632 = vrot.lane.b32.xlu0 %v1630, 108
  %v1633 = vpop.permute.xlu0 %1632
  %1635 = vrot.lane.b32.xlu0 %v1630, 118
  %v1636 = vpop.permute.xlu0 %1635
  %v1638 = vsel %vm577, %v1633, %v1636
  %v1639 = vsel %vm688, %v1638, 0.0
  %1641 = vrot.lane.b32.xlu0 %v1639, 12
  %v1642 = vpop.permute.xlu0 %1641
  %vm1644 = vcmask 257120
  %1645 = vst.msk [vmem:[#allocation2 + $0x4] sm:$0xf] %vm1644, %v1642
  %1646 = vrot.lane.b32.xlu0 %v1404, 88
  %v1647 = vpop.permute.xlu0 %1646
  %v1649 = vsel %vm590, %v671, %v1647
  %v1650 = vsel %vm695, %v1639, 0
  %1652 = vmatprep.subr.mxu0 0.0
  %1653 = vmatpush1.msra.mxu0 0.0
  %1654 = vmatprep.subr.mxu0 0.0
  %1655 = vmatpush1.msra.mxu0 0.0
  %1656 = vmatprep.subr.mxu0 0.0
  %1657 = vmatpush1.msra.mxu0 0.0
  %1658 = vmatprep.subr.mxu0 0.0
  %1659 = vmatpush1.msra.mxu0 0.0
  %1660 = vmatprep.subr.mxu0 0.0
  %1661 = vmatpush1.msra.mxu0 0.0
  %1662 = vmatprep.subr.mxu0 0.0
  %1663 = vmatpush1.msra.mxu0 0.0
  %1664 = vmatprep.subr.mxu0 0.0
  %1665 = vmatpush1.msra.mxu0 0.0
  %1666 = vmatprep.subr.mxu0 0.0
  %1667 = vmatpush1.msra.mxu0 0.0
  %1668 = vmatprep.subr.mxu0 0.0
  %1669 = vmatpush1.msra.mxu0 0.0
  %1670 = vmatprep.subr.mxu0 0.0
  %1671 = vmatpush1.msra.mxu0 0.0
  %1672 = vmatprep.subr.mxu0 0.0
  %1673 = vmatpush1.msra.mxu0 0.0
  %1674 = vmatprep.subr.mxu0 0.0
  %1675 = vmatpush1.msra.mxu0 0.0
  %1676 = vmatprep.subr.mxu0 0.0
  %1677 = vmatpush1.msra.mxu0 0.0
  %1678 = vmatprep.subr.mxu0 0.0
  %1679 = vmatpush1.msra.mxu0 %v700
  %1680 = vmatprep.subr.mxu0 0.0
  %1681 = vmatpush1.msra.mxu0 %v680
  %1682 = vmatprep.subr.mxu0 0.0
  %1683 = vmatpush1.msra.mxu0 %v679
  %1684 = vmatprep.subr.mxu0 0.0
  %1685 = vmatpush2.msra.mxu0 0.0
  %1686 = vmatprep.subr.mxu0 0.0
  %1687 = vmatpush2.msra.mxu0 0.0
  %1688 = vmatprep.subr.mxu0 0.0
  %1689 = vmatpush2.msra.mxu0 0.0
  %1690 = vmatprep.subr.mxu0 0.0
  %1691 = vmatpush2.msra.mxu0 0.0
  %1692 = vmatprep.subr.mxu0 0.0
  %1693 = vmatpush2.msra.mxu0 0.0
  %1694 = vmatprep.subr.mxu0 0.0
  %1695 = vmatpush2.msra.mxu0 0.0
  %1696 = vmatprep.subr.mxu0 0.0
  %1697 = vmatpush2.msra.mxu0 0.0
  %1698 = vmatprep.subr.mxu0 0.0
  %1699 = vmatpush2.msra.mxu0 0.0
  %1700 = vmatprep.subr.mxu0 0.0
  %1701 = vmatpush2.msra.mxu0 0.0
  %1702 = vmatprep.subr.mxu0 0.0
  %1703 = vmatpush2.msra.mxu0 0.0
  %1704 = vmatprep.subr.mxu0 0.0
  %1705 = vmatpush2.msra.mxu0 0.0
  %1706 = vmatprep.subr.mxu0 0.0
  %1707 = vmatpush2.msra.mxu0 0.0
  %1708 = vmatprep.subr.mxu0 0.0
  %1709 = vmatpush2.msra.mxu0 0.0
  %1710 = vmatprep.subr.mxu0 0.0
  %1711 = vmatpush2.msra.mxu0 0.0
  %1712 = vmatprep.subr.mxu0 0.0
  %1713 = vmatpush2.msra.mxu0 0.0
  %1714 = vmatprep.subr.mxu0 0.0
  %1715 = vmatpush2.msra.mxu0 0.0
  %1716 = vmatprep.mubr.f32.mxu0 0.0
  %1717 = vmatmul.mubr.f32.gmra.mxu0 %v1650
  %v1718 = vpop.f32.mrf.mxu0
  %v1719 = vadd.f32 0.0, %v1718
  %v1720 = vpop.f32.mrf.mxu0
  %1721 = vdwg.mxu0
  %v1722 = vadd.f32 %v1649, %v1719
  %v1723 = vxor.u32 %v1722, 2147483648
  %v1724 = vmul.f32 %v1723, 1.442695
  %v1725 = vpow.pop %v1724
  %v1726 = vadd.f32 %v1725, 1.0
  %v1727 = vrcp.pop %v1726
  %v1728 = vmul.f32 1.0, %v1727
  %v1729 = vtanh.pop %v1722
  %v1730 = vmul.f32 %v1728, %v1624
  %1732 = vrot.lane.b32.xlu0 %v1729, 98
  %v1733 = vpop.permute.xlu0 %1732
  %v1735 = vmul.f32 %v1728, %v1733
  %1737 = vrot.lane.b32.xlu0 %v1735, 10
  %v1738 = vpop.permute.xlu0 %1737
  %v1740 = vadd.f32 %v1730, %v1738
  %v1741 = vtanh.pop %v1740
  %1743 = vrot.lane.b32.xlu0 %v1741, 10
  %v1744 = vpop.permute.xlu0 %1743
  %v1746 = vmul.f32 %v1728, %v1744
  %1748 = vrot.lane.b32.xlu0 %v1746, 108
  %v1749 = vpop.permute.xlu0 %1748
  %1751 = vrot.lane.b32.xlu0 %v1746, 118
  %v1752 = vpop.permute.xlu0 %1751
  %v1754 = vsel %vm577, %v1749, %v1752
  %v1755 = vsel %vm688, %v1754, 0.0
  %1757 = vrot.lane.b32.xlu0 %v1755, 32
  %v1758 = vpop.permute.xlu0 %1757
  %vm1760 = vcmask 421120
  %1761 = vst.msk [vmem:[#allocation2 + $0x4] sm:$0xf] %vm1760, %v1758
  %1763 = vrot.lane.b32.xlu0 %v1285, 88
  %v1764 = vpop.permute.xlu0 %1763
  %v1766 = vsel %vm590, %v1287, %v1764
  %v1767 = vsel %vm695, %v1755, 0
  %1769 = vmatprep.subr.mxu0 0.0
  %1770 = vmatpush1.msra.mxu0 0.0
  %1771 = vmatprep.subr.mxu0 0.0
  %1772 = vmatpush1.msra.mxu0 0.0
  %1773 = vmatprep.subr.mxu0 0.0
  %1774 = vmatpush1.msra.mxu0 0.0
  %1775 = vmatprep.subr.mxu0 0.0
  %1776 = vmatpush1.msra.mxu0 0.0
  %1777 = vmatprep.subr.mxu0 0.0
  %1778 = vmatpush1.msra.mxu0 0.0
  %1779 = vmatprep.subr.mxu0 0.0
  %1780 = vmatpush1.msra.mxu0 0.0
  %1781 = vmatprep.subr.mxu0 0.0
  %1782 = vmatpush1.msra.mxu0 0.0
  %1783 = vmatprep.subr.mxu0 0.0
  %1784 = vmatpush1.msra.mxu0 0.0
  %1785 = vmatprep.subr.mxu0 0.0
  %1786 = vmatpush1.msra.mxu0 0.0
  %1787 = vmatprep.subr.mxu0 0.0
  %1788 = vmatpush1.msra.mxu0 0.0
  %1789 = vmatprep.subr.mxu0 0.0
  %1790 = vmatpush1.msra.mxu0 0.0
  %1791 = vmatprep.subr.mxu0 0.0
  %1792 = vmatpush1.msra.mxu0 0.0
  %1793 = vmatprep.subr.mxu0 0.0
  %1794 = vmatpush1.msra.mxu0 0.0
  %1795 = vmatprep.subr.mxu0 0.0
  %1796 = vmatpush1.msra.mxu0 %v700
  %1797 = vmatprep.subr.mxu0 0.0
  %1798 = vmatpush1.msra.mxu0 %v680
  %1799 = vmatprep.subr.mxu0 0.0
  %1800 = vmatpush1.msra.mxu0 %v679
  %1801 = vmatprep.subr.mxu0 0.0
  %1802 = vmatpush2.msra.mxu0 0.0
  %1803 = vmatprep.subr.mxu0 0.0
  %1804 = vmatpush2.msra.mxu0 0.0
  %1805 = vmatprep.subr.mxu0 0.0
  %1806 = vmatpush2.msra.mxu0 0.0
  %1807 = vmatprep.subr.mxu0 0.0
  %1808 = vmatpush2.msra.mxu0 0.0
  %1809 = vmatprep.subr.mxu0 0.0
  %1810 = vmatpush2.msra.mxu0 0.0
  %1811 = vmatprep.subr.mxu0 0.0
  %1812 = vmatpush2.msra.mxu0 0.0
  %1813 = vmatprep.subr.mxu0 0.0
  %1814 = vmatpush2.msra.mxu0 0.0
  %1815 = vmatprep.subr.mxu0 0.0
  %1816 = vmatpush2.msra.mxu0 0.0
  %1817 = vmatprep.subr.mxu0 0.0
  %1818 = vmatpush2.msra.mxu0 0.0
  %1819 = vmatprep.subr.mxu0 0.0
  %1820 = vmatpush2.msra.mxu0 0.0
  %1821 = vmatprep.subr.mxu0 0.0
  %1822 = vmatpush2.msra.mxu0 0.0
  %1823 = vmatprep.subr.mxu0 0.0
  %1824 = vmatpush2.msra.mxu0 0.0
  %1825 = vmatprep.subr.mxu0 0.0
  %1826 = vmatpush2.msra.mxu0 0.0
  %1827 = vmatprep.subr.mxu0 0.0
  %1828 = vmatpush2.msra.mxu0 0.0
  %1829 = vmatprep.subr.mxu0 0.0
  %1830 = vmatpush2.msra.mxu0 0.0
  %1831 = vmatprep.subr.mxu0 0.0
  %1832 = vmatpush2.msra.mxu0 0.0
  %1833 = vmatprep.mubr.f32.mxu0 0.0
  %1834 = vmatmul.mubr.f32.gmra.mxu0 %v1767
  %v1835 = vpop.f32.mrf.mxu0
  %v1836 = vadd.f32 0.0, %v1835
  %v1837 = vpop.f32.mrf.mxu0
  %1838 = vdwg.mxu0
  %v1839 = vadd.f32 %v1766, %v1836
  %v1840 = vxor.u32 %v1839, 2147483648
  %v1841 = vmul.f32 %v1840, 1.442695
  %v1842 = vpow.pop %v1841
  %v1843 = vadd.f32 %v1842, 1.0
  %v1844 = vrcp.pop %v1843
  %v1845 = vmul.f32 1.0, %v1844
  %v1846 = vtanh.pop %v1839
  %v1847 = vmul.f32 %v1845, %v1740
  %1849 = vrot.lane.b32.xlu0 %v1846, 98
  %v1850 = vpop.permute.xlu0 %1849
  %v1852 = vmul.f32 %v1845, %v1850
  %1854 = vrot.lane.b32.xlu0 %v1852, 10
  %v1855 = vpop.permute.xlu0 %1854
  %v1857 = vadd.f32 %v1847, %v1855
  %v1858 = vtanh.pop %v1857
  %1860 = vrot.lane.b32.xlu0 %v1858, 10
  %v1861 = vpop.permute.xlu0 %1860
  %v1863 = vmul.f32 %v1845, %v1861
  %1865 = vrot.lane.b32.xlu0 %v1863, 108
  %v1866 = vpop.permute.xlu0 %1865
  %1868 = vrot.lane.b32.xlu0 %v1863, 118
  %v1869 = vpop.permute.xlu0 %1868
  %v1871 = vsel %vm577, %v1866, %v1869
  %v1872 = vsel %vm688, %v1871, 0.0
  %1874 = vrot.lane.b32.xlu0 %v1872, 52
  %v1875 = vpop.permute.xlu0 %1874
  %vm1877 = vcmask 585120
  %1878 = vst.msk [vmem:[#allocation2 + $0x4] sm:$0xf] %vm1877, %v1875
  %1880 = vrot.lane.b32.xlu0 %v666, 88
  %v1881 = vpop.permute.xlu0 %1880
  %v1883 = vsel %vm590, %v1167, %v1881
  %v1884 = vsel %vm695, %v1872, 0
  %1886 = vmatprep.subr.mxu0 0.0
  %1887 = vmatpush1.msra.mxu0 0.0
  %1888 = vmatprep.subr.mxu0 0.0
  %1889 = vmatpush1.msra.mxu0 0.0
  %1890 = vmatprep.subr.mxu0 0.0
  %1891 = vmatpush1.msra.mxu0 0.0
  %1892 = vmatprep.subr.mxu0 0.0
  %1893 = vmatpush1.msra.mxu0 0.0
  %1894 = vmatprep.subr.mxu0 0.0
  %1895 = vmatpush1.msra.mxu0 0.0
  %1896 = vmatprep.subr.mxu0 0.0
  %1897 = vmatpush1.msra.mxu0 0.0
  %1898 = vmatprep.subr.mxu0 0.0
  %1899 = vmatpush1.msra.mxu0 0.0
  %1900 = vmatprep.subr.mxu0 0.0
  %1901 = vmatpush1.msra.mxu0 0.0
  %1902 = vmatprep.subr.mxu0 0.0
  %1903 = vmatpush1.msra.mxu0 0.0
  %1904 = vmatprep.subr.mxu0 0.0
  %1905 = vmatpush1.msra.mxu0 0.0
  %1906 = vmatprep.subr.mxu0 0.0
  %1907 = vmatpush1.msra.mxu0 0.0
  %1908 = vmatprep.subr.mxu0 0.0
  %1909 = vmatpush1.msra.mxu0 0.0
  %1910 = vmatprep.subr.mxu0 0.0
  %1911 = vmatpush1.msra.mxu0 0.0
  %1912 = vmatprep.subr.mxu0 0.0
  %1913 = vmatpush1.msra.mxu0 %v700
  %1914 = vmatprep.subr.mxu0 0.0
  %1915 = vmatpush1.msra.mxu0 %v680
  %1916 = vmatprep.subr.mxu0 0.0
  %1917 = vmatpush1.msra.mxu0 %v679
  %1918 = vmatprep.subr.mxu0 0.0
  %1919 = vmatpush2.msra.mxu0 0.0
  %1920 = vmatprep.subr.mxu0 0.0
  %1921 = vmatpush2.msra.mxu0 0.0
  %1922 = vmatprep.subr.mxu0 0.0
  %1923 = vmatpush2.msra.mxu0 0.0
  %1924 = vmatprep.subr.mxu0 0.0
  %1925 = vmatpush2.msra.mxu0 0.0
  %1926 = vmatprep.subr.mxu0 0.0
  %1927 = vmatpush2.msra.mxu0 0.0
  %1928 = vmatprep.subr.mxu0 0.0
  %1929 = vmatpush2.msra.mxu0 0.0
  %1930 = vmatprep.subr.mxu0 0.0
  %1931 = vmatpush2.msra.mxu0 0.0
  %1932 = vmatprep.subr.mxu0 0.0
  %1933 = vmatpush2.msra.mxu0 0.0
  %1934 = vmatprep.subr.mxu0 0.0
  %1935 = vmatpush2.msra.mxu0 0.0
  %1936 = vmatprep.subr.mxu0 0.0
  %1937 = vmatpush2.msra.mxu0 0.0
  %1938 = vmatprep.subr.mxu0 0.0
  %1939 = vmatpush2.msra.mxu0 0.0
  %1940 = vmatprep.subr.mxu0 0.0
  %1941 = vmatpush2.msra.mxu0 0.0
  %1942 = vmatprep.subr.mxu0 0.0
  %1943 = vmatpush2.msra.mxu0 0.0
  %1944 = vmatprep.subr.mxu0 0.0
  %1945 = vmatpush2.msra.mxu0 0.0
  %1946 = vmatprep.subr.mxu0 0.0
  %1947 = vmatpush2.msra.mxu0 0.0
  %1948 = vmatprep.subr.mxu0 0.0
  %1949 = vmatpush2.msra.mxu0 0.0
  %1950 = vmatprep.mubr.f32.mxu0 0.0
  %1951 = vmatmul.mubr.f32.gmra.mxu0 %v1884
  %v1952 = vpop.f32.mrf.mxu0
  %v1953 = vadd.f32 0.0, %v1952
  %v1954 = vpop.f32.mrf.mxu0
  %1955 = vdwg.mxu0
  %v1956 = vadd.f32 %v1883, %v1953
  %v1957 = vxor.u32 %v1956, 2147483648
  %v1958 = vmul.f32 %v1957, 1.442695
  %v1959 = vpow.pop %v1958
  %v1960 = vadd.f32 %v1959, 1.0
  %v1961 = vrcp.pop %v1960
  %v1962 = vmul.f32 1.0, %v1961
  %v1963 = vtanh.pop %v1956
  %v1964 = vmul.f32 %v1962, %v1857
  %1966 = vrot.lane.b32.xlu0 %v1963, 98
  %v1967 = vpop.permute.xlu0 %1966
  %v1969 = vmul.f32 %v1962, %v1967
  %1971 = vrot.lane.b32.xlu0 %v1969, 10
  %v1972 = vpop.permute.xlu0 %1971
  %v1974 = vadd.f32 %v1964, %v1972
  %v1975 = vtanh.pop %v1974
  %1977 = vrot.lane.b32.xlu0 %v1975, 10
  %v1978 = vpop.permute.xlu0 %1977
  %v1980 = vmul.f32 %v1962, %v1978
  %1982 = vrot.lane.b32.xlu0 %v1980, 108
  %v1983 = vpop.permute.xlu0 %1982
  %1985 = vrot.lane.b32.xlu0 %v1980, 118
  %v1986 = vpop.permute.xlu0 %1985
  %v1988 = vsel %vm577, %v1983, %v1986
  %v1989 = vsel %vm688, %v1988, 0.0
  %1991 = vrot.lane.b32.xlu0 %v1989, 72
  %v1992 = vpop.permute.xlu0 %1991
  %vm1994 = vcmask 749120
  %1995 = vst.msk [vmem:[#allocation2 + $0x4] sm:$0xf] %vm1994, %v1992
  %1997 = vrot.lane.b32.xlu0 %v1527, 88
  %v1998 = vpop.permute.xlu0 %1997
  %v2000 = vsel %vm590, %v1529, %v1998
  %v2001 = vsel %vm695, %v1989, 0
  %2003 = vmatprep.subr.mxu0 0.0
  %2004 = vmatpush1.msra.mxu0 0.0
  %2005 = vmatprep.subr.mxu0 0.0
  %2006 = vmatpush1.msra.mxu0 0.0
  %2007 = vmatprep.subr.mxu0 0.0
  %2008 = vmatpush1.msra.mxu0 0.0
  %2009 = vmatprep.subr.mxu0 0.0
  %2010 = vmatpush1.msra.mxu0 0.0
  %2011 = vmatprep.subr.mxu0 0.0
  %2012 = vmatpush1.msra.mxu0 0.0
  %2013 = vmatprep.subr.mxu0 0.0
  %2014 = vmatpush1.msra.mxu0 0.0
  %2015 = vmatprep.subr.mxu0 0.0
  %2016 = vmatpush1.msra.mxu0 0.0
  %2017 = vmatprep.subr.mxu0 0.0
  %2018 = vmatpush1.msra.mxu0 0.0
  %2019 = vmatprep.subr.mxu0 0.0
  %2020 = vmatpush1.msra.mxu0 0.0
  %2021 = vmatprep.subr.mxu0 0.0
  %2022 = vmatpush1.msra.mxu0 0.0
  %2023 = vmatprep.subr.mxu0 0.0
  %2024 = vmatpush1.msra.mxu0 0.0
  %2025 = vmatprep.subr.mxu0 0.0
  %2026 = vmatpush1.msra.mxu0 0.0
  %2027 = vmatprep.subr.mxu0 0.0
  %2028 = vmatpush1.msra.mxu0 0.0
  %2029 = vmatprep.subr.mxu0 0.0
  %2030 = vmatpush1.msra.mxu0 %v700
  %2031 = vmatprep.subr.mxu0 0.0
  %2032 = vmatpush1.msra.mxu0 %v680
  %2033 = vmatprep.subr.mxu0 0.0
  %2034 = vmatpush1.msra.mxu0 %v679
  %2035 = vmatprep.subr.mxu0 0.0
  %2036 = vmatpush2.msra.mxu0 0.0
  %2037 = vmatprep.subr.mxu0 0.0
  %2038 = vmatpush2.msra.mxu0 0.0
  %2039 = vmatprep.subr.mxu0 0.0
  %2040 = vmatpush2.msra.mxu0 0.0
  %2041 = vmatprep.subr.mxu0 0.0
  %2042 = vmatpush2.msra.mxu0 0.0
  %2043 = vmatprep.subr.mxu0 0.0
  %2044 = vmatpush2.msra.mxu0 0.0
  %2045 = vmatprep.subr.mxu0 0.0
  %2046 = vmatpush2.msra.mxu0 0.0
  %2047 = vmatprep.subr.mxu0 0.0
  %2048 = vmatpush2.msra.mxu0 0.0
  %2049 = vmatprep.subr.mxu0 0.0
  %2050 = vmatpush2.msra.mxu0 0.0
  %2051 = vmatprep.subr.mxu0 0.0
  %2052 = vmatpush2.msra.mxu0 0.0
  %2053 = vmatprep.subr.mxu0 0.0
  %2054 = vmatpush2.msra.mxu0 0.0
  %2055 = vmatprep.subr.mxu0 0.0
  %2056 = vmatpush2.msra.mxu0 0.0
  %2057 = vmatprep.subr.mxu0 0.0
  %2058 = vmatpush2.msra.mxu0 0.0
  %2059 = vmatprep.subr.mxu0 0.0
  %2060 = vmatpush2.msra.mxu0 0.0
  %2061 = vmatprep.subr.mxu0 0.0
  %2062 = vmatpush2.msra.mxu0 0.0
  %2063 = vmatprep.subr.mxu0 0.0
  %2064 = vmatpush2.msra.mxu0 0.0
  %2065 = vmatprep.subr.mxu0 0.0
  %2066 = vmatpush2.msra.mxu0 0.0
  %2067 = vmatprep.mubr.f32.mxu0 0.0
  %2068 = vmatmul.mubr.f32.gmra.mxu0 %v2001
  %v2069 = vpop.f32.mrf.mxu0
  %v2070 = vadd.f32 0.0, %v2069
  %v2071 = vpop.f32.mrf.mxu0
  %2072 = vdwg.mxu0
  %v2073 = vadd.f32 %v2000, %v2070
  %v2074 = vxor.u32 %v2073, 2147483648
  %v2075 = vmul.f32 %v2074, 1.442695
  %v2076 = vpow.pop %v2075
  %v2077 = vadd.f32 %v2076, 1.0
  %v2078 = vrcp.pop %v2077
  %v2079 = vmul.f32 1.0, %v2078
  %v2080 = vtanh.pop %v2073
  %v2081 = vmul.f32 %v2079, %v1974
  %2083 = vrot.lane.b32.xlu0 %v2080, 98
  %v2084 = vpop.permute.xlu0 %2083
  %v2086 = vmul.f32 %v2079, %v2084
  %2088 = vrot.lane.b32.xlu0 %v2086, 10
  %v2089 = vpop.permute.xlu0 %2088
  %v2091 = vadd.f32 %v2081, %v2089
  %v2092 = vtanh.pop %v2091
  %2094 = vrot.lane.b32.xlu0 %v2092, 10
  %v2095 = vpop.permute.xlu0 %2094
  %v2097 = vmul.f32 %v2079, %v2095
  %2099 = vrot.lane.b32.xlu0 %v2097, 108
  %v2100 = vpop.permute.xlu0 %2099
  %2102 = vrot.lane.b32.xlu0 %v2097, 118
  %v2103 = vpop.permute.xlu0 %2102
  %v2105 = vsel %vm577, %v2100, %v2103
  %v2106 = vsel %vm688, %v2105, 0.0
  %2108 = vrot.lane.b32.xlu0 %v2106, 92
  %v2109 = vpop.permute.xlu0 %2108
  %vm2111 = vcmask 913120
  %2112 = vst.msk [vmem:[#allocation2 + $0x4] sm:$0xf] %vm2111, %v2109
  %2113 = vrot.lane.b32.xlu0 %v929, 88
  %v2114 = vpop.permute.xlu0 %2113
  %v2116 = vsel %vm590, %v676, %v2114
  %v2117 = vsel %vm695, %v2106, 0
  %2119 = vmatprep.subr.mxu0 0.0
  %2120 = vmatpush1.msra.mxu0 0.0
  %2121 = vmatprep.subr.mxu0 0.0
  %2122 = vmatpush1.msra.mxu0 0.0
  %2123 = vmatprep.subr.mxu0 0.0
  %2124 = vmatpush1.msra.mxu0 0.0
  %2125 = vmatprep.subr.mxu0 0.0
  %2126 = vmatpush1.msra.mxu0 0.0
  %2127 = vmatprep.subr.mxu0 0.0
  %2128 = vmatpush1.msra.mxu0 0.0
  %2129 = vmatprep.subr.mxu0 0.0
  %2130 = vmatpush1.msra.mxu0 0.0
  %2131 = vmatprep.subr.mxu0 0.0
  %2132 = vmatpush1.msra.mxu0 0.0
  %2133 = vmatprep.subr.mxu0 0.0
  %2134 = vmatpush1.msra.mxu0 0.0
  %2135 = vmatprep.subr.mxu0 0.0
  %2136 = vmatpush1.msra.mxu0 0.0
  %2137 = vmatprep.subr.mxu0 0.0
  %2138 = vmatpush1.msra.mxu0 0.0
  %2139 = vmatprep.subr.mxu0 0.0
  %2140 = vmatpush1.msra.mxu0 0.0
  %2141 = vmatprep.subr.mxu0 0.0
  %2142 = vmatpush1.msra.mxu0 0.0
  %2143 = vmatprep.subr.mxu0 0.0
  %2144 = vmatpush1.msra.mxu0 0.0
  %2145 = vmatprep.subr.mxu0 0.0
  %2146 = vmatpush1.msra.mxu0 %v700
  %2147 = vmatprep.subr.mxu0 0.0
  %2148 = vmatpush1.msra.mxu0 %v680
  %2149 = vmatprep.subr.mxu0 0.0
  %2150 = vmatpush1.msra.mxu0 %v679
  %2151 = vmatprep.subr.mxu0 0.0
  %2152 = vmatpush2.msra.mxu0 0.0
  %2153 = vmatprep.subr.mxu0 0.0
  %2154 = vmatpush2.msra.mxu0 0.0
  %2155 = vmatprep.subr.mxu0 0.0
  %2156 = vmatpush2.msra.mxu0 0.0
  %2157 = vmatprep.subr.mxu0 0.0
  %2158 = vmatpush2.msra.mxu0 0.0
  %2159 = vmatprep.subr.mxu0 0.0
  %2160 = vmatpush2.msra.mxu0 0.0
  %2161 = vmatprep.subr.mxu0 0.0
  %2162 = vmatpush2.msra.mxu0 0.0
  %2163 = vmatprep.subr.mxu0 0.0
  %2164 = vmatpush2.msra.mxu0 0.0
  %2165 = vmatprep.subr.mxu0 0.0
  %2166 = vmatpush2.msra.mxu0 0.0
  %2167 = vmatprep.subr.mxu0 0.0
  %2168 = vmatpush2.msra.mxu0 0.0
  %2169 = vmatprep.subr.mxu0 0.0
  %2170 = vmatpush2.msra.mxu0 0.0
  %2171 = vmatprep.subr.mxu0 0.0
  %2172 = vmatpush2.msra.mxu0 0.0
  %2173 = vmatprep.subr.mxu0 0.0
  %2174 = vmatpush2.msra.mxu0 0.0
  %2175 = vmatprep.subr.mxu0 0.0
  %2176 = vmatpush2.msra.mxu0 0.0
  %2177 = vmatprep.subr.mxu0 0.0
  %2178 = vmatpush2.msra.mxu0 0.0
  %2179 = vmatprep.subr.mxu0 0.0
  %2180 = vmatpush2.msra.mxu0 0.0
  %2181 = vmatprep.subr.mxu0 0.0
  %2182 = vmatpush2.msra.mxu0 0.0
  %2183 = vmatprep.mubr.f32.mxu0 0.0
  %2184 = vmatmul.mubr.f32.gmra.mxu0 %v2117
  %v2185 = vpop.f32.mrf.mxu0
  %v2186 = vadd.f32 0.0, %v2185
  %v2187 = vpop.f32.mrf.mxu0
  %2188 = vdwg.mxu0
  %v2189 = vadd.f32 %v2116, %v2186
  %v2190 = vxor.u32 %v2189, 2147483648
  %v2191 = vmul.f32 %v2190, 1.442695
  %v2192 = vpow.pop %v2191
  %v2193 = vadd.f32 %v2192, 1.0
  %v2194 = vrcp.pop %v2193
  %v2195 = vmul.f32 1.0, %v2194
  %v2196 = vtanh.pop %v2189
  %v2197 = vmul.f32 %v2195, %v2091
  %2199 = vrot.lane.b32.xlu0 %v2196, 98
  %v2200 = vpop.permute.xlu0 %2199
  %v2202 = vmul.f32 %v2195, %v2200
  %2204 = vrot.lane.b32.xlu0 %v2202, 10
  %v2205 = vpop.permute.xlu0 %2204
  %v2207 = vadd.f32 %v2197, %v2205
  %v2208 = vtanh.pop %v2207
  %2210 = vrot.lane.b32.xlu0 %v2208, 10
  %v2211 = vpop.permute.xlu0 %2210
  %v2213 = vmul.f32 %v2195, %v2211
  %2215 = vrot.lane.b32.xlu0 %v2213, 108
  %v2216 = vpop.permute.xlu0 %2215
  %2218 = vrot.lane.b32.xlu0 %v2213, 118
  %v2219 = vpop.permute.xlu0 %2218
  %v2221 = vsel %vm577, %v2216, %v2219
  %v2222 = vsel %vm688, %v2221, 0.0
  %2224 = vrot.lane.b32.xlu0 %v2222, 112
  %v2225 = vpop.permute.xlu0 %2224
  %v2226 = vrot.slane %v2225, 4
  %vm2227 = vcmask 916480
  %v2228 = vsel %vm2227, %v2226, %v2225
  %vm2230 = vcmask 1044352
  %vm2231 = vcmask 31748
  %vm2232 = vmor %vm2231, %vm2230
  %2233 = vst.msk [vmem:[#allocation2 + $0x4] sm:$0xff] %vm2232, %v2228
  %2235 = vrot.lane.b32.xlu0 %v809, 88
  %v2236 = vpop.permute.xlu0 %2235
  %v2238 = vsel %vm590, %v811, %v2236
  %v2239 = vsel %vm695, %v2222, 0
  %2241 = vmatprep.subr.mxu0 0.0
  %2242 = vmatpush1.msra.mxu0 0.0
  %2243 = vmatprep.subr.mxu0 0.0
  %2244 = vmatpush1.msra.mxu0 0.0
  %2245 = vmatprep.subr.mxu0 0.0
  %2246 = vmatpush1.msra.mxu0 0.0
  %2247 = vmatprep.subr.mxu0 0.0
  %2248 = vmatpush1.msra.mxu0 0.0
  %2249 = vmatprep.subr.mxu0 0.0
  %2250 = vmatpush1.msra.mxu0 0.0
  %2251 = vmatprep.subr.mxu0 0.0
  %2252 = vmatpush1.msra.mxu0 0.0
  %2253 = vmatprep.subr.mxu0 0.0
  %2254 = vmatpush1.msra.mxu0 0.0
  %2255 = vmatprep.subr.mxu0 0.0
  %2256 = vmatpush1.msra.mxu0 0.0
  %2257 = vmatprep.subr.mxu0 0.0
  %2258 = vmatpush1.msra.mxu0 0.0
  %2259 = vmatprep.subr.mxu0 0.0
  %2260 = vmatpush1.msra.mxu0 0.0
  %2261 = vmatprep.subr.mxu0 0.0
  %2262 = vmatpush1.msra.mxu0 0.0
  %2263 = vmatprep.subr.mxu0 0.0
  %2264 = vmatpush1.msra.mxu0 0.0
  %2265 = vmatprep.subr.mxu0 0.0
  %2266 = vmatpush1.msra.mxu0 0.0
  %2267 = vmatprep.subr.mxu0 0.0
  %2268 = vmatpush1.msra.mxu0 %v700
  %2269 = vmatprep.subr.mxu0 0.0
  %2270 = vmatpush1.msra.mxu0 %v680
  %2271 = vmatprep.subr.mxu0 0.0
  %2272 = vmatpush1.msra.mxu0 %v679
  %2273 = vmatprep.subr.mxu0 0.0
  %2274 = vmatpush2.msra.mxu0 0.0
  %2275 = vmatprep.subr.mxu0 0.0
  %2276 = vmatpush2.msra.mxu0 0.0
  %2277 = vmatprep.subr.mxu0 0.0
  %2278 = vmatpush2.msra.mxu0 0.0
  %2279 = vmatprep.subr.mxu0 0.0
  %2280 = vmatpush2.msra.mxu0 0.0
  %2281 = vmatprep.subr.mxu0 0.0
  %2282 = vmatpush2.msra.mxu0 0.0
  %2283 = vmatprep.subr.mxu0 0.0
  %2284 = vmatpush2.msra.mxu0 0.0
  %2285 = vmatprep.subr.mxu0 0.0
  %2286 = vmatpush2.msra.mxu0 0.0
  %2287 = vmatprep.subr.mxu0 0.0
  %2288 = vmatpush2.msra.mxu0 0.0
  %2289 = vmatprep.subr.mxu0 0.0
  %2290 = vmatpush2.msra.mxu0 0.0
  %2291 = vmatprep.subr.mxu0 0.0
  %2292 = vmatpush2.msra.mxu0 0.0
  %2293 = vmatprep.subr.mxu0 0.0
  %2294 = vmatpush2.msra.mxu0 0.0
  %2295 = vmatprep.subr.mxu0 0.0
  %2296 = vmatpush2.msra.mxu0 0.0
  %2297 = vmatprep.subr.mxu0 0.0
  %2298 = vmatpush2.msra.mxu0 0.0
  %2299 = vmatprep.subr.mxu0 0.0
  %2300 = vmatpush2.msra.mxu0 0.0
  %2301 = vmatprep.subr.mxu0 0.0
  %2302 = vmatpush2.msra.mxu0 0.0
  %2303 = vmatprep.subr.mxu0 0.0
  %2304 = vmatpush2.msra.mxu0 0.0
  %2305 = vmatprep.mubr.f32.mxu0 0.0
  %2306 = vmatmul.mubr.f32.gmra.mxu0 %v2239
  %v2307 = vpop.f32.mrf.mxu0
  %v2308 = vadd.f32 0.0, %v2307
  %v2309 = vpop.f32.mrf.mxu0
  %2310 = vdwg.mxu0
  %v2311 = vadd.f32 %v2238, %v2308
  %v2312 = vxor.u32 %v2311, 2147483648
  %v2313 = vmul.f32 %v2312, 1.442695
  %v2314 = vpow.pop %v2313
  %v2315 = vadd.f32 %v2314, 1.0
  %v2316 = vrcp.pop %v2315
  %v2317 = vmul.f32 1.0, %v2316
  %v2318 = vtanh.pop %v2311
  %v2319 = vmul.f32 %v2317, %v2207
  %2321 = vrot.lane.b32.xlu0 %v2318, 98
  %v2322 = vpop.permute.xlu0 %2321
  %v2324 = vmul.f32 %v2317, %v2322
  %2326 = vrot.lane.b32.xlu0 %v2324, 10
  %v2327 = vpop.permute.xlu0 %2326
  %v2329 = vadd.f32 %v2319, %v2327
  %v2330 = vtanh.pop %v2329
  %2332 = vrot.lane.b32.xlu0 %v2330, 10
  %v2333 = vpop.permute.xlu0 %2332
  %v2335 = vmul.f32 %v2317, %v2333
  %2337 = vrot.lane.b32.xlu0 %v2335, 108
  %v2338 = vpop.permute.xlu0 %2337
  %2340 = vrot.lane.b32.xlu0 %v2335, 118
  %v2341 = vpop.permute.xlu0 %2340
  %v2343 = vsel %vm577, %v2338, %v2341
  %v2344 = vsel %vm688, %v2343, 0.0
  %2346 = vrot.lane.b32.xlu0 %v2344, 4
  %v2347 = vpop.permute.xlu0 %2346
  %vm2349 = vcmask 191520
  %2350 = vst.msk [vmem:[#allocation2 + $0x8] sm:$0xf] %vm2349, %v2347
  %2352 = vrot.lane.b32.xlu0 %v661, 88
  %v2353 = vpop.permute.xlu0 %2352
  %v2355 = vsel %vm590, %v690, %v2353
  %v2356 = vsel %vm695, %v2344, 0
  %2358 = vmatprep.subr.mxu0 0.0
  %2359 = vmatpush1.msra.mxu0 0.0
  %2360 = vmatprep.subr.mxu0 0.0
  %2361 = vmatpush1.msra.mxu0 0.0
  %2362 = vmatprep.subr.mxu0 0.0
  %2363 = vmatpush1.msra.mxu0 0.0
  %2364 = vmatprep.subr.mxu0 0.0
  %2365 = vmatpush1.msra.mxu0 0.0
  %2366 = vmatprep.subr.mxu0 0.0
  %2367 = vmatpush1.msra.mxu0 0.0
  %2368 = vmatprep.subr.mxu0 0.0
  %2369 = vmatpush1.msra.mxu0 0.0
  %2370 = vmatprep.subr.mxu0 0.0
  %2371 = vmatpush1.msra.mxu0 0.0
  %2372 = vmatprep.subr.mxu0 0.0
  %2373 = vmatpush1.msra.mxu0 0.0
  %2374 = vmatprep.subr.mxu0 0.0
  %2375 = vmatpush1.msra.mxu0 0.0
  %2376 = vmatprep.subr.mxu0 0.0
  %2377 = vmatpush1.msra.mxu0 0.0
  %2378 = vmatprep.subr.mxu0 0.0
  %2379 = vmatpush1.msra.mxu0 0.0
  %2380 = vmatprep.subr.mxu0 0.0
  %2381 = vmatpush1.msra.mxu0 0.0
  %2382 = vmatprep.subr.mxu0 0.0
  %2383 = vmatpush1.msra.mxu0 0.0
  %2384 = vmatprep.subr.mxu0 0.0
  %2385 = vmatpush1.msra.mxu0 %v700
  %2386 = vmatprep.subr.mxu0 0.0
  %2387 = vmatpush1.msra.mxu0 %v680
  %2388 = vmatprep.subr.mxu0 0.0
  %2389 = vmatpush1.msra.mxu0 %v679
  %2390 = vmatprep.subr.mxu0 0.0
  %2391 = vmatpush2.msra.mxu0 0.0
  %2392 = vmatprep.subr.mxu0 0.0
  %2393 = vmatpush2.msra.mxu0 0.0
  %2394 = vmatprep.subr.mxu0 0.0
  %2395 = vmatpush2.msra.mxu0 0.0
  %2396 = vmatprep.subr.mxu0 0.0
  %2397 = vmatpush2.msra.mxu0 0.0
  %2398 = vmatprep.subr.mxu0 0.0
  %2399 = vmatpush2.msra.mxu0 0.0
  %2400 = vmatprep.subr.mxu0 0.0
  %2401 = vmatpush2.msra.mxu0 0.0
  %2402 = vmatprep.subr.mxu0 0.0
  %2403 = vmatpush2.msra.mxu0 0.0
  %2404 = vmatprep.subr.mxu0 0.0
  %2405 = vmatpush2.msra.mxu0 0.0
  %2406 = vmatprep.subr.mxu0 0.0
  %2407 = vmatpush2.msra.mxu0 0.0
  %2408 = vmatprep.subr.mxu0 0.0
  %2409 = vmatpush2.msra.mxu0 0.0
  %2410 = vmatprep.subr.mxu0 0.0
  %2411 = vmatpush2.msra.mxu0 0.0
  %2412 = vmatprep.subr.mxu0 0.0
  %2413 = vmatpush2.msra.mxu0 0.0
  %2414 = vmatprep.subr.mxu0 0.0
  %2415 = vmatpush2.msra.mxu0 0.0
  %2416 = vmatprep.subr.mxu0 0.0
  %2417 = vmatpush2.msra.mxu0 0.0
  %2418 = vmatprep.subr.mxu0 0.0
  %2419 = vmatpush2.msra.mxu0 0.0
  %2420 = vmatprep.subr.mxu0 0.0
  %2421 = vmatpush2.msra.mxu0 0.0
  %2422 = vmatprep.mubr.f32.mxu0 0.0
  %2423 = vmatmul.mubr.f32.gmra.mxu0 %v2356
  %v2424 = vpop.f32.mrf.mxu0
  %v2425 = vadd.f32 0.0, %v2424
  %v2426 = vpop.f32.mrf.mxu0
  %2427 = vdwg.mxu0
  %v2428 = vadd.f32 %v2355, %v2425
  %v2429 = vxor.u32 %v2428, 2147483648
  %v2430 = vmul.f32 %v2429, 1.442695
  %v2431 = vpow.pop %v2430
  %v2432 = vadd.f32 %v2431, 1.0
  %v2433 = vrcp.pop %v2432
  %v2434 = vmul.f32 1.0, %v2433
  %v2435 = vtanh.pop %v2428
  %v2436 = vmul.f32 %v2434, %v2329
  %2438 = vrot.lane.b32.xlu0 %v2435, 98
  %v2439 = vpop.permute.xlu0 %2438
  %v2441 = vmul.f32 %v2434, %v2439
  %2443 = vrot.lane.b32.xlu0 %v2441, 10
  %v2444 = vpop.permute.xlu0 %2443
  %v2446 = vadd.f32 %v2436, %v2444
  %v2447 = vtanh.pop %v2446
  %2449 = vrot.lane.b32.xlu0 %v2447, 10
  %v2450 = vpop.permute.xlu0 %2449
  %v2452 = vmul.f32 %v2434, %v2450
  %2454 = vrot.lane.b32.xlu0 %v2452, 108
  %v2455 = vpop.permute.xlu0 %2454
  %2457 = vrot.lane.b32.xlu0 %v2452, 118
  %v2458 = vpop.permute.xlu0 %2457
  %v2460 = vsel %vm577, %v2455, %v2458
  %v2461 = vsel %vm688, %v2460, 0.0
  %2463 = vrot.lane.b32.xlu0 %v2461, 24
  %v2464 = vpop.permute.xlu0 %2463
  %vm2466 = vcmask 355520
  %2467 = vst.msk [vmem:[#allocation2 + $0x8] sm:$0xf] %vm2466, %v2464
  %2469 = vrot.lane.b32.xlu0 %v1047, 88
  %v2470 = vpop.permute.xlu0 %2469
  %v2472 = vsel %vm590, %v1049, %v2470
  %v2473 = vsel %vm695, %v2461, 0
  %2475 = vmatprep.subr.mxu0 0.0
  %2476 = vmatpush1.msra.mxu0 0.0
  %2477 = vmatprep.subr.mxu0 0.0
  %2478 = vmatpush1.msra.mxu0 0.0
  %2479 = vmatprep.subr.mxu0 0.0
  %2480 = vmatpush1.msra.mxu0 0.0
  %2481 = vmatprep.subr.mxu0 0.0
  %2482 = vmatpush1.msra.mxu0 0.0
  %2483 = vmatprep.subr.mxu0 0.0
  %2484 = vmatpush1.msra.mxu0 0.0
  %2485 = vmatprep.subr.mxu0 0.0
  %2486 = vmatpush1.msra.mxu0 0.0
  %2487 = vmatprep.subr.mxu0 0.0
  %2488 = vmatpush1.msra.mxu0 0.0
  %2489 = vmatprep.subr.mxu0 0.0
  %2490 = vmatpush1.msra.mxu0 0.0
  %2491 = vmatprep.subr.mxu0 0.0
  %2492 = vmatpush1.msra.mxu0 0.0
  %2493 = vmatprep.subr.mxu0 0.0
  %2494 = vmatpush1.msra.mxu0 0.0
  %2495 = vmatprep.subr.mxu0 0.0
  %2496 = vmatpush1.msra.mxu0 0.0
  %2497 = vmatprep.subr.mxu0 0.0
  %2498 = vmatpush1.msra.mxu0 0.0
  %2499 = vmatprep.subr.mxu0 0.0
  %2500 = vmatpush1.msra.mxu0 0.0
  %2501 = vmatprep.subr.mxu0 0.0
  %2502 = vmatpush1.msra.mxu0 %v700
  %2503 = vmatprep.subr.mxu0 0.0
  %2504 = vmatpush1.msra.mxu0 %v680
  %2505 = vmatprep.subr.mxu0 0.0
  %2506 = vmatpush1.msra.mxu0 %v679
  %2507 = vmatprep.subr.mxu0 0.0
  %2508 = vmatpush2.msra.mxu0 0.0
  %2509 = vmatprep.subr.mxu0 0.0
  %2510 = vmatpush2.msra.mxu0 0.0
  %2511 = vmatprep.subr.mxu0 0.0
  %2512 = vmatpush2.msra.mxu0 0.0
  %2513 = vmatprep.subr.mxu0 0.0
  %2514 = vmatpush2.msra.mxu0 0.0
  %2515 = vmatprep.subr.mxu0 0.0
  %2516 = vmatpush2.msra.mxu0 0.0
  %2517 = vmatprep.subr.mxu0 0.0
  %2518 = vmatpush2.msra.mxu0 0.0
  %2519 = vmatprep.subr.mxu0 0.0
  %2520 = vmatpush2.msra.mxu0 0.0
  %2521 = vmatprep.subr.mxu0 0.0
  %2522 = vmatpush2.msra.mxu0 0.0
  %2523 = vmatprep.subr.mxu0 0.0
  %2524 = vmatpush2.msra.mxu0 0.0
  %2525 = vmatprep.subr.mxu0 0.0
  %2526 = vmatpush2.msra.mxu0 0.0
  %2527 = vmatprep.subr.mxu0 0.0
  %2528 = vmatpush2.msra.mxu0 0.0
  %2529 = vmatprep.subr.mxu0 0.0
  %2530 = vmatpush2.msra.mxu0 0.0
  %2531 = vmatprep.subr.mxu0 0.0
  %2532 = vmatpush2.msra.mxu0 0.0
  %2533 = vmatprep.subr.mxu0 0.0
  %2534 = vmatpush2.msra.mxu0 0.0
  %2535 = vmatprep.subr.mxu0 0.0
  %2536 = vmatpush2.msra.mxu0 0.0
  %2537 = vmatprep.subr.mxu0 0.0
  %2538 = vmatpush2.msra.mxu0 0.0
  %2539 = vmatprep.mubr.f32.mxu0 0.0
  %2540 = vmatmul.mubr.f32.gmra.mxu0 %v2473
  %v2541 = vpop.f32.mrf.mxu0
  %v2542 = vadd.f32 0.0, %v2541
  %v2543 = vpop.f32.mrf.mxu0
  %2544 = vdwg.mxu0
  %v2545 = vadd.f32 %v2472, %v2542
  %v2546 = vxor.u32 %v2545, 2147483648
  %v2547 = vmul.f32 %v2546, 1.442695
  %v2548 = vpow.pop %v2547
  %v2549 = vadd.f32 %v2548, 1.0
  %v2550 = vrcp.pop %v2549
  %v2551 = vmul.f32 1.0, %v2550
  %v2552 = vtanh.pop %v2545
  %v2553 = vmul.f32 %v2551, %v2446
  %2555 = vrot.lane.b32.xlu0 %v2552, 98
  %v2556 = vpop.permute.xlu0 %2555
  %v2558 = vmul.f32 %v2551, %v2556
  %2560 = vrot.lane.b32.xlu0 %v2558, 10
  %v2561 = vpop.permute.xlu0 %2560
  %v2563 = vadd.f32 %v2553, %v2561
  %v2564 = vtanh.pop %v2563
  %2566 = vrot.lane.b32.xlu0 %v2564, 10
  %v2567 = vpop.permute.xlu0 %2566
  %v2569 = vmul.f32 %v2551, %v2567
  %2571 = vrot.lane.b32.xlu0 %v2569, 108
  %v2572 = vpop.permute.xlu0 %2571
  %2574 = vrot.lane.b32.xlu0 %v2569, 118
  %v2575 = vpop.permute.xlu0 %2574
  %v2577 = vsel %vm577, %v2572, %v2575
  %v2578 = vsel %vm688, %v2577, 0.0
  %2580 = vrot.lane.b32.xlu0 %v2578, 44
  %v2581 = vpop.permute.xlu0 %2580
  %vm2583 = vcmask 519520
  %2584 = vst.msk [vmem:[#allocation2 + $0x8] sm:$0xf] %vm2583, %v2581
  %v2585 = vld [vmem:[%s1 + $0x78] sm:$0xff]
  %v2586 = vld [vmem:[%s1 + $0x80] sm:$0xff]
  %v2587 = vld [vmem:[%s1 + $0x88] sm:$0xff]
  %v2588 = vld [vmem:[%s1 + $0x90] sm:$0xff]
  %v2589 = vld [vmem:[%s1 + $0x98] sm:$0xff]
  %v2590 = vld [vmem:[%s1 + $0xa0] sm:$0xff]
  %v2591 = vld [vmem:[%s1 + $0xa8] sm:$0xff]
  %v2592 = vld [vmem:[%s1 + $0xb0] sm:$0xff]
  %v2593 = vld [vmem:[%s1 + $0xb8] sm:$0xff]
  %v2594 = vld [vmem:[%s1 + $0xc0] sm:$0xff]
  %v2595 = vld [vmem:[%s1 + $0xc8] sm:$0xff]
  %v2596 = vld [vmem:[%s1 + $0xd0] sm:$0xff]
  %v2597 = vld [vmem:[%s1 + $0xd8] sm:$0xff]
  %v2598 = vld [vmem:[%s1 + $0xe0] sm:$0xff]
  %v2599 = vld [vmem:[%s1 + $0xe8] sm:$0xff]
  %v2600 = vld [vmem:[%s1 + $0xf0] sm:$0xff]
  %v2601 = vld [vmem:[%s1 + $0xf8] sm:$0xff]
  %v2602 = vld [vmem:[%s1 + $0x100] sm:$0xff]
  %v2603 = vld [vmem:[%s1 + $0x108] sm:$0xff]
  %v2604 = vld [vmem:[%s1 + $0x110] sm:$0xff]
  %v2605 = vld [vmem:[%s1 + $0x118] sm:$0xff]
  %v2606 = vld [vmem:[%s1 + $0x120] sm:$0xff]
  %v2607 = vld [vmem:[%s1 + $0x128] sm:$0xff]
  %v2608 = vld [vmem:[%s1 + $0x130] sm:$0xff]
  %v2609 = vld [vmem:[%s1 + $0x138] sm:$0xff]
  %v2610 = vld [vmem:[%s1 + $0x140] sm:$0xff]
  %v2611 = vld [vmem:[%s1 + $0x148] sm:$0xff]
  %v2612 = vld [vmem:[%s1 + $0x150] sm:$0xff]
  %v2613 = vld [vmem:[%s1 + $0x158] sm:$0xff]
  %v2614 = vld [vmem:[%s1 + $0x160] sm:$0xff]
  %v2615 = vld [vmem:[%s1 + $0x168] sm:$0xff]
  %v2616 = vld [vmem:[%s1 + $0x170] sm:$0xff]
  %v2617 = vld [vmem:[%s1 + $0x178] sm:$0xff]
  %v2618 = vld [vmem:[%s1 + $0x180] sm:$0xff]
  %v2619 = vld [vmem:[%s1 + $0x188] sm:$0xff]
  %v2620 = vld [vmem:[%s1 + $0x190] sm:$0xff]
  %v2621 = vld [vmem:[%s1 + $0x198] sm:$0xff]
  %v2622 = vld [vmem:[%s1 + $0x1a0] sm:$0xff]
  %v2623 = vld [vmem:[%s1 + $0x1a8] sm:$0xff]
  %v2624 = vld [vmem:[%s1 + $0x1b0] sm:$0xff]
  %v2625 = vld [vmem:[#allocation2] sm:$0xff]
  %v2626 = vld [vmem:[#allocation2 + $0x8] sm:$0xf]
  %v2629 = vcombine.high %v2625, %v2625
  %vm2631 = vcmask 523264
  %v2632 = vsel %vm2631, %v2626, 0
  %2634 = vmatprep.subr.mxu0 0.0
  %2635 = vmatpush1.msra.mxu0 %v2600
  %2636 = vmatprep.subr.mxu0 0.0
  %2637 = vmatpush1.msra.mxu0 %v2599
  %2638 = vmatprep.subr.mxu0 0.0
  %2639 = vmatpush1.msra.mxu0 %v2598
  %2640 = vmatprep.subr.mxu0 0.0
  %2641 = vmatpush1.msra.mxu0 %v2597
  %2642 = vmatprep.subr.mxu0 0.0
  %2643 = vmatpush1.msra.mxu0 %v2596
  %2644 = vmatprep.subr.mxu0 0.0
  %2645 = vmatpush1.msra.mxu0 %v2595
  %2646 = vmatprep.subr.mxu0 0.0
  %2647 = vmatpush1.msra.mxu0 %v2594
  %2648 = vmatprep.subr.mxu0 0.0
  %2649 = vmatpush1.msra.mxu0 %v2593
  %2650 = vmatprep.subr.mxu0 0.0
  %2651 = vmatpush1.msra.mxu0 %v2592
  %2652 = vmatprep.subr.mxu0 0.0
  %2653 = vmatpush1.msra.mxu0 %v2591
  %2654 = vmatprep.subr.mxu0 0.0
  %2655 = vmatpush1.msra.mxu0 %v2590
  %2656 = vmatprep.subr.mxu0 0.0
  %2657 = vmatpush1.msra.mxu0 %v2589
  %2658 = vmatprep.subr.mxu0 0.0
  %2659 = vmatpush1.msra.mxu0 %v2588
  %2660 = vmatprep.subr.mxu0 0.0
  %2661 = vmatpush1.msra.mxu0 %v2587
  %2662 = vmatprep.subr.mxu0 0.0
  %2663 = vmatpush1.msra.mxu0 %v2586
  %2664 = vmatprep.subr.mxu0 0.0
  %2665 = vmatpush1.msra.mxu0 %v2585
  %2666 = vmatprep.subr.mxu0 0.0
  %2667 = vmatpush2.msra.mxu0 %v2616
  %2668 = vmatprep.subr.mxu0 0.0
  %2669 = vmatpush2.msra.mxu0 %v2615
  %2670 = vmatprep.subr.mxu0 0.0
  %2671 = vmatpush2.msra.mxu0 %v2614
  %2672 = vmatprep.subr.mxu0 0.0
  %2673 = vmatpush2.msra.mxu0 %v2613
  %2674 = vmatprep.subr.mxu0 0.0
  %2675 = vmatpush2.msra.mxu0 %v2612
  %2676 = vmatprep.subr.mxu0 0.0
  %2677 = vmatpush2.msra.mxu0 %v2611
  %2678 = vmatprep.subr.mxu0 0.0
  %2679 = vmatpush2.msra.mxu0 %v2610
  %2680 = vmatprep.subr.mxu0 0.0
  %2681 = vmatpush2.msra.mxu0 %v2609
  %2682 = vmatprep.subr.mxu0 0.0
  %2683 = vmatpush2.msra.mxu0 %v2608
  %2684 = vmatprep.subr.mxu0 0.0
  %2685 = vmatpush2.msra.mxu0 %v2607
  %2686 = vmatprep.subr.mxu0 0.0
  %2687 = vmatpush2.msra.mxu0 %v2606
  %2688 = vmatprep.subr.mxu0 0.0
  %2689 = vmatpush2.msra.mxu0 %v2605
  %2690 = vmatprep.subr.mxu0 0.0
  %2691 = vmatpush2.msra.mxu0 %v2604
  %2692 = vmatprep.subr.mxu0 0.0
  %2693 = vmatpush2.msra.mxu0 %v2603
  %2694 = vmatprep.subr.mxu0 0.0
  %2695 = vmatpush2.msra.mxu0 %v2602
  %2696 = vmatprep.subr.mxu0 0.0
  %2697 = vmatpush2.msra.mxu0 %v2601
  %2698 = vmatprep.mubr.f32.mxu0 %v2629
  %2699 = vmatmul.mubr.f32.gmra.mxu0 %v2625
  %v2700 = vpop.f32.mrf.mxu0
  %v2701 = vadd.f32 0.0, %v2700
  %v2702 = vpop.f32.mrf.mxu0
  %2703 = vdwg.mxu0
  %2704 = vmatprep.subr.mxu0 0.0
  %2705 = vmatpush1.msra.mxu0 0.0
  %2706 = vmatprep.subr.mxu0 0.0
  %2707 = vmatpush1.msra.mxu0 0.0
  %2708 = vmatprep.subr.mxu0 0.0
  %2709 = vmatpush1.msra.mxu0 0.0
  %2710 = vmatprep.subr.mxu0 0.0
  %2711 = vmatpush1.msra.mxu0 0.0
  %2712 = vmatprep.subr.mxu0 0.0
  %2713 = vmatpush1.msra.mxu0 0.0
  %2714 = vmatprep.subr.mxu0 0.0
  %2715 = vmatpush1.msra.mxu0 0.0
  %2716 = vmatprep.subr.mxu0 0.0
  %2717 = vmatpush1.msra.mxu0 0.0
  %2718 = vmatprep.subr.mxu0 0.0
  %2719 = vmatpush1.msra.mxu0 0.0
  %2720 = vmatprep.subr.mxu0 0.0
  %2721 = vmatpush1.msra.mxu0 %v2624
  %2722 = vmatprep.subr.mxu0 0.0
  %2723 = vmatpush1.msra.mxu0 %v2623
  %2724 = vmatprep.subr.mxu0 0.0
  %2725 = vmatpush1.msra.mxu0 %v2622
  %2726 = vmatprep.subr.mxu0 0.0
  %2727 = vmatpush1.msra.mxu0 %v2621
  %2728 = vmatprep.subr.mxu0 0.0
  %2729 = vmatpush1.msra.mxu0 %v2620
  %2730 = vmatprep.subr.mxu0 0.0
  %2731 = vmatpush1.msra.mxu0 %v2619
  %2732 = vmatprep.subr.mxu0 0.0
  %2733 = vmatpush1.msra.mxu0 %v2618
  %2734 = vmatprep.subr.mxu0 0.0
  %2735 = vmatpush1.msra.mxu0 %v2617
  %2736 = vmatprep.subr.mxu0 0.0
  %2737 = vmatpush2.msra.mxu0 0.0
  %2738 = vmatprep.subr.mxu0 0.0
  %2739 = vmatpush2.msra.mxu0 0.0
  %2740 = vmatprep.subr.mxu0 0.0
  %2741 = vmatpush2.msra.mxu0 0.0
  %2742 = vmatprep.subr.mxu0 0.0
  %2743 = vmatpush2.msra.mxu0 0.0
  %2744 = vmatprep.subr.mxu0 0.0
  %2745 = vmatpush2.msra.mxu0 0.0
  %2746 = vmatprep.subr.mxu0 0.0
  %2747 = vmatpush2.msra.mxu0 0.0
  %2748 = vmatprep.subr.mxu0 0.0
  %2749 = vmatpush2.msra.mxu0 0.0
  %2750 = vmatprep.subr.mxu0 0.0
  %2751 = vmatpush2.msra.mxu0 0.0
  %2752 = vmatprep.subr.mxu0 0.0
  %2753 = vmatpush2.msra.mxu0 0.0
  %2754 = vmatprep.subr.mxu0 0.0
  %2755 = vmatpush2.msra.mxu0 0.0
  %2756 = vmatprep.subr.mxu0 0.0
  %2757 = vmatpush2.msra.mxu0 0.0
  %2758 = vmatprep.subr.mxu0 0.0
  %2759 = vmatpush2.msra.mxu0 0.0
  %2760 = vmatprep.subr.mxu0 0.0
  %2761 = vmatpush2.msra.mxu0 0.0
  %2762 = vmatprep.subr.mxu0 0.0
  %2763 = vmatpush2.msra.mxu0 0.0
  %2764 = vmatprep.subr.mxu0 0.0
  %2765 = vmatpush2.msra.mxu0 0.0
  %2766 = vmatprep.subr.mxu0 0.0
  %2767 = vmatpush2.msra.mxu0 0.0
  %2768 = vmatprep.mubr.f32.mxu0 0.0
  %2769 = vmatmul.mubr.f32.gmra.mxu0 %v2632
  %v2770 = vpop.f32.mrf.mxu0
  %v2771 = vadd.f32 %v2701, %v2770
  %v2772 = vpop.f32.mrf.mxu0
  %2773 = vdwg.mxu0
  %v2775 = vrot.slane %v2771, 2
  %v2777 = vadd.f32 %v2771, %v2775
  %v2778 = vmax.f32 %v2777, 0.0
  %v2779 = vld [vmem:[%s1 + $0x68] sm:$0xff]
  %v2780 = vld [vmem:[%s1 + $0x70] sm:$0x3]
  %v2782 = vsel %vm577, %v2778, 0
  %v2785 = vsel %vm590, %v2780, 0
  %2787 = vmatprep.subr.mxu0 0.0
  %2788 = vmatpush1.msra.mxu0 0.0
  %2789 = vmatprep.subr.mxu0 0.0
  %2790 = vmatpush1.msra.mxu0 0.0
  %2791 = vmatprep.subr.mxu0 0.0
  %2792 = vmatpush1.msra.mxu0 0.0
  %2793 = vmatprep.subr.mxu0 0.0
  %2794 = vmatpush1.msra.mxu0 0.0
  %2795 = vmatprep.subr.mxu0 0.0
  %2796 = vmatpush1.msra.mxu0 0.0
  %2797 = vmatprep.subr.mxu0 0.0
  %2798 = vmatpush1.msra.mxu0 0.0
  %2799 = vmatprep.subr.mxu0 0.0
  %2800 = vmatpush1.msra.mxu0 0.0
  %2801 = vmatprep.subr.mxu0 0.0
  %2802 = vmatpush1.msra.mxu0 0.0
  %2803 = vmatprep.subr.mxu0 0.0
  %2804 = vmatpush1.msra.mxu0 0.0
  %2805 = vmatprep.subr.mxu0 0.0
  %2806 = vmatpush1.msra.mxu0 0.0
  %2807 = vmatprep.subr.mxu0 0.0
  %2808 = vmatpush1.msra.mxu0 0.0
  %2809 = vmatprep.subr.mxu0 0.0
  %2810 = vmatpush1.msra.mxu0 0.0
  %2811 = vmatprep.subr.mxu0 0.0
  %2812 = vmatpush1.msra.mxu0 0.0
  %2813 = vmatprep.subr.mxu0 0.0
  %2814 = vmatpush1.msra.mxu0 0.0
  %2815 = vmatprep.subr.mxu0 0.0
  %2816 = vmatpush1.msra.mxu0 %v2785
  %2817 = vmatprep.subr.mxu0 0.0
  %2818 = vmatpush1.msra.mxu0 %v2779
  %2819 = vmatprep.subr.mxu0 0.0
  %2820 = vmatpush2.msra.mxu0 0.0
  %2821 = vmatprep.subr.mxu0 0.0
  %2822 = vmatpush2.msra.mxu0 0.0
  %2823 = vmatprep.subr.mxu0 0.0
  %2824 = vmatpush2.msra.mxu0 0.0
  %2825 = vmatprep.subr.mxu0 0.0
  %2826 = vmatpush2.msra.mxu0 0.0
  %2827 = vmatprep.subr.mxu0 0.0
  %2828 = vmatpush2.msra.mxu0 0.0
  %2829 = vmatprep.subr.mxu0 0.0
  %2830 = vmatpush2.msra.mxu0 0.0
  %2831 = vmatprep.subr.mxu0 0.0
  %2832 = vmatpush2.msra.mxu0 0.0
  %2833 = vmatprep.subr.mxu0 0.0
  %2834 = vmatpush2.msra.mxu0 0.0
  %2835 = vmatprep.subr.mxu0 0.0
  %2836 = vmatpush2.msra.mxu0 0.0
  %2837 = vmatprep.subr.mxu0 0.0
  %2838 = vmatpush2.msra.mxu0 0.0
  %2839 = vmatprep.subr.mxu0 0.0
  %2840 = vmatpush2.msra.mxu0 0.0
  %2841 = vmatprep.subr.mxu0 0.0
  %2842 = vmatpush2.msra.mxu0 0.0
  %2843 = vmatprep.subr.mxu0 0.0
  %2844 = vmatpush2.msra.mxu0 0.0
  %2845 = vmatprep.subr.mxu0 0.0
  %2846 = vmatpush2.msra.mxu0 0.0
  %2847 = vmatprep.subr.mxu0 0.0
  %2848 = vmatpush2.msra.mxu0 0.0
  %2849 = vmatprep.subr.mxu0 0.0
  %2850 = vmatpush2.msra.mxu0 0.0
  %2851 = vmatprep.mubr.f32.mxu0 0.0
  %2852 = vmatmul.mubr.f32.gmra.mxu0 %v2782
  %v2853 = vpop.f32.mrf.mxu0
  %v2854 = vadd.f32 0.0, %v2853
  %v2855 = vpop.f32.mrf.mxu0
  %2856 = vdwg.mxu0
  %vm2857 = vcmask 1024
  %2858 = vst.msk [vmem:[%s2] sm:$0x3] %vm2857, %v2854
  // Predicated region
  $region10: #{tpu_custom_call.1} parent=0 // pred_check
    _
  $region11: #{tpu_custom_call.1} parent=0 // pred_check_branch
    %2860 = sbr.rel (0) target = $region13
  $region12: #{tpu_custom_call.1} parent=0 // pred_region
    _
  $region13: #{tpu_custom_call.1} parent=0 // pred_fallthru
    _
  // Predicated region
  $region14: #{tpu_custom_call.1} parent=0 // pred_check
    _
  $region15: #{tpu_custom_call.1} parent=0 // pred_check_branch
    %2862 = sbr.rel (0) target = $region17
  $region16: #{tpu_custom_call.1} parent=0 // pred_region
    _
  $region17: #{tpu_custom_call.1} parent=0 // pred_fallthru
    _

</llo_original>
